<compile_context>
chip_gen: v6e
topology: v6e:2x2x1
jax: 0.10.0
libtpu: 0.0.40
codegen_flags: <defaults>
</compile_context>

<pallas_src>
import jax
import jax.numpy as jnp
from jax.experimental import pallas as pl
from jax.experimental.pallas import tpu as pltpu

INPUT_SIZE = 784
HIDDEN_SIZE = 128
LATENT_SIZE = 32


def _round_up(n, m):
    return ((n + m - 1) // m) * m


def _make_kernel(compute_dtype):
    """Fused forward kernel.  `compute_dtype` is what the MXU sees:
    bf16 -> one MXU pass with f32 accumulation (recommended everywhere);
    f32  -> exact-f32 matmuls (3+ MXU passes) for strict numerical fidelity."""

    def kernel(x_ref,
               w1_ref, b1_ref,
               w2_ref, b2_ref,
               w3_ref, b3_ref,
               w4_ref, b4_ref,
               o_ref):
        cd = compute_dtype
        # x tile: (tile, 784) in its native HBM dtype; cast in-register only.
        x = x_ref[...].astype(cd)

        # encoder: Linear(784,128)+ReLU, Linear(128,32)+ReLU  (f32 accumulate)
        h1 = jnp.dot(x, w1_ref[...].astype(cd),
                     preferred_element_type=jnp.float32) + b1_ref[...]
        h1 = jnp.maximum(h1, 0.0)
        z = jnp.dot(h1.astype(cd), w2_ref[...].astype(cd),
                    preferred_element_type=jnp.float32) + b2_ref[...]
        z = jnp.maximum(z, 0.0)

        # decoder: Linear(32,128)+ReLU, Linear(128,784)+Sigmoid
        h2 = jnp.dot(z.astype(cd), w3_ref[...].astype(cd),
                     preferred_element_type=jnp.float32) + b3_ref[...]
        h2 = jnp.maximum(h2, 0.0)
        logits = jnp.dot(h2.astype(cd), w4_ref[...].astype(cd),
                         preferred_element_type=jnp.float32) + b4_ref[...]

        # sigmoid(x) == 0.5*tanh(0.5*x)+0.5 : a single EUP transcendental per
        # element (scale/add ride the VPU, which has slack) and no inf
        # intermediate for large |logits|.
        o_ref[...] = (0.5 * jnp.tanh(0.5 * logits) + 0.5).astype(o_ref.dtype)

    return kernel


def prepare_params(params, weight_dtype=jnp.bfloat16):
    """One-time (outside the hot path) parameter preparation.

    Weights are stored as (in, out) = PyTorch W.T and cast to `weight_dtype`
    ONCE so no per-call HBM re-cast traffic is spent.  Biases stay f32 and are
    reshaped to (1, out) rows that broadcast over the batch tile."""
    prepared = []
    for w, b in params:
        prepared.append((jnp.asarray(w, weight_dtype),
                         jnp.asarray(b, jnp.float32).reshape(1, -1)))
    return tuple(prepared)


def _run_pallas(x_io, params, tile, out_dtype, compute_dtype,
                single_buffer_weights):
    Bp = x_io.shape[0]
    (w1, b1), (w2, b2), (w3, b3), (w4, b4) = params

    def resident(arr):
        # Constant block index -> Pallas keeps the block resident in VMEM for
        # the whole grid and never re-DMAs it; a single buffer is sufficient.
        if single_buffer_weights:
            return pl.BlockSpec(arr.shape, lambda i: (0, 0),
                                pipeline_mode=pl.Buffered(1))
        return pl.BlockSpec(arr.shape, lambda i: (0, 0))

    flops = 2 * Bp * (INPUT_SIZE * HIDDEN_SIZE + HIDDEN_SIZE * LATENT_SIZE
                      + LATENT_SIZE * HIDDEN_SIZE + HIDDEN_SIZE * INPUT_SIZE)
    bytes_accessed = (
        Bp * INPUT_SIZE * x_io.dtype.itemsize                 # x read
        + Bp * INPUT_SIZE * jnp.dtype(out_dtype).itemsize     # out write
        + sum(int(w.size) * w.dtype.itemsize for w in (w1, w2, w3, w4))
        + sum(int(b.size) * 4 for b in (b1, b2, b3, b4)))
    cost = pl.CostEstimate(flops=flops,
                           transcendentals=Bp * INPUT_SIZE,   # one tanh/elem
                           bytes_accessed=bytes_accessed)

    return pl.pallas_call(
        _make_kernel(compute_dtype),
        out_shape=jax.ShapeDtypeStruct((Bp, INPUT_SIZE), out_dtype),
        grid_spec=pltpu.PrefetchScalarGridSpec(
            num_scalar_prefetch=0,
            grid=(Bp // tile,),
            in_specs=[
                pl.BlockSpec((tile, INPUT_SIZE), lambda i: (i, 0)),  # x tile
                resident(w1), resident(b1),
                resident(w2), resident(b2),
                resident(w3), resident(b3),
                resident(w4), resident(b4),
            ],
            out_specs=pl.BlockSpec((tile, INPUT_SIZE), lambda i: (i, 0)),
        ),
        compiler_params=pltpu.CompilerParams(
            dimension_semantics=("parallel",),
            vmem_limit_bytes=40 * 1024 * 1024,
        ),
        cost_estimate=cost,
    )(x_io, w1, b1, w2, b2, w3, b3, w4, b4)


def autoencoder_forward(x, params, *, batch_tile=None, out_dtype=None,
                        compute_dtype=jnp.bfloat16):
    """x: any shape reshapable to (-1, 784), e.g. NCHW (B, 1, 28, 28).
    params: output of prepare_params() (raw (w, b) pairs also accepted; the
    weights are used in whatever dtype they are stored in — no wrapper cast)."""
    x2d = x.reshape(-1, INPUT_SIZE)
    B = x2d.shape[0]
    if out_dtype is None:
        out_dtype = x2d.dtype

    # Normalize biases to (1, out) f32 rows (tiny; weights are NOT touched).
    params = tuple((w, jnp.asarray(b, jnp.float32).reshape(1, -1))
                   for w, b in params)

    # Sublane packing: rows must be a multiple of 8 (f32) / 16 (bf16) for the
    # x and output tiles.
    row_align = 16 if (jnp.dtype(x2d.dtype).itemsize < 4
                       or jnp.dtype(out_dtype).itemsize < 4) else 8
    if batch_tile is None:
        # Big tiles amortize the ~0.35us per-step overhead and track the HBM
        # roofline; bf16 x halves its footprint so allow twice the rows.
        batch_tile = 2048 if jnp.dtype(x2d.dtype).itemsize < 4 else 1024
    batch_tile = max(row_align, _round_up(batch_tile, row_align))

    B_aligned = _round_up(B, row_align)
    single_step_cap = _round_up(min(batch_tile, 512), row_align)
    if B_aligned <= single_step_cap:
        # Small batch: one grid step (no pipeline ramp-up; best on single-TC
        # v5e/v6e, and there is nothing worth sharding for v7x anyway).
        tile = B_aligned
    else:
        # Large batch: cap the tile but keep >=2 grid steps so the "parallel"
        # batch axis can be sharded across v7x's two TensorCores.
        tile = min(batch_tile, _round_up(-(-B_aligned // 2), row_align))

    Bp = _round_up(B, tile)
    if Bp != B:
        x2d = jnp.pad(x2d, ((0, Bp - B), (0, 0)))

    try:
        out = jax.block_until_ready(
            _run_pallas(x2d, params, tile, out_dtype, compute_dtype,
                        single_buffer_weights=True))
    except Exception:
        # Some runtimes may reject pl.Buffered(1); fall back to the default
        # double-buffered resident weights (slightly more VMEM, same result).
        out = _run_pallas(x2d, params, tile, out_dtype, compute_dtype,
                          single_buffer_weights=False)

    return out[:B] if Bp != B else out


def init_params(key):
    """Deterministic init. Weights stored as (in, out) — i.e. PyTorch W.T."""
    def linear(key, fan_in, fan_out):
        kw, kb = jax.random.split(key)
        bound = 1.0 / jnp.sqrt(fan_in)
        w = jax.random.uniform(kw, (fan_in, fan_out), jnp.float32, -bound, bound)
        b = jax.random.uniform(kb, (fan_out,), jnp.float32, -bound, bound)
        return w, b

    k1, k2, k3, k4 = jax.random.split(key, 4)
    return (
        linear(k1, INPUT_SIZE, HIDDEN_SIZE),   # encoder.0
        linear(k2, HIDDEN_SIZE, LATENT_SIZE),  # encoder.2
        linear(k3, LATENT_SIZE, HIDDEN_SIZE),  # decoder.0
        linear(k4, HIDDEN_SIZE, INPUT_SIZE),   # decoder.2
    )


def reference_forward(x, params):
    x2d = x.reshape(-1, INPUT_SIZE).astype(jnp.float32)
    (w1, b1), (w2, b2), (w3, b3), (w4, b4) = params
    h1 = jnp.maximum(x2d @ w1 + b1, 0.0)
    z = jnp.maximum(h1 @ w2 + b2, 0.0)
    h2 = jnp.maximum(z @ w3 + b3, 0.0)
    return jax.nn.sigmoid(h2 @ w4 + b4)


if __name__ == "__main__":
    key = jax.random.PRNGKey(0)
    kx, kp = jax.random.split(key)

    # MNIST-like batch in NCHW, as the PyTorch module expects (small shapes).
    x = jax.random.uniform(kx, (64, 1, 28, 28), jnp.float32)
    raw_params = init_params(kp)
    params = prepare_params(raw_params)   # one-time bf16 weight cast

    # 1) f32 I/O path, small batch -> single grid step, bf16 MXU inputs.
    out = jax.block_until_ready(autoencoder_forward(x, params))
    ref = reference_forward(x, raw_params)
    assert out.shape == (64, INPUT_SIZE)
    assert jnp.allclose(out, ref, atol=2e-2, rtol=2e-2), "f32-I/O mismatch"

    # 2) Multi-step grid (resident weights reused across steps) + ragged batch
    #    (exercises row padding / un-padding).
    out2 = jax.block_until_ready(
        autoencoder_forward(x[:37], params, batch_tile=16))
    ref2 = reference_forward(x[:37], raw_params)
    assert out2.shape == (37, INPUT_SIZE)
    assert jnp.allclose(out2, ref2, atol=2e-2, rtol=2e-2), "multi-step mismatch"

    # 3) bf16 I/O path: caller's data pipeline supplies bf16, output written
    #    as bf16 (halved HBM traffic); compare to f32 reference loosely.
    x_bf16 = x[:32].astype(jnp.bfloat16)
    out3 = jax.block_until_ready(
        autoencoder_forward(x_bf16, params, out_dtype=jnp.bfloat16))
    ref3 = reference_forward(x[:32], raw_params)
    assert out3.shape == (32, INPUT_SIZE) and out3.dtype == jnp.bfloat16
    assert jnp.allclose(out3.astype(jnp.float32), ref3, atol=3e-2, rtol=3e-2), \
        "bf16-I/O mismatch"

    print("KERNEL_OK")
</pallas_src>

<mosaic_0001>
module attributes {stable_mosaic.version = 11 : i64} {
  func.func @kernel(%arg0: i32, %arg1: memref<64x784xf32, #tpu.memory_space<vmem>>, %arg2: memref<784x128xbf16, #tpu.memory_space<vmem>>, %arg3: memref<1x128xf32, #tpu.memory_space<vmem>>, %arg4: memref<128x32xbf16, #tpu.memory_space<vmem>>, %arg5: memref<1x32xf32, #tpu.memory_space<vmem>>, %arg6: memref<32x128xbf16, #tpu.memory_space<vmem>>, %arg7: memref<1x128xf32, #tpu.memory_space<vmem>>, %arg8: memref<128x784xbf16, #tpu.memory_space<vmem>>, %arg9: memref<1x784xf32, #tpu.memory_space<vmem>>, %arg10: memref<64x784xf32, #tpu.memory_space<vmem>>) attributes {dimension_semantics = [#tpu.dimension_semantics<parallel>], iteration_bounds = array<i64: 1>, scalar_prefetch = 0 : i64, scratch_operands = 0 : i64, tpu.core_type = #tpu.core_type<tc>, window_params = [{transform_indices = @transform_0, window_bounds = array<i64: 64, 784>}, {pipeline_mode = #tpu.pipeline_mode<synchronous>, transform_indices = @transform_1, window_bounds = array<i64: 784, 128>}, {pipeline_mode = #tpu.pipeline_mode<synchronous>, transform_indices = @transform_2, window_bounds = array<i64: 1, 128>}, {pipeline_mode = #tpu.pipeline_mode<synchronous>, transform_indices = @transform_3, window_bounds = array<i64: 128, 32>}, {pipeline_mode = #tpu.pipeline_mode<synchronous>, transform_indices = @transform_4, window_bounds = array<i64: 1, 32>}, {pipeline_mode = #tpu.pipeline_mode<synchronous>, transform_indices = @transform_5, window_bounds = array<i64: 32, 128>}, {pipeline_mode = #tpu.pipeline_mode<synchronous>, transform_indices = @transform_6, window_bounds = array<i64: 1, 128>}, {pipeline_mode = #tpu.pipeline_mode<synchronous>, transform_indices = @transform_7, window_bounds = array<i64: 128, 784>}, {pipeline_mode = #tpu.pipeline_mode<synchronous>, transform_indices = @transform_8, window_bounds = array<i64: 1, 784>}, {transform_indices = @transform_9, window_bounds = array<i64: 64, 784>}]} {
    %c0 = arith.constant 0 : index
    %c0_0 = arith.constant 0 : index
    %0 = vector.load %arg1[%c0, %c0_0] : memref<64x784xf32, #tpu.memory_space<vmem>>, vector<64x784xf32>
    %1 = arith.truncf %0 : vector<64x784xf32> to vector<64x784xbf16>
    %c0_1 = arith.constant 0 : index
    %c0_2 = arith.constant 0 : index
    %2 = vector.load %arg2[%c0_1, %c0_2] : memref<784x128xbf16, #tpu.memory_space<vmem>>, vector<784x128xbf16>
    %cst = arith.constant dense<0.000000e+00> : vector<64x128xf32>
    %3 = tpu.matmul %1, %2, %cst {dimension_numbers = #tpu.dot_dimension_numbers<[1], [0], [0], [1], [0, 0, 1, 1], [], []>} : vector<64x784xbf16>, vector<784x128xbf16>, vector<64x128xf32> -> vector<64x128xf32>
    %c0_3 = arith.constant 0 : index
    %c0_4 = arith.constant 0 : index
    %4 = vector.load %arg3[%c0_3, %c0_4] : memref<1x128xf32, #tpu.memory_space<vmem>>, vector<1x128xf32>
    %5 = vector.broadcast %4 : vector<1x128xf32> to vector<64x128xf32>
    %6 = arith.addf %3, %5 : vector<64x128xf32>
    %cst_5 = arith.constant 0.000000e+00 : f32
    %7 = vector.broadcast %cst_5 : f32 to vector<64x128xf32>
    %8 = arith.maximumf %6, %7 : vector<64x128xf32>
    %9 = arith.truncf %8 : vector<64x128xf32> to vector<64x128xbf16>
    %c0_6 = arith.constant 0 : index
    %c0_7 = arith.constant 0 : index
    %10 = vector.load %arg4[%c0_6, %c0_7] : memref<128x32xbf16, #tpu.memory_space<vmem>>, vector<128x32xbf16>
    %cst_8 = arith.constant dense<0.000000e+00> : vector<64x32xf32>
    %11 = tpu.matmul %9, %10, %cst_8 {dimension_numbers = #tpu.dot_dimension_numbers<[1], [0], [0], [1], [0, 0, 1, 1], [], []>} : vector<64x128xbf16>, vector<128x32xbf16>, vector<64x32xf32> -> vector<64x32xf32>
    %c0_9 = arith.constant 0 : index
    %c0_10 = arith.constant 0 : index
    %12 = vector.load %arg5[%c0_9, %c0_10] : memref<1x32xf32, #tpu.memory_space<vmem>>, vector<1x32xf32>
    %13 = vector.broadcast %12 : vector<1x32xf32> to vector<64x32xf32>
    %14 = arith.addf %11, %13 : vector<64x32xf32>
    %cst_11 = arith.constant 0.000000e+00 : f32
    %15 = vector.broadcast %cst_11 : f32 to vector<64x32xf32>
    %16 = arith.maximumf %14, %15 : vector<64x32xf32>
    %17 = arith.truncf %16 : vector<64x32xf32> to vector<64x32xbf16>
    %c0_12 = arith.constant 0 : index
    %c0_13 = arith.constant 0 : index
    %18 = vector.load %arg6[%c0_12, %c0_13] : memref<32x128xbf16, #tpu.memory_space<vmem>>, vector<32x128xbf16>
    %cst_14 = arith.constant dense<0.000000e+00> : vector<64x128xf32>
    %19 = tpu.matmul %17, %18, %cst_14 {dimension_numbers = #tpu.dot_dimension_numbers<[1], [0], [0], [1], [0, 0, 1, 1], [], []>} : vector<64x32xbf16>, vector<32x128xbf16>, vector<64x128xf32> -> vector<64x128xf32>
    %c0_15 = arith.constant 0 : index
    %c0_16 = arith.constant 0 : index
    %20 = vector.load %arg7[%c0_15, %c0_16] : memref<1x128xf32, #tpu.memory_space<vmem>>, vector<1x128xf32>
    %21 = vector.broadcast %20 : vector<1x128xf32> to vector<64x128xf32>
    %22 = arith.addf %19, %21 : vector<64x128xf32>
    %cst_17 = arith.constant 0.000000e+00 : f32
    %23 = vector.broadcast %cst_17 : f32 to vector<64x128xf32>
    %24 = arith.maximumf %22, %23 : vector<64x128xf32>
    %25 = arith.truncf %24 : vector<64x128xf32> to vector<64x128xbf16>
    %c0_18 = arith.constant 0 : index
    %c0_19 = arith.constant 0 : index
    %26 = vector.load %arg8[%c0_18, %c0_19] : memref<128x784xbf16, #tpu.memory_space<vmem>>, vector<128x784xbf16>
    %cst_20 = arith.constant dense<0.000000e+00> : vector<64x784xf32>
    %27 = tpu.matmul %25, %26, %cst_20 {dimension_numbers = #tpu.dot_dimension_numbers<[1], [0], [0], [1], [0, 0, 1, 1], [], []>} : vector<64x128xbf16>, vector<128x784xbf16>, vector<64x784xf32> -> vector<64x784xf32>
    %c0_21 = arith.constant 0 : index
    %c0_22 = arith.constant 0 : index
    %28 = vector.load %arg9[%c0_21, %c0_22] : memref<1x784xf32, #tpu.memory_space<vmem>>, vector<1x784xf32>
    %29 = vector.broadcast %28 : vector<1x784xf32> to vector<64x784xf32>
    %30 = arith.addf %27, %29 : vector<64x784xf32>
    %cst_23 = arith.constant 5.000000e-01 : f32
    %31 = vector.broadcast %cst_23 : f32 to vector<64x784xf32>
    %32 = arith.mulf %31, %30 : vector<64x784xf32>
    %33 = math.tanh %32 : vector<64x784xf32>
    %cst_24 = arith.constant 5.000000e-01 : f32
    %34 = vector.broadcast %cst_24 : f32 to vector<64x784xf32>
    %35 = arith.mulf %34, %33 : vector<64x784xf32>
    %cst_25 = arith.constant 5.000000e-01 : f32
    %36 = vector.broadcast %cst_25 : f32 to vector<64x784xf32>
    %37 = arith.addf %35, %36 : vector<64x784xf32>
    %c0_26 = arith.constant 0 : index
    %c0_27 = arith.constant 0 : index
    %38 = vector.load %arg10[%c0_26, %c0_27] : memref<64x784xf32, #tpu.memory_space<vmem>>, vector<64x784xf32>
    tpu.vector_store %arg10[%c0_26, %c0_27], %37 {strides = array<i32>} : memref<64x784xf32, #tpu.memory_space<vmem>>, vector<64x784xf32>,
    return
  }
  func.func @transform_0(%arg0: i32) -> (i32, i32) {
    %c0_i32 = arith.constant 0 : i32
    %c0_i32_0 = arith.constant 0 : i32
    return %arg0, %c0_i32 : i32, i32
  }
  func.func @transform_1(%arg0: i32) -> (i32, i32) {
    %c0_i32 = arith.constant 0 : i32
    %c0_i32_0 = arith.constant 0 : i32
    %c0_i32_1 = arith.constant 0 : i32
    return %c0_i32, %c0_i32_0 : i32, i32
  }
  func.func @transform_2(%arg0: i32) -> (i32, i32) {
    %c0_i32 = arith.constant 0 : i32
    %c0_i32_0 = arith.constant 0 : i32
    %c0_i32_1 = arith.constant 0 : i32
    return %c0_i32, %c0_i32_0 : i32, i32
  }
  func.func @transform_3(%arg0: i32) -> (i32, i32) {
    %c0_i32 = arith.constant 0 : i32
    %c0_i32_0 = arith.constant 0 : i32
    %c0_i32_1 = arith.constant 0 : i32
    return %c0_i32, %c0_i32_0 : i32, i32
  }
  func.func @transform_4(%arg0: i32) -> (i32, i32) {
    %c0_i32 = arith.constant 0 : i32
    %c0_i32_0 = arith.constant 0 : i32
    %c0_i32_1 = arith.constant 0 : i32
    return %c0_i32, %c0_i32_0 : i32, i32
  }
  func.func @transform_5(%arg0: i32) -> (i32, i32) {
    %c0_i32 = arith.constant 0 : i32
    %c0_i32_0 = arith.constant 0 : i32
    %c0_i32_1 = arith.constant 0 : i32
    return %c0_i32, %c0_i32_0 : i32, i32
  }
  func.func @transform_6(%arg0: i32) -> (i32, i32) {
    %c0_i32 = arith.constant 0 : i32
    %c0_i32_0 = arith.constant 0 : i32
    %c0_i32_1 = arith.constant 0 : i32
    return %c0_i32, %c0_i32_0 : i32, i32
  }
  func.func @transform_7(%arg0: i32) -> (i32, i32) {
    %c0_i32 = arith.constant 0 : i32
    %c0_i32_0 = arith.constant 0 : i32
    %c0_i32_1 = arith.constant 0 : i32
    return %c0_i32, %c0_i32_0 : i32, i32
  }
  func.func @transform_8(%arg0: i32) -> (i32, i32) {
    %c0_i32 = arith.constant 0 : i32
    %c0_i32_0 = arith.constant 0 : i32
    %c0_i32_1 = arith.constant 0 : i32
    return %c0_i32, %c0_i32_0 : i32, i32
  }
  func.func @transform_9(%arg0: i32) -> (i32, i32) {
    %c0_i32 = arith.constant 0 : i32
    %c0_i32_0 = arith.constant 0 : i32
    return %arg0, %c0_i32 : i32, i32
  }
}

module attributes {stable_mosaic.version = 11 : i64} {
  func.func @kernel(%arg0: i32, %arg1: memref<64x784xf32, #tpu.memory_space<vmem>>, %arg2: memref<784x128xbf16, #tpu.memory_space<vmem>>, %arg3: memref<1x128xf32, #tpu.memory_space<vmem>>, %arg4: memref<128x32xbf16, #tpu.memory_space<vmem>>, %arg5: memref<1x32xf32, #tpu.memory_space<vmem>>, %arg6: memref<32x128xbf16, #tpu.memory_space<vmem>>, %arg7: memref<1x128xf32, #tpu.memory_space<vmem>>, %arg8: memref<128x784xbf16, #tpu.memory_space<vmem>>, %arg9: memref<1x784xf32, #tpu.memory_space<vmem>>, %arg10: memref<64x784xf32, #tpu.memory_space<vmem>>) attributes {dimension_semantics = [#tpu.dimension_semantics<parallel>], iteration_bounds = array<i64: 1>, scalar_prefetch = 0 : i64, scratch_operands = 0 : i64, tpu.core_type = #tpu.core_type<tc>, window_params = [{transform_indices = @transform_0, window_bounds = array<i64: 64, 784>}, {pipeline_mode = #tpu.pipeline_mode<synchronous>, transform_indices = @transform_1, window_bounds = array<i64: 784, 128>}, {pipeline_mode = #tpu.pipeline_mode<synchronous>, transform_indices = @transform_2, window_bounds = array<i64: 1, 128>}, {pipeline_mode = #tpu.pipeline_mode<synchronous>, transform_indices = @transform_3, window_bounds = array<i64: 128, 32>}, {pipeline_mode = #tpu.pipeline_mode<synchronous>, transform_indices = @transform_4, window_bounds = array<i64: 1, 32>}, {pipeline_mode = #tpu.pipeline_mode<synchronous>, transform_indices = @transform_5, window_bounds = array<i64: 32, 128>}, {pipeline_mode = #tpu.pipeline_mode<synchronous>, transform_indices = @transform_6, window_bounds = array<i64: 1, 128>}, {pipeline_mode = #tpu.pipeline_mode<synchronous>, transform_indices = @transform_7, window_bounds = array<i64: 128, 784>}, {pipeline_mode = #tpu.pipeline_mode<synchronous>, transform_indices = @transform_8, window_bounds = array<i64: 1, 784>}, {transform_indices = @transform_9, window_bounds = array<i64: 64, 784>}]} {
    %c0 = arith.constant 0 : index
    %c0_0 = arith.constant 0 : index
    %0 = vector.load %arg1[%c0, %c0_0] : memref<64x784xf32, #tpu.memory_space<vmem>>, vector<64x784xf32>
    %1 = arith.truncf %0 : vector<64x784xf32> to vector<64x784xbf16>
    %c0_1 = arith.constant 0 : index
    %c0_2 = arith.constant 0 : index
    %2 = vector.load %arg2[%c0_1, %c0_2] : memref<784x128xbf16, #tpu.memory_space<vmem>>, vector<784x128xbf16>
    %cst = arith.constant dense<0.000000e+00> : vector<64x128xf32>
    %3 = tpu.matmul %1, %2, %cst {dimension_numbers = #tpu.dot_dimension_numbers<[1], [0], [0], [1], [0, 0, 1, 1], [], []>} : vector<64x784xbf16>, vector<784x128xbf16>, vector<64x128xf32> -> vector<64x128xf32>
    %c0_3 = arith.constant 0 : index
    %c0_4 = arith.constant 0 : index
    %4 = vector.load %arg3[%c0_3, %c0_4] : memref<1x128xf32, #tpu.memory_space<vmem>>, vector<1x128xf32>
    %5 = vector.broadcast %4 : vector<1x128xf32> to vector<64x128xf32>
    %6 = arith.addf %3, %5 : vector<64x128xf32>
    %cst_5 = arith.constant 0.000000e+00 : f32
    %7 = vector.broadcast %cst_5 : f32 to vector<64x128xf32>
    %8 = arith.maximumf %6, %7 : vector<64x128xf32>
    %9 = arith.truncf %8 : vector<64x128xf32> to vector<64x128xbf16>
    %c0_6 = arith.constant 0 : index
    %c0_7 = arith.constant 0 : index
    %10 = vector.load %arg4[%c0_6, %c0_7] : memref<128x32xbf16, #tpu.memory_space<vmem>>, vector<128x32xbf16>
    %cst_8 = arith.constant dense<0.000000e+00> : vector<64x32xf32>
    %11 = tpu.matmul %9, %10, %cst_8 {dimension_numbers = #tpu.dot_dimension_numbers<[1], [0], [0], [1], [0, 0, 1, 1], [], []>} : vector<64x128xbf16>, vector<128x32xbf16>, vector<64x32xf32> -> vector<64x32xf32>
    %c0_9 = arith.constant 0 : index
    %c0_10 = arith.constant 0 : index
    %12 = vector.load %arg5[%c0_9, %c0_10] : memref<1x32xf32, #tpu.memory_space<vmem>>, vector<1x32xf32>
    %13 = vector.broadcast %12 : vector<1x32xf32> to vector<64x32xf32>
    %14 = arith.addf %11, %13 : vector<64x32xf32>
    %cst_11 = arith.constant 0.000000e+00 : f32
    %15 = vector.broadcast %cst_11 : f32 to vector<64x32xf32>
    %16 = arith.maximumf %14, %15 : vector<64x32xf32>
    %17 = arith.truncf %16 : vector<64x32xf32> to vector<64x32xbf16>
    %c0_12 = arith.constant 0 : index
    %c0_13 = arith.constant 0 : index
    %18 = vector.load %arg6[%c0_12, %c0_13] : memref<32x128xbf16, #tpu.memory_space<vmem>>, vector<32x128xbf16>
    %cst_14 = arith.constant dense<0.000000e+00> : vector<64x128xf32>
    %19 = tpu.matmul %17, %18, %cst_14 {dimension_numbers = #tpu.dot_dimension_numbers<[1], [0], [0], [1], [0, 0, 1, 1], [], []>} : vector<64x32xbf16>, vector<32x128xbf16>, vector<64x128xf32> -> vector<64x128xf32>
    %c0_15 = arith.constant 0 : index
    %c0_16 = arith.constant 0 : index
    %20 = vector.load %arg7[%c0_15, %c0_16] : memref<1x128xf32, #tpu.memory_space<vmem>>, vector<1x128xf32>
    %21 = vector.broadcast %20 : vector<1x128xf32> to vector<64x128xf32>
    %22 = arith.addf %19, %21 : vector<64x128xf32>
    %cst_17 = arith.constant 0.000000e+00 : f32
    %23 = vector.broadcast %cst_17 : f32 to vector<64x128xf32>
    %24 = arith.maximumf %22, %23 : vector<64x128xf32>
    %25 = arith.truncf %24 : vector<64x128xf32> to vector<64x128xbf16>
    %c0_18 = arith.constant 0 : index
    %c0_19 = arith.constant 0 : index
    %26 = vector.load %arg8[%c0_18, %c0_19] : memref<128x784xbf16, #tpu.memory_space<vmem>>, vector<128x784xbf16>
    %cst_20 = arith.constant dense<0.000000e+00> : vector<64x784xf32>
    %27 = tpu.matmul %25, %26, %cst_20 {dimension_numbers = #tpu.dot_dimension_numbers<[1], [0], [0], [1], [0, 0, 1, 1], [], []>} : vector<64x128xbf16>, vector<128x784xbf16>, vector<64x784xf32> -> vector<64x784xf32>
    %c0_21 = arith.constant 0 : index
    %c0_22 = arith.constant 0 : index
    %28 = vector.load %arg9[%c0_21, %c0_22] : memref<1x784xf32, #tpu.memory_space<vmem>>, vector<1x784xf32>
    %29 = vector.broadcast %28 : vector<1x784xf32> to vector<64x784xf32>
    %30 = arith.addf %27, %29 : vector<64x784xf32>
    %cst_23 = arith.constant 5.000000e-01 : f32
    %31 = vector.broadcast %cst_23 : f32 to vector<64x784xf32>
    %32 = arith.mulf %31, %30 : vector<64x784xf32>
    %33 = math.tanh %32 : vector<64x784xf32>
    %cst_24 = arith.constant 5.000000e-01 : f32
    %34 = vector.broadcast %cst_24 : f32 to vector<64x784xf32>
    %35 = arith.mulf %34, %33 : vector<64x784xf32>
    %cst_25 = arith.constant 5.000000e-01 : f32
    %36 = vector.broadcast %cst_25 : f32 to vector<64x784xf32>
    %37 = arith.addf %35, %36 : vector<64x784xf32>
    %c0_26 = arith.constant 0 : index
    %c0_27 = arith.constant 0 : index
    %38 = vector.load %arg10[%c0_26, %c0_27] : memref<64x784xf32, #tpu.memory_space<vmem>>, vector<64x784xf32>
    tpu.vector_store %arg10[%c0_26, %c0_27], %37 {strides = array<i32>} : memref<64x784xf32, #tpu.memory_space<vmem>>, vector<64x784xf32>,
    return
  }
  func.func @transform_0(%arg0: i32) -> (i32, i32) {
    %c0_i32 = arith.constant 0 : i32
    %c0_i32_0 = arith.constant 0 : i32
    return %arg0, %c0_i32 : i32, i32
  }
  func.func @transform_1(%arg0: i32) -> (i32, i32) {
    %c0_i32 = arith.constant 0 : i32
    %c0_i32_0 = arith.constant 0 : i32
    %c0_i32_1 = arith.constant 0 : i32
    return %c0_i32, %c0_i32_0 : i32, i32
  }
  func.func @transform_2(%arg0: i32) -> (i32, i32) {
    %c0_i32 = arith.constant 0 : i32
    %c0_i32_0 = arith.constant 0 : i32
    %c0_i32_1 = arith.constant 0 : i32
    return %c0_i32, %c0_i32_0 : i32, i32
  }
  func.func @transform_3(%arg0: i32) -> (i32, i32) {
    %c0_i32 = arith.constant 0 : i32
    %c0_i32_0 = arith.constant 0 : i32
    %c0_i32_1 = arith.constant 0 : i32
    return %c0_i32, %c0_i32_0 : i32, i32
  }
  func.func @transform_4(%arg0: i32) -> (i32, i32) {
    %c0_i32 = arith.constant 0 : i32
    %c0_i32_0 = arith.constant 0 : i32
    %c0_i32_1 = arith.constant 0 : i32
    return %c0_i32, %c0_i32_0 : i32, i32
  }
  func.func @transform_5(%arg0: i32) -> (i32, i32) {
    %c0_i32 = arith.constant 0 : i32
    %c0_i32_0 = arith.constant 0 : i32
    %c0_i32_1 = arith.constant 0 : i32
    return %c0_i32, %c0_i32_0 : i32, i32
  }
  func.func @transform_6(%arg0: i32) -> (i32, i32) {
    %c0_i32 = arith.constant 0 : i32
    %c0_i32_0 = arith.constant 0 : i32
    %c0_i32_1 = arith.constant 0 : i32
    return %c0_i32, %c0_i32_0 : i32, i32
  }
  func.func @transform_7(%arg0: i32) -> (i32, i32) {
    %c0_i32 = arith.constant 0 : i32
    %c0_i32_0 = arith.constant 0 : i32
    %c0_i32_1 = arith.constant 0 : i32
    return %c0_i32, %c0_i32_0 : i32, i32
  }
  func.func @transform_8(%arg0: i32) -> (i32, i32) {
    %c0_i32 = arith.constant 0 : i32
    %c0_i32_0 = arith.constant 0 : i32
    %c0_i32_1 = arith.constant 0 : i32
    return %c0_i32, %c0_i32_0 : i32, i32
  }
  func.func @transform_9(%arg0: i32) -> (i32, i32) {
    %c0_i32 = arith.constant 0 : i32
    %c0_i32_0 = arith.constant 0 : i32
    return %arg0, %c0_i32 : i32, i32
  }
}

</mosaic_0001>

<llo_original>
// kernel: tpu_custom_call.1
$region0: #{tpu_custom_call.1}
  #allocation0 [shape = 'u32[]', space=smem, size = 0x4, offset = 0x4, fixed_abs, tag = 'smem constant byte address 0x4 - core index']
  #allocation1 [shape = 'u32[144,128]{1,0:T(1,128)}', space=vmem, size = 0x12000, scoped, tag = 'internal scratch']
  %s0 = inlined_call_operand.vmem [shape: f32[64,784], index: 0, kind: input, shape index: {}]
  %s1 = inlined_call_operand.vmem [shape: bf16[784,128], index: 1, kind: input, shape index: {}]
  %s2 = inlined_call_operand.vmem [shape: f32[1,128], index: 2, kind: input, shape index: {}]
  %s3 = inlined_call_operand.vmem [shape: bf16[128,32], index: 3, kind: input, shape index: {}]
  %s4 = inlined_call_operand.vmem [shape: f32[1,32], index: 4, kind: input, shape index: {}]
  %s5 = inlined_call_operand.vmem [shape: bf16[32,128], index: 5, kind: input, shape index: {}]
  %s6 = inlined_call_operand.vmem [shape: f32[1,128], index: 6, kind: input, shape index: {}]
  %s7 = inlined_call_operand.vmem [shape: bf16[128,784], index: 7, kind: input, shape index: {}]
  %s8 = inlined_call_operand.vmem [shape: f32[1,784], index: 8, kind: input, shape index: {}]
  %s9 = inlined_call_operand.hbm [shape: f32[64,784], index: 9, kind: output, shape index: {}]
  %s10 = sld [smem:[#allocation0]]
  $region46: #{tpu_custom_call.1} parent=0
    _
  %s12 = ssub.s32 1, %s10
  %s13 = scalar_select 0, %s12, %s10
  $region1: #{tpu_custom_call.1} parent=0
    #allocation2 [shape = 'u8[229376]{0}', space=vmem, size = 0x38000, scoped, tag = 'output window, operand 0, single buffered']
    #allocation3 [shape = 's32[1]{0}', space=sflag, size = 0x4, scoped, tag = 'scoped memory for tpu_custom_call.1']
    %14 = vsyncpa [#allocation3], 0
    // Predicated region
    $region2: #{tpu_custom_call.1} parent=1 // pred_check
      _
    $region3: #{tpu_custom_call.1} parent=1 // pred_check_branch
      %16 = sbr.rel (0) target = $region5
    $region4: #{tpu_custom_call.1} parent=1 // pred_region
      _
    $region5: #{tpu_custom_call.1} parent=1 // pred_fallthru
      _
    // Predicated region
    $region6: #{tpu_custom_call.1} parent=1 // pred_check
      _
    $region7: #{tpu_custom_call.1} parent=1 // pred_check_branch
      %18 = sbr.rel (0) target = $region9
    $region8: #{tpu_custom_call.1} parent=1 // pred_region
      _
    $region9: #{tpu_custom_call.1} parent=1 // pred_fallthru
      _
    // Predicated region
    $region10: #{tpu_custom_call.1} parent=1 // pred_check
      _
    $region11: #{tpu_custom_call.1} parent=1 // pred_check_branch
      %20 = sbr.rel (0) target = $region13
    $region12: #{tpu_custom_call.1} parent=1 // pred_region
      _
    $region13: #{tpu_custom_call.1} parent=1 // pred_fallthru
      _
    // Predicated region
    $region14: #{tpu_custom_call.1} parent=1 // pred_check
      _
    $region15: #{tpu_custom_call.1} parent=1 // pred_check_branch
      %22 = sbr.rel (0) target = $region17
    $region16: #{tpu_custom_call.1} parent=1 // pred_region
      _
    $region17: #{tpu_custom_call.1} parent=1 // pred_fallthru
      _
    // Predicated region
    $region18: #{tpu_custom_call.1} parent=1 // pred_check
      _
    $region19: #{tpu_custom_call.1} parent=1 // pred_check_branch
      %24 = sbr.rel (0) target = $region21
    $region20: #{tpu_custom_call.1} parent=1 // pred_region
      _
    $region21: #{tpu_custom_call.1} parent=1 // pred_fallthru
      _
    // Predicated region
    $region22: #{tpu_custom_call.1} parent=1 // pred_check
      _
    $region23: #{tpu_custom_call.1} parent=1 // pred_check_branch
      %26 = sbr.rel (0) target = $region25
    $region24: #{tpu_custom_call.1} parent=1 // pred_region
      _
    $region25: #{tpu_custom_call.1} parent=1 // pred_fallthru
      _
    // Predicated region
    $region26: #{tpu_custom_call.1} parent=1 // pred_check
      _
    $region27: #{tpu_custom_call.1} parent=1 // pred_check_branch
      %28 = sbr.rel (0) target = $region29
    $region28: #{tpu_custom_call.1} parent=1 // pred_region
      _
    $region29: #{tpu_custom_call.1} parent=1 // pred_fallthru
      _
    // Predicated region
    $region30: #{tpu_custom_call.1} parent=1 // pred_check
      _
    $region31: #{tpu_custom_call.1} parent=1 // pred_check_branch
      %30 = sbr.rel (0) target = $region33
    $region32: #{tpu_custom_call.1} parent=1 // pred_region
      _
    $region33: #{tpu_custom_call.1} parent=1 // pred_fallthru
      _
    // Predicated region
    $region34: #{tpu_custom_call.1} parent=1 // pred_check
      _
    $region35: #{tpu_custom_call.1} parent=1 // pred_check_branch
      %32 = sbr.rel (0) target = $region37
    $region36: #{tpu_custom_call.1} parent=1 // pred_region
      _
    $region37: #{tpu_custom_call.1} parent=1 // pred_fallthru
      _
    %v34 = vld [vmem:[%s0] sm:$0xff]
    %v35 = vld [vmem:[%s0 + $0x8] sm:$0xff]
    %v36 = vld [vmem:[%s0 + $0x10] sm:$0xff]
    %v37 = vld [vmem:[%s0 + $0x18] sm:$0xff]
    %v38 = vld [vmem:[%s0 + $0x20] sm:$0xff]
    %v39 = vld [vmem:[%s0 + $0x28] sm:$0xff]
    %v40 = vld [vmem:[%s0 + $0x30] sm:$0xff]
    %v41 = vld [vmem:[%s0 + $0x38] sm:$0xff]
    %v42 = vld [vmem:[%s0 + $0x40] sm:$0xff]
    %v43 = vld [vmem:[%s0 + $0x48] sm:$0xff]
    %v44 = vld [vmem:[%s0 + $0x50] sm:$0xff]
    %v45 = vld [vmem:[%s0 + $0x58] sm:$0xff]
    %v46 = vld [vmem:[%s0 + $0x60] sm:$0xff]
    %v47 = vld [vmem:[%s0 + $0x68] sm:$0xff]
    %v48 = vld [vmem:[%s0 + $0x70] sm:$0xff]
    %v49 = vld [vmem:[%s0 + $0x78] sm:$0xff]
    %v50 = vld [vmem:[%s0 + $0x80] sm:$0xff]
    %v51 = vld [vmem:[%s0 + $0x88] sm:$0xff]
    %v52 = vld [vmem:[%s0 + $0x90] sm:$0xff]
    %v53 = vld [vmem:[%s0 + $0x98] sm:$0xff]
    %v54 = vld [vmem:[%s0 + $0xa0] sm:$0xff]
    %v55 = vld [vmem:[%s0 + $0xa8] sm:$0xff]
    %v56 = vld [vmem:[%s0 + $0xb0] sm:$0xff]
    %v57 = vld [vmem:[%s0 + $0xb8] sm:$0xff]
    %v58 = vld [vmem:[%s0 + $0xc0] sm:$0xff]
    %v59 = vld [vmem:[%s0 + $0xc8] sm:$0xff]
    %v60 = vld [vmem:[%s0 + $0xd0] sm:$0xff]
    %v61 = vld [vmem:[%s0 + $0xd8] sm:$0xff]
    %v62 = vld [vmem:[%s0 + $0xe0] sm:$0xff]
    %v63 = vld [vmem:[%s0 + $0xe8] sm:$0xff]
    %v64 = vld [vmem:[%s0 + $0xf0] sm:$0xff]
    %v65 = vld [vmem:[%s0 + $0xf8] sm:$0xff]
    %v66 = vld [vmem:[%s0 + $0x100] sm:$0xff]
    %v67 = vld [vmem:[%s0 + $0x108] sm:$0xff]
    %v68 = vld [vmem:[%s0 + $0x110] sm:$0xff]
    %v69 = vld [vmem:[%s0 + $0x118] sm:$0xff]
    %v70 = vld [vmem:[%s0 + $0x120] sm:$0xff]
    %v71 = vld [vmem:[%s0 + $0x128] sm:$0xff]
    %v72 = vld [vmem:[%s0 + $0x130] sm:$0xff]
    %v73 = vld [vmem:[%s0 + $0x138] sm:$0xff]
    %v74 = vld [vmem:[%s0 + $0x140] sm:$0xff]
    %v75 = vld [vmem:[%s0 + $0x148] sm:$0xff]
    %v76 = vld [vmem:[%s0 + $0x150] sm:$0xff]
    %v77 = vld [vmem:[%s0 + $0x158] sm:$0xff]
    %v78 = vld [vmem:[%s0 + $0x160] sm:$0xff]
    %v79 = vld [vmem:[%s0 + $0x168] sm:$0xff]
    %v80 = vld [vmem:[%s0 + $0x170] sm:$0xff]
    %v81 = vld [vmem:[%s0 + $0x178] sm:$0xff]
    %v82 = vld [vmem:[%s0 + $0x180] sm:$0xff]
    %v83 = vld [vmem:[%s0 + $0x188] sm:$0xff]
    %v84 = vld [vmem:[%s0 + $0x190] sm:$0xff]
    %v85 = vld [vmem:[%s0 + $0x198] sm:$0xff]
    %v86 = vld [vmem:[%s0 + $0x1a0] sm:$0xff]
    %v87 = vld [vmem:[%s0 + $0x1a8] sm:$0xff]
    %v88 = vld [vmem:[%s0 + $0x1b0] sm:$0xff]
    %v89 = vld [vmem:[%s0 + $0x1b8] sm:$0xff]
    %v90 = vpack.c.bf16 %v41, %v34
    %v91 = vpack.c.bf16 %v42, %v35
    %v92 = vpack.c.bf16 %v43, %v36
    %v93 = vpack.c.bf16 %v44, %v37
    %v94 = vpack.c.bf16 %v45, %v38
    %v95 = vpack.c.bf16 %v46, %v39
    %v96 = vpack.c.bf16 %v47, %v40
    %v97 = vpack.c.bf16 %v55, %v48
    %v98 = vpack.c.bf16 %v56, %v49
    %v99 = vpack.c.bf16 %v57, %v50
    %v100 = vpack.c.bf16 %v58, %v51
    %v101 = vpack.c.bf16 %v59, %v52
    %v102 = vpack.c.bf16 %v60, %v53
    %v103 = vpack.c.bf16 %v61, %v54
    %v104 = vpack.c.bf16 %v69, %v62
    %v105 = vpack.c.bf16 %v70, %v63
    %v106 = vpack.c.bf16 %v71, %v64
    %v107 = vpack.c.bf16 %v72, %v65
    %v108 = vpack.c.bf16 %v73, %v66
    %v109 = vpack.c.bf16 %v74, %v67
    %v110 = vpack.c.bf16 %v75, %v68
    %v111 = vpack.c.bf16 %v83, %v76
    %v112 = vpack.c.bf16 %v84, %v77
    %v113 = vpack.c.bf16 %v85, %v78
    %v114 = vpack.c.bf16 %v86, %v79
    %v115 = vpack.c.bf16 %v87, %v80
    %v116 = vpack.c.bf16 %v88, %v81
    %v117 = vpack.c.bf16 %v89, %v82
    %v118 = vld [vmem:[%s1] sm:$0xf]
    %v119 = vld [vmem:[%s1 + $0x4] sm:$0xf]
    %v120 = vld [vmem:[%s1 + $0x8] sm:$0xf]
    %v121 = vld [vmem:[%s1 + $0xc] sm:$0xf]
    %v122 = vld [vmem:[%s1 + $0x10] sm:$0xf]
    %v123 = vld [vmem:[%s1 + $0x14] sm:$0xf]
    %v124 = vld [vmem:[%s1 + $0x18] sm:$0xf]
    %v125 = vld [vmem:[%s1 + $0x1c] sm:$0xf]
    %v126 = vld [vmem:[%s1 + $0x20] sm:$0xf]
    %v127 = vld [vmem:[%s1 + $0x24] sm:$0xf]
    %v128 = vld [vmem:[%s1 + $0x28] sm:$0xf]
    %v129 = vld [vmem:[%s1 + $0x2c] sm:$0xf]
    %v130 = vld [vmem:[%s1 + $0x30] sm:$0xf]
    %v131 = vld [vmem:[%s1 + $0x34] sm:$0xf]
    %v132 = vld [vmem:[%s1 + $0x38] sm:$0xf]
    %v133 = vld [vmem:[%s1 + $0x3c] sm:$0xf]
    %v134 = vld [vmem:[%s1 + $0x40] sm:$0xf]
    %v135 = vld [vmem:[%s1 + $0x44] sm:$0xf]
    %v136 = vld [vmem:[%s1 + $0x48] sm:$0xf]
    %v137 = vld [vmem:[%s1 + $0x4c] sm:$0xf]
    %v138 = vld [vmem:[%s1 + $0x50] sm:$0xf]
    %v139 = vld [vmem:[%s1 + $0x54] sm:$0xf]
    %v140 = vld [vmem:[%s1 + $0x58] sm:$0xf]
    %v141 = vld [vmem:[%s1 + $0x5c] sm:$0xf]
    %v142 = vld [vmem:[%s1 + $0x60] sm:$0xf]
    %v143 = vld [vmem:[%s1 + $0x64] sm:$0xf]
    %v144 = vld [vmem:[%s1 + $0x68] sm:$0xf]
    %v145 = vld [vmem:[%s1 + $0x6c] sm:$0xf]
    %v146 = vld [vmem:[%s1 + $0x70] sm:$0xf]
    %v147 = vld [vmem:[%s1 + $0x74] sm:$0xf]
    %v148 = vld [vmem:[%s1 + $0x78] sm:$0xf]
    %v149 = vld [vmem:[%s1 + $0x7c] sm:$0xf]
    %v150 = vld [vmem:[%s1 + $0x80] sm:$0xf]
    %v151 = vld [vmem:[%s1 + $0x84] sm:$0xf]
    %v152 = vld [vmem:[%s1 + $0x88] sm:$0xf]
    %v153 = vld [vmem:[%s1 + $0x8c] sm:$0xf]
    %v154 = vld [vmem:[%s1 + $0x90] sm:$0xf]
    %v155 = vld [vmem:[%s1 + $0x94] sm:$0xf]
    %v156 = vld [vmem:[%s1 + $0x98] sm:$0xf]
    %v157 = vld [vmem:[%s1 + $0x9c] sm:$0xf]
    %v158 = vld [vmem:[%s1 + $0xa0] sm:$0xf]
    %v159 = vld [vmem:[%s1 + $0xa4] sm:$0xf]
    %v160 = vld [vmem:[%s1 + $0xa8] sm:$0xf]
    %v161 = vld [vmem:[%s1 + $0xac] sm:$0xf]
    %v162 = vld [vmem:[%s1 + $0xb0] sm:$0xf]
    %v163 = vld [vmem:[%s1 + $0xb4] sm:$0xf]
    %v164 = vld [vmem:[%s1 + $0xb8] sm:$0xf]
    %v165 = vld [vmem:[%s1 + $0xbc] sm:$0xf]
    %v166 = vld [vmem:[%s1 + $0xc0] sm:$0xf]
    %v167 = vld [vmem:[%s1 + $0xc4] sm:$0xf]
    %v168 = vld [vmem:[%s1 + $0xc8] sm:$0xf]
    %v169 = vld [vmem:[%s1 + $0xcc] sm:$0xf]
    %v170 = vld [vmem:[%s1 + $0xd0] sm:$0xf]
    %v171 = vld [vmem:[%s1 + $0xd4] sm:$0xf]
    %v172 = vld [vmem:[%s1 + $0xd8] sm:$0xf]
    %v173 = vld [vmem:[%s1 + $0xdc] sm:$0xf]
    %v174 = vld [vmem:[%s1 + $0xe0] sm:$0xf]
    %v175 = vld [vmem:[%s1 + $0xe4] sm:$0xf]
    %v176 = vld [vmem:[%s1 + $0xe8] sm:$0xf]
    %v177 = vld [vmem:[%s1 + $0xec] sm:$0xf]
    %v178 = vld [vmem:[%s1 + $0xf0] sm:$0xf]
    %v179 = vld [vmem:[%s1 + $0xf4] sm:$0xf]
    %v180 = vld [vmem:[%s1 + $0xf8] sm:$0xf]
    %v181 = vld [vmem:[%s1 + $0xfc] sm:$0xf]
    %v182 = vld [vmem:[%s1 + $0x100] sm:$0xf]
    %v183 = vld [vmem:[%s1 + $0x104] sm:$0xf]
    %v184 = vld [vmem:[%s1 + $0x108] sm:$0xf]
    %v185 = vld [vmem:[%s1 + $0x10c] sm:$0xf]
    %v186 = vld [vmem:[%s1 + $0x110] sm:$0xf]
    %v187 = vld [vmem:[%s1 + $0x114] sm:$0xf]
    %v188 = vld [vmem:[%s1 + $0x118] sm:$0xf]
    %v189 = vld [vmem:[%s1 + $0x11c] sm:$0xf]
    %v190 = vld [vmem:[%s1 + $0x120] sm:$0xf]
    %v191 = vld [vmem:[%s1 + $0x124] sm:$0xf]
    %v192 = vld [vmem:[%s1 + $0x128] sm:$0xf]
    %v193 = vld [vmem:[%s1 + $0x12c] sm:$0xf]
    %v194 = vld [vmem:[%s1 + $0x130] sm:$0xf]
    %v195 = vld [vmem:[%s1 + $0x134] sm:$0xf]
    %v196 = vld [vmem:[%s1 + $0x138] sm:$0xf]
    %v197 = vld [vmem:[%s1 + $0x13c] sm:$0xf]
    %v198 = vld [vmem:[%s1 + $0x140] sm:$0xf]
    %v199 = vld [vmem:[%s1 + $0x144] sm:$0xf]
    %v200 = vld [vmem:[%s1 + $0x148] sm:$0xf]
    %v201 = vld [vmem:[%s1 + $0x14c] sm:$0xf]
    %v202 = vld [vmem:[%s1 + $0x150] sm:$0xf]
    %v203 = vld [vmem:[%s1 + $0x154] sm:$0xf]
    %v204 = vld [vmem:[%s1 + $0x158] sm:$0xf]
    %v205 = vld [vmem:[%s1 + $0x15c] sm:$0xf]
    %v206 = vld [vmem:[%s1 + $0x160] sm:$0xf]
    %v207 = vld [vmem:[%s1 + $0x164] sm:$0xf]
    %v208 = vld [vmem:[%s1 + $0x168] sm:$0xf]
    %v209 = vld [vmem:[%s1 + $0x16c] sm:$0xf]
    %v210 = vld [vmem:[%s1 + $0x170] sm:$0xf]
    %v211 = vld [vmem:[%s1 + $0x174] sm:$0xf]
    %v212 = vld [vmem:[%s1 + $0x178] sm:$0xf]
    %v213 = vld [vmem:[%s1 + $0x17c] sm:$0xf]
    %v214 = vld [vmem:[%s1 + $0x180] sm:$0xf]
    %v215 = vld [vmem:[%s1 + $0x184] sm:$0xf]
    %v216 = vld [vmem:[%s2] sm:$0x1]
    %v218 = vlaneseq
    %v219 = vshrl.u32 %v218, 7
    %v220 = vsub.s32 0, %v219
    %v221 = vrot.slane %v216, %v220
    %v321 = vunpack.c.l.b16 %v118
    %v322 = vunpack.c.l.b16 %v119
    %v323 = vunpack.c.l.b16 %v120
    %v324 = vunpack.c.l.b16 %v121
    %v325 = vunpack.c.l.b16 %v122
    %v326 = vunpack.c.l.b16 %v123
    %v327 = vunpack.c.l.b16 %v124
    %v328 = vunpack.c.l.b16 %v125
    %v329 = vunpack.c.l.b16 %v126
    %v330 = vunpack.c.l.b16 %v127
    %v331 = vunpack.c.l.b16 %v128
    %v332 = vunpack.c.l.b16 %v129
    %v333 = vunpack.c.l.b16 %v130
    %v334 = vunpack.c.l.b16 %v131
    %v335 = vunpack.c.l.b16 %v132
    %v336 = vunpack.c.l.b16 %v133
    %v337 = vunpack.c.l.b16 %v134
    %v338 = vunpack.c.l.b16 %v135
    %v339 = vunpack.c.l.b16 %v136
    %v340 = vunpack.c.l.b16 %v137
    %v341 = vunpack.c.l.b16 %v138
    %v342 = vunpack.c.l.b16 %v139
    %v343 = vunpack.c.l.b16 %v140
    %v344 = vunpack.c.l.b16 %v141
    %v345 = vunpack.c.l.b16 %v142
    %v346 = vunpack.c.l.b16 %v143
    %v347 = vunpack.c.l.b16 %v144
    %v348 = vunpack.c.l.b16 %v145
    %v349 = vunpack.c.l.b16 %v146
    %v350 = vunpack.c.l.b16 %v147
    %v351 = vunpack.c.l.b16 %v148
    %v352 = vunpack.c.l.b16 %v149
    %v353 = vunpack.c.l.b16 %v150
    %v354 = vunpack.c.l.b16 %v151
    %v355 = vunpack.c.l.b16 %v152
    %v356 = vunpack.c.l.b16 %v153
    %v357 = vunpack.c.l.b16 %v154
    %v358 = vunpack.c.l.b16 %v155
    %v359 = vunpack.c.l.b16 %v156
    %v360 = vunpack.c.l.b16 %v157
    %v361 = vunpack.c.l.b16 %v158
    %v362 = vunpack.c.l.b16 %v159
    %v363 = vunpack.c.l.b16 %v160
    %v364 = vunpack.c.l.b16 %v161
    %v365 = vunpack.c.l.b16 %v162
    %v366 = vunpack.c.l.b16 %v163
    %v367 = vunpack.c.l.b16 %v164
    %v368 = vunpack.c.l.b16 %v165
    %v369 = vunpack.c.l.b16 %v166
    %v370 = vunpack.c.l.b16 %v167
    %v371 = vunpack.c.l.b16 %v168
    %v372 = vunpack.c.l.b16 %v169
    %v373 = vunpack.c.l.b16 %v170
    %v374 = vunpack.c.l.b16 %v171
    %v375 = vunpack.c.l.b16 %v172
    %v376 = vunpack.c.l.b16 %v173
    %v377 = vunpack.c.l.b16 %v174
    %v378 = vunpack.c.l.b16 %v175
    %v379 = vunpack.c.l.b16 %v176
    %v380 = vunpack.c.l.b16 %v177
    %v381 = vunpack.c.l.b16 %v178
    %v382 = vunpack.c.l.b16 %v179
    %v383 = vunpack.c.l.b16 %v180
    %v384 = vunpack.c.l.b16 %v181
    %v385 = vunpack.c.l.b16 %v182
    %v386 = vunpack.c.l.b16 %v183
    %v387 = vunpack.c.l.b16 %v184
    %v388 = vunpack.c.l.b16 %v185
    %v389 = vunpack.c.l.b16 %v186
    %v390 = vunpack.c.l.b16 %v187
    %v391 = vunpack.c.l.b16 %v188
    %v392 = vunpack.c.l.b16 %v189
    %v393 = vunpack.c.l.b16 %v190
    %v394 = vunpack.c.l.b16 %v191
    %v395 = vunpack.c.l.b16 %v192
    %v396 = vunpack.c.l.b16 %v193
    %v397 = vunpack.c.l.b16 %v194
    %v398 = vunpack.c.l.b16 %v195
    %v399 = vunpack.c.l.b16 %v196
    %v400 = vunpack.c.l.b16 %v197
    %v401 = vunpack.c.l.b16 %v198
    %v402 = vunpack.c.l.b16 %v199
    %v403 = vunpack.c.l.b16 %v200
    %v404 = vunpack.c.l.b16 %v201
    %v405 = vunpack.c.l.b16 %v202
    %v406 = vunpack.c.l.b16 %v203
    %v407 = vunpack.c.l.b16 %v204
    %v408 = vunpack.c.l.b16 %v205
    %v409 = vunpack.c.l.b16 %v206
    %v410 = vunpack.c.l.b16 %v207
    %v411 = vunpack.c.l.b16 %v208
    %v412 = vunpack.c.l.b16 %v209
    %v413 = vunpack.c.l.b16 %v210
    %v414 = vunpack.c.l.b16 %v211
    %v415 = vunpack.c.l.b16 %v212
    %v416 = vunpack.c.l.b16 %v213
    %v417 = vunpack.c.l.b16 %v214
    %v418 = vunpack.c.l.b16 %v215
    %v419 = vpack.c.b16 %v322, %v321
    %v420 = vpack.c.b16 %v324, %v323
    %v421 = vpack.c.b16 %v326, %v325
    %v422 = vpack.c.b16 %v328, %v327
    %v423 = vpack.c.b16 %v330, %v329
    %v424 = vpack.c.b16 %v332, %v331
    %v425 = vpack.c.b16 %v334, %v333
    %v426 = vpack.c.b16 %v336, %v335
    %v427 = vpack.c.b16 %v338, %v337
    %v428 = vpack.c.b16 %v340, %v339
    %v429 = vpack.c.b16 %v342, %v341
    %v430 = vpack.c.b16 %v344, %v343
    %v431 = vpack.c.b16 %v346, %v345
    %v432 = vpack.c.b16 %v348, %v347
    %v433 = vpack.c.b16 %v350, %v349
    %v434 = vpack.c.b16 %v352, %v351
    %v435 = vpack.c.b16 %v354, %v353
    %v436 = vpack.c.b16 %v356, %v355
    %v437 = vpack.c.b16 %v358, %v357
    %v438 = vpack.c.b16 %v360, %v359
    %v439 = vpack.c.b16 %v362, %v361
    %v440 = vpack.c.b16 %v364, %v363
    %v441 = vpack.c.b16 %v366, %v365
    %v442 = vpack.c.b16 %v368, %v367
    %v443 = vpack.c.b16 %v370, %v369
    %v444 = vpack.c.b16 %v372, %v371
    %v445 = vpack.c.b16 %v374, %v373
    %v446 = vpack.c.b16 %v376, %v375
    %v447 = vpack.c.b16 %v378, %v377
    %v448 = vpack.c.b16 %v380, %v379
    %v449 = vpack.c.b16 %v382, %v381
    %v450 = vpack.c.b16 %v384, %v383
    %v451 = vpack.c.b16 %v386, %v385
    %v452 = vpack.c.b16 %v388, %v387
    %v453 = vpack.c.b16 %v390, %v389
    %v454 = vpack.c.b16 %v392, %v391
    %v455 = vpack.c.b16 %v394, %v393
    %v456 = vpack.c.b16 %v396, %v395
    %v457 = vpack.c.b16 %v398, %v397
    %v458 = vpack.c.b16 %v400, %v399
    %v459 = vpack.c.b16 %v402, %v401
    %v460 = vpack.c.b16 %v404, %v403
    %v461 = vpack.c.b16 %v406, %v405
    %v462 = vpack.c.b16 %v408, %v407
    %v463 = vpack.c.b16 %v410, %v409
    %v464 = vpack.c.b16 %v412, %v411
    %v465 = vpack.c.b16 %v414, %v413
    %v466 = vpack.c.b16 %v416, %v415
    %v467 = vpack.c.b16 %v418, %v417
    %vm517 = vcmask 130048
    %v519 = vsel %vm517, %v96, 0
    %v522 = vsel %vm517, %v103, 0
    %v525 = vsel %vm517, %v110, 0
    %v528 = vsel %vm517, %v117, 0
    %530 = vmatprep.subr.bf16.mxu0 0
    %531 = vmatpush1.bf16.msra.mxu0 %v426
    %532 = vmatprep.subr.bf16.mxu0 0
    %533 = vmatpush1.bf16.msra.mxu0 %v425
    %534 = vmatprep.subr.bf16.mxu0 0
    %535 = vmatpush1.bf16.msra.mxu0 %v424
    %536 = vmatprep.subr.bf16.mxu0 0
    %537 = vmatpush1.bf16.msra.mxu0 %v423
    %538 = vmatprep.subr.bf16.mxu0 0
    %539 = vmatpush1.bf16.msra.mxu0 %v422
    %540 = vmatprep.subr.bf16.mxu0 0
    %541 = vmatpush1.bf16.msra.mxu0 %v421
    %542 = vmatprep.subr.bf16.mxu0 0
    %543 = vmatpush1.bf16.msra.mxu0 %v420
    %544 = vmatprep.subr.bf16.mxu0 0
    %545 = vmatpush1.bf16.msra.mxu0 %v419
    %546 = vmatprep.subr.bf16.mxu0 0
    %547 = vmatpush2.bf16.msra.mxu0 %v434
    %548 = vmatprep.subr.bf16.mxu0 0
    %549 = vmatpush2.bf16.msra.mxu0 %v433
    %550 = vmatprep.subr.bf16.mxu0 0
    %551 = vmatpush2.bf16.msra.mxu0 %v432
    %552 = vmatprep.subr.bf16.mxu0 0
    %553 = vmatpush2.bf16.msra.mxu0 %v431
    %554 = vmatprep.subr.bf16.mxu0 0
    %555 = vmatpush2.bf16.msra.mxu0 %v430
    %556 = vmatprep.subr.bf16.mxu0 0
    %557 = vmatpush2.bf16.msra.mxu0 %v429
    %558 = vmatprep.subr.bf16.mxu0 0
    %559 = vmatpush2.bf16.msra.mxu0 %v428
    %560 = vmatprep.subr.bf16.mxu0 0
    %561 = vmatpush2.bf16.msra.mxu0 %v427
    %562 = vmatprep.mubr.bf16.mxu0 %v91
    %563 = vmatmul.mubr.bf16.gmra.mxu0 %v90
    %v564 = vpop.f32.mrf.mxu0
    %v565 = vadd.f32 %v221, %v564
    %v566 = vpop.f32.mrf.mxu0
    %v567 = vpop.f32.mrf.mxu0
    %v568 = vadd.f32 %v221, %v567
    %v569 = vpop.f32.mrf.mxu0
    %570 = vmatprep.mubr.bf16.mxu0 %v98
    %571 = vmatmul.mubr.bf16.gmra.mxu0 %v97
    %v572 = vpop.f32.mrf.mxu0
    %v573 = vadd.f32 %v221, %v572
    %v574 = vpop.f32.mrf.mxu0
    %v575 = vpop.f32.mrf.mxu0
    %v576 = vadd.f32 %v221, %v575
    %v577 = vpop.f32.mrf.mxu0
    %578 = vmatprep.mubr.bf16.mxu0 %v105
    %579 = vmatmul.mubr.bf16.gmra.mxu0 %v104
    %v580 = vpop.f32.mrf.mxu0
    %v581 = vadd.f32 %v221, %v580
    %v582 = vpop.f32.mrf.mxu0
    %v583 = vpop.f32.mrf.mxu0
    %v584 = vadd.f32 %v221, %v583
    %v585 = vpop.f32.mrf.mxu0
    %586 = vmatprep.mubr.bf16.mxu0 %v112
    %587 = vmatmul.mubr.bf16.gmra.mxu0 %v111
    %v588 = vpop.f32.mrf.mxu0
    %v589 = vadd.f32 %v221, %v588
    %v590 = vpop.f32.mrf.mxu0
    %v591 = vpop.f32.mrf.mxu0
    %v592 = vadd.f32 %v221, %v591
    %v593 = vpop.f32.mrf.mxu0
    %594 = vdwg.mxu0
    %595 = vmatprep.subr.bf16.mxu0 0
    %596 = vmatpush1.bf16.msra.mxu0 %v442
    %597 = vmatprep.subr.bf16.mxu0 0
    %598 = vmatpush1.bf16.msra.mxu0 %v441
    %599 = vmatprep.subr.bf16.mxu0 0
    %600 = vmatpush1.bf16.msra.mxu0 %v440
    %601 = vmatprep.subr.bf16.mxu0 0
    %602 = vmatpush1.bf16.msra.mxu0 %v439
    %603 = vmatprep.subr.bf16.mxu0 0
    %604 = vmatpush1.bf16.msra.mxu0 %v438
    %605 = vmatprep.subr.bf16.mxu0 0
    %606 = vmatpush1.bf16.msra.mxu0 %v437
    %607 = vmatprep.subr.bf16.mxu0 0
    %608 = vmatpush1.bf16.msra.mxu0 %v436
    %609 = vmatprep.subr.bf16.mxu0 0
    %610 = vmatpush1.bf16.msra.mxu0 %v435
    %611 = vmatprep.subr.bf16.mxu0 0
    %612 = vmatpush2.bf16.msra.mxu0 %v450
    %613 = vmatprep.subr.bf16.mxu0 0
    %614 = vmatpush2.bf16.msra.mxu0 %v449
    %615 = vmatprep.subr.bf16.mxu0 0
    %616 = vmatpush2.bf16.msra.mxu0 %v448
    %617 = vmatprep.subr.bf16.mxu0 0
    %618 = vmatpush2.bf16.msra.mxu0 %v447
    %619 = vmatprep.subr.bf16.mxu0 0
    %620 = vmatpush2.bf16.msra.mxu0 %v446
    %621 = vmatprep.subr.bf16.mxu0 0
    %622 = vmatpush2.bf16.msra.mxu0 %v445
    %623 = vmatprep.subr.bf16.mxu0 0
    %624 = vmatpush2.bf16.msra.mxu0 %v444
    %625 = vmatprep.subr.bf16.mxu0 0
    %626 = vmatpush2.bf16.msra.mxu0 %v443
    %627 = vmatprep.mubr.bf16.mxu0 %v93
    %628 = vmatmul.mubr.bf16.gmra.mxu0 %v92
    %v629 = vpop.f32.mrf.mxu0
    %v630 = vadd.f32 %v565, %v629
    %v631 = vpop.f32.mrf.mxu0
    %v632 = vpop.f32.mrf.mxu0
    %v633 = vadd.f32 %v568, %v632
    %v634 = vpop.f32.mrf.mxu0
    %635 = vmatprep.mubr.bf16.mxu0 %v100
    %636 = vmatmul.mubr.bf16.gmra.mxu0 %v99
    %v637 = vpop.f32.mrf.mxu0
    %v638 = vadd.f32 %v573, %v637
    %v639 = vpop.f32.mrf.mxu0
    %v640 = vpop.f32.mrf.mxu0
    %v641 = vadd.f32 %v576, %v640
    %v642 = vpop.f32.mrf.mxu0
    %643 = vmatprep.mubr.bf16.mxu0 %v107
    %644 = vmatmul.mubr.bf16.gmra.mxu0 %v106
    %v645 = vpop.f32.mrf.mxu0
    %v646 = vadd.f32 %v581, %v645
    %v647 = vpop.f32.mrf.mxu0
    %v648 = vpop.f32.mrf.mxu0
    %v649 = vadd.f32 %v584, %v648
    %v650 = vpop.f32.mrf.mxu0
    %651 = vmatprep.mubr.bf16.mxu0 %v114
    %652 = vmatmul.mubr.bf16.gmra.mxu0 %v113
    %v653 = vpop.f32.mrf.mxu0
    %v654 = vadd.f32 %v589, %v653
    %v655 = vpop.f32.mrf.mxu0
    %v656 = vpop.f32.mrf.mxu0
    %v657 = vadd.f32 %v592, %v656
    %v658 = vpop.f32.mrf.mxu0
    %659 = vdwg.mxu0
    %660 = vmatprep.subr.bf16.mxu0 0
    %661 = vmatpush1.bf16.msra.mxu0 %v458
    %662 = vmatprep.subr.bf16.mxu0 0
    %663 = vmatpush1.bf16.msra.mxu0 %v457
    %664 = vmatprep.subr.bf16.mxu0 0
    %665 = vmatpush1.bf16.msra.mxu0 %v456
    %666 = vmatprep.subr.bf16.mxu0 0
    %667 = vmatpush1.bf16.msra.mxu0 %v455
    %668 = vmatprep.subr.bf16.mxu0 0
    %669 = vmatpush1.bf16.msra.mxu0 %v454
    %670 = vmatprep.subr.bf16.mxu0 0
    %671 = vmatpush1.bf16.msra.mxu0 %v453
    %672 = vmatprep.subr.bf16.mxu0 0
    %673 = vmatpush1.bf16.msra.mxu0 %v452
    %674 = vmatprep.subr.bf16.mxu0 0
    %675 = vmatpush1.bf16.msra.mxu0 %v451
    %676 = vmatprep.subr.bf16.mxu0 0
    %677 = vmatpush2.bf16.msra.mxu0 %v466
    %678 = vmatprep.subr.bf16.mxu0 0
    %679 = vmatpush2.bf16.msra.mxu0 %v465
    %680 = vmatprep.subr.bf16.mxu0 0
    %681 = vmatpush2.bf16.msra.mxu0 %v464
    %682 = vmatprep.subr.bf16.mxu0 0
    %683 = vmatpush2.bf16.msra.mxu0 %v463
    %684 = vmatprep.subr.bf16.mxu0 0
    %685 = vmatpush2.bf16.msra.mxu0 %v462
    %686 = vmatprep.subr.bf16.mxu0 0
    %687 = vmatpush2.bf16.msra.mxu0 %v461
    %688 = vmatprep.subr.bf16.mxu0 0
    %689 = vmatpush2.bf16.msra.mxu0 %v460
    %690 = vmatprep.subr.bf16.mxu0 0
    %691 = vmatpush2.bf16.msra.mxu0 %v459
    %692 = vmatprep.mubr.bf16.mxu0 %v95
    %693 = vmatmul.mubr.bf16.gmra.mxu0 %v94
    %v694 = vpop.f32.mrf.mxu0
    %v695 = vadd.f32 %v630, %v694
    %v696 = vpop.f32.mrf.mxu0
    %v697 = vpop.f32.mrf.mxu0
    %v698 = vadd.f32 %v633, %v697
    %v699 = vpop.f32.mrf.mxu0
    %700 = vmatprep.mubr.bf16.mxu0 %v102
    %701 = vmatmul.mubr.bf16.gmra.mxu0 %v101
    %v702 = vpop.f32.mrf.mxu0
    %v703 = vadd.f32 %v638, %v702
    %v704 = vpop.f32.mrf.mxu0
    %v705 = vpop.f32.mrf.mxu0
    %v706 = vadd.f32 %v641, %v705
    %v707 = vpop.f32.mrf.mxu0
    %708 = vmatprep.mubr.bf16.mxu0 %v109
    %709 = vmatmul.mubr.bf16.gmra.mxu0 %v108
    %v710 = vpop.f32.mrf.mxu0
    %v711 = vadd.f32 %v646, %v710
    %v712 = vpop.f32.mrf.mxu0
    %v713 = vpop.f32.mrf.mxu0
    %v714 = vadd.f32 %v649, %v713
    %v715 = vpop.f32.mrf.mxu0
    %716 = vmatprep.mubr.bf16.mxu0 %v116
    %717 = vmatmul.mubr.bf16.gmra.mxu0 %v115
    %v718 = vpop.f32.mrf.mxu0
    %v719 = vadd.f32 %v654, %v718
    %v720 = vpop.f32.mrf.mxu0
    %v721 = vpop.f32.mrf.mxu0
    %v722 = vadd.f32 %v657, %v721
    %v723 = vpop.f32.mrf.mxu0
    %724 = vdwg.mxu0
    %725 = vmatprep.subr.bf16.mxu0 0
    %726 = vmatpush1.bf16.msra.mxu0 0
    %727 = vmatprep.subr.bf16.mxu0 0
    %728 = vmatpush1.bf16.msra.mxu0 0
    %729 = vmatprep.subr.bf16.mxu0 0
    %730 = vmatpush1.bf16.msra.mxu0 0
    %731 = vmatprep.subr.bf16.mxu0 0
    %732 = vmatpush1.bf16.msra.mxu0 0
    %733 = vmatprep.subr.bf16.mxu0 0
    %734 = vmatpush1.bf16.msra.mxu0 0
    %735 = vmatprep.subr.bf16.mxu0 0
    %736 = vmatpush1.bf16.msra.mxu0 0
    %737 = vmatprep.subr.bf16.mxu0 0
    %738 = vmatpush1.bf16.msra.mxu0 0
    %739 = vmatprep.subr.bf16.mxu0 0
    %740 = vmatpush1.bf16.msra.mxu0 %v467
    %741 = vmatprep.subr.bf16.mxu0 0
    %742 = vmatpush2.bf16.msra.mxu0 0
    %743 = vmatprep.subr.bf16.mxu0 0
    %744 = vmatpush2.bf16.msra.mxu0 0
    %745 = vmatprep.subr.bf16.mxu0 0
    %746 = vmatpush2.bf16.msra.mxu0 0
    %747 = vmatprep.subr.bf16.mxu0 0
    %748 = vmatpush2.bf16.msra.mxu0 0
    %749 = vmatprep.subr.bf16.mxu0 0
    %750 = vmatpush2.bf16.msra.mxu0 0
    %751 = vmatprep.subr.bf16.mxu0 0
    %752 = vmatpush2.bf16.msra.mxu0 0
    %753 = vmatprep.subr.bf16.mxu0 0
    %754 = vmatpush2.bf16.msra.mxu0 0
    %755 = vmatprep.subr.bf16.mxu0 0
    %756 = vmatpush2.bf16.msra.mxu0 0
    %757 = vmatprep.mubr.bf16.mxu0 0
    %758 = vmatmul.mubr.bf16.gmra.mxu0 %v519
    %v759 = vpop.f32.mrf.mxu0
    %v760 = vadd.f32 %v695, %v759
    %v761 = vpop.f32.mrf.mxu0
    %v762 = vpop.f32.mrf.mxu0
    %v763 = vadd.f32 %v698, %v762
    %v764 = vpop.f32.mrf.mxu0
    %765 = vmatprep.mubr.bf16.mxu0 0
    %766 = vmatmul.mubr.bf16.gmra.mxu0 %v522
    %v767 = vpop.f32.mrf.mxu0
    %v768 = vadd.f32 %v703, %v767
    %v769 = vpop.f32.mrf.mxu0
    %v770 = vpop.f32.mrf.mxu0
    %v771 = vadd.f32 %v706, %v770
    %v772 = vpop.f32.mrf.mxu0
    %773 = vmatprep.mubr.bf16.mxu0 0
    %774 = vmatmul.mubr.bf16.gmra.mxu0 %v525
    %v775 = vpop.f32.mrf.mxu0
    %v776 = vadd.f32 %v711, %v775
    %v777 = vpop.f32.mrf.mxu0
    %v778 = vpop.f32.mrf.mxu0
    %v779 = vadd.f32 %v714, %v778
    %v780 = vpop.f32.mrf.mxu0
    %781 = vmatprep.mubr.bf16.mxu0 0
    %782 = vmatmul.mubr.bf16.gmra.mxu0 %v528
    %v783 = vpop.f32.mrf.mxu0
    %v784 = vadd.f32 %v719, %v783
    %v785 = vpop.f32.mrf.mxu0
    %v786 = vpop.f32.mrf.mxu0
    %v787 = vadd.f32 %v722, %v786
    %v788 = vpop.f32.mrf.mxu0
    %789 = vdwg.mxu0
    %v790 = vmax.f32 %v760, 0.0
    %v791 = vmax.f32 %v763, 0.0
    %v792 = vmax.f32 %v768, 0.0
    %v793 = vmax.f32 %v771, 0.0
    %v794 = vmax.f32 %v776, 0.0
    %v795 = vmax.f32 %v779, 0.0
    %v796 = vmax.f32 %v784, 0.0
    %v797 = vmax.f32 %v787, 0.0
    %v798 = vpack.c.bf16 %v791, %v790
    %v799 = vpack.c.bf16 %v793, %v792
    %v800 = vpack.c.bf16 %v795, %v794
    %v801 = vpack.c.bf16 %v797, %v796
    %v802 = vld [vmem:[%s3] sm:$0xf]
    %v803 = vld [vmem:[%s3 + $0x4] sm:$0xf]
    %v804 = vld [vmem:[%s3 + $0x8] sm:$0xf]
    %v805 = vld [vmem:[%s3 + $0xc] sm:$0xf]
    %v806 = vld [vmem:[%s3 + $0x10] sm:$0xf]
    %v807 = vld [vmem:[%s3 + $0x14] sm:$0xf]
    %v808 = vld [vmem:[%s3 + $0x18] sm:$0xf]
    %v809 = vld [vmem:[%s3 + $0x1c] sm:$0xf]
    %v810 = vld [vmem:[%s3 + $0x20] sm:$0xf]
    %v811 = vld [vmem:[%s3 + $0x24] sm:$0xf]
    %v812 = vld [vmem:[%s3 + $0x28] sm:$0xf]
    %v813 = vld [vmem:[%s3 + $0x2c] sm:$0xf]
    %v814 = vld [vmem:[%s3 + $0x30] sm:$0xf]
    %v815 = vld [vmem:[%s3 + $0x34] sm:$0xf]
    %v816 = vld [vmem:[%s3 + $0x38] sm:$0xf]
    %v817 = vld [vmem:[%s3 + $0x3c] sm:$0xf]
    %v818 = vld [vmem:[%s4] sm:$0x1]
    %v820 = vlaneseq
    %v821 = vshrl.u32 %v820, 7
    %v822 = vsub.s32 0, %v821
    %v823 = vrot.slane %v818, %v822
    %v841 = vunpack.c.l.b16 %v802
    %v842 = vunpack.c.l.b16 %v803
    %v843 = vunpack.c.l.b16 %v804
    %v844 = vunpack.c.l.b16 %v805
    %v845 = vunpack.c.l.b16 %v806
    %v846 = vunpack.c.l.b16 %v807
    %v847 = vunpack.c.l.b16 %v808
    %v848 = vunpack.c.l.b16 %v809
    %v849 = vunpack.c.l.b16 %v810
    %v850 = vunpack.c.l.b16 %v811
    %v851 = vunpack.c.l.b16 %v812
    %v852 = vunpack.c.l.b16 %v813
    %v853 = vunpack.c.l.b16 %v814
    %v854 = vunpack.c.l.b16 %v815
    %v855 = vunpack.c.l.b16 %v816
    %v856 = vunpack.c.l.b16 %v817
    %v857 = vpack.c.b16 %v842, %v841
    %v858 = vpack.c.b16 %v844, %v843
    %v859 = vpack.c.b16 %v846, %v845
    %v860 = vpack.c.b16 %v848, %v847
    %v861 = vpack.c.b16 %v850, %v849
    %v862 = vpack.c.b16 %v852, %v851
    %v863 = vpack.c.b16 %v854, %v853
    %v864 = vpack.c.b16 %v856, %v855
    %873 = vmatprep.subr.bf16.mxu0 0
    %874 = vmatpush1.bf16.msra.mxu0 %v864
    %875 = vmatprep.subr.bf16.mxu0 0
    %876 = vmatpush1.bf16.msra.mxu0 %v863
    %877 = vmatprep.subr.bf16.mxu0 0
    %878 = vmatpush1.bf16.msra.mxu0 %v862
    %879 = vmatprep.subr.bf16.mxu0 0
    %880 = vmatpush1.bf16.msra.mxu0 %v861
    %881 = vmatprep.subr.bf16.mxu0 0
    %882 = vmatpush1.bf16.msra.mxu0 %v860
    %883 = vmatprep.subr.bf16.mxu0 0
    %884 = vmatpush1.bf16.msra.mxu0 %v859
    %885 = vmatprep.subr.bf16.mxu0 0
    %886 = vmatpush1.bf16.msra.mxu0 %v858
    %887 = vmatprep.subr.bf16.mxu0 0
    %888 = vmatpush1.bf16.msra.mxu0 %v857
    %889 = vmatprep.subr.bf16.mxu0 0
    %890 = vmatpush2.bf16.msra.mxu0 0
    %891 = vmatprep.subr.bf16.mxu0 0
    %892 = vmatpush2.bf16.msra.mxu0 0
    %893 = vmatprep.subr.bf16.mxu0 0
    %894 = vmatpush2.bf16.msra.mxu0 0
    %895 = vmatprep.subr.bf16.mxu0 0
    %896 = vmatpush2.bf16.msra.mxu0 0
    %897 = vmatprep.subr.bf16.mxu0 0
    %898 = vmatpush2.bf16.msra.mxu0 0
    %899 = vmatprep.subr.bf16.mxu0 0
    %900 = vmatpush2.bf16.msra.mxu0 0
    %901 = vmatprep.subr.bf16.mxu0 0
    %902 = vmatpush2.bf16.msra.mxu0 0
    %903 = vmatprep.subr.bf16.mxu0 0
    %904 = vmatpush2.bf16.msra.mxu0 0
    %905 = vmatprep.mubr.bf16.mxu0 0
    %906 = vmatmul.mubr.bf16.gmra.mxu0 %v798
    %v907 = vpop.f32.mrf.mxu0
    %v908 = vadd.f32 %v823, %v907
    %v909 = vpop.f32.mrf.mxu0
    %v910 = vpop.f32.mrf.mxu0
    %v911 = vadd.f32 %v823, %v910
    %v912 = vpop.f32.mrf.mxu0
    %913 = vmatprep.mubr.bf16.mxu0 0
    %914 = vmatmul.mubr.bf16.gmra.mxu0 %v799
    %v915 = vpop.f32.mrf.mxu0
    %v916 = vadd.f32 %v823, %v915
    %v917 = vpop.f32.mrf.mxu0
    %v918 = vpop.f32.mrf.mxu0
    %v919 = vadd.f32 %v823, %v918
    %v920 = vpop.f32.mrf.mxu0
    %921 = vmatprep.mubr.bf16.mxu0 0
    %922 = vmatmul.mubr.bf16.gmra.mxu0 %v800
    %v923 = vpop.f32.mrf.mxu0
    %v924 = vadd.f32 %v823, %v923
    %v925 = vpop.f32.mrf.mxu0
    %v926 = vpop.f32.mrf.mxu0
    %v927 = vadd.f32 %v823, %v926
    %v928 = vpop.f32.mrf.mxu0
    %929 = vmatprep.mubr.bf16.mxu0 0
    %930 = vmatmul.mubr.bf16.gmra.mxu0 %v801
    %v931 = vpop.f32.mrf.mxu0
    %v932 = vadd.f32 %v823, %v931
    %v933 = vpop.f32.mrf.mxu0
    %v934 = vpop.f32.mrf.mxu0
    %v935 = vadd.f32 %v823, %v934
    %v936 = vpop.f32.mrf.mxu0
    %937 = vdwg.mxu0
    %v938 = vmax.f32 %v908, 0.0
    %v939 = vmax.f32 %v911, 0.0
    %v940 = vmax.f32 %v916, 0.0
    %v941 = vmax.f32 %v919, 0.0
    %v942 = vmax.f32 %v924, 0.0
    %v943 = vmax.f32 %v927, 0.0
    %v944 = vmax.f32 %v932, 0.0
    %v945 = vmax.f32 %v935, 0.0
    %v946 = vpack.c.bf16 %v939, %v938
    %v947 = vpack.c.bf16 %v941, %v940
    %v948 = vpack.c.bf16 %v943, %v942
    %v949 = vpack.c.bf16 %v945, %v944
    %v950 = vld [vmem:[%s5] sm:$0xf]
    %v951 = vld [vmem:[%s5 + $0x4] sm:$0xf]
    %v952 = vld [vmem:[%s5 + $0x8] sm:$0xf]
    %v953 = vld [vmem:[%s5 + $0xc] sm:$0xf]
    %v954 = vld [vmem:[%s6] sm:$0x1]
    %v956 = vlaneseq
    %v957 = vshrl.u32 %v956, 7
    %v958 = vsub.s32 0, %v957
    %v959 = vrot.slane %v954, %v958
    %v965 = vunpack.c.l.b16 %v950
    %v966 = vunpack.c.l.b16 %v951
    %v967 = vunpack.c.l.b16 %v952
    %v968 = vunpack.c.l.b16 %v953
    %v969 = vpack.c.b16 %v966, %v965
    %v970 = vpack.c.b16 %v968, %v967
    %vm973 = vcmask 261120
    %v975 = vsel %vm973, %v946, 0
    %v978 = vsel %vm973, %v947, 0
    %v981 = vsel %vm973, %v948, 0
    %v984 = vsel %vm973, %v949, 0
    %986 = vmatprep.subr.bf16.mxu0 0
    %987 = vmatpush1.bf16.msra.mxu0 0
    %988 = vmatprep.subr.bf16.mxu0 0
    %989 = vmatpush1.bf16.msra.mxu0 0
    %990 = vmatprep.subr.bf16.mxu0 0
    %991 = vmatpush1.bf16.msra.mxu0 0
    %992 = vmatprep.subr.bf16.mxu0 0
    %993 = vmatpush1.bf16.msra.mxu0 0
    %994 = vmatprep.subr.bf16.mxu0 0
    %995 = vmatpush1.bf16.msra.mxu0 0
    %996 = vmatprep.subr.bf16.mxu0 0
    %997 = vmatpush1.bf16.msra.mxu0 0
    %998 = vmatprep.subr.bf16.mxu0 0
    %999 = vmatpush1.bf16.msra.mxu0 %v970
    %1000 = vmatprep.subr.bf16.mxu0 0
    %1001 = vmatpush1.bf16.msra.mxu0 %v969
    %1002 = vmatprep.subr.bf16.mxu0 0
    %1003 = vmatpush2.bf16.msra.mxu0 0
    %1004 = vmatprep.subr.bf16.mxu0 0
    %1005 = vmatpush2.bf16.msra.mxu0 0
    %1006 = vmatprep.subr.bf16.mxu0 0
    %1007 = vmatpush2.bf16.msra.mxu0 0
    %1008 = vmatprep.subr.bf16.mxu0 0
    %1009 = vmatpush2.bf16.msra.mxu0 0
    %1010 = vmatprep.subr.bf16.mxu0 0
    %1011 = vmatpush2.bf16.msra.mxu0 0
    %1012 = vmatprep.subr.bf16.mxu0 0
    %1013 = vmatpush2.bf16.msra.mxu0 0
    %1014 = vmatprep.subr.bf16.mxu0 0
    %1015 = vmatpush2.bf16.msra.mxu0 0
    %1016 = vmatprep.subr.bf16.mxu0 0
    %1017 = vmatpush2.bf16.msra.mxu0 0
    %1018 = vmatprep.mubr.bf16.mxu0 0
    %1019 = vmatmul.mubr.bf16.gmra.mxu0 %v975
    %v1020 = vpop.f32.mrf.mxu0
    %v1021 = vadd.f32 %v959, %v1020
    %v1022 = vpop.f32.mrf.mxu0
    %v1023 = vpop.f32.mrf.mxu0
    %v1024 = vadd.f32 %v959, %v1023
    %v1025 = vpop.f32.mrf.mxu0
    %1026 = vmatprep.mubr.bf16.mxu0 0
    %1027 = vmatmul.mubr.bf16.gmra.mxu0 %v978
    %v1028 = vpop.f32.mrf.mxu0
    %v1029 = vadd.f32 %v959, %v1028
    %v1030 = vpop.f32.mrf.mxu0
    %v1031 = vpop.f32.mrf.mxu0
    %v1032 = vadd.f32 %v959, %v1031
    %v1033 = vpop.f32.mrf.mxu0
    %1034 = vmatprep.mubr.bf16.mxu0 0
    %1035 = vmatmul.mubr.bf16.gmra.mxu0 %v981
    %v1036 = vpop.f32.mrf.mxu0
    %v1037 = vadd.f32 %v959, %v1036
    %v1038 = vpop.f32.mrf.mxu0
    %v1039 = vpop.f32.mrf.mxu0
    %v1040 = vadd.f32 %v959, %v1039
    %v1041 = vpop.f32.mrf.mxu0
    %1042 = vmatprep.mubr.bf16.mxu0 0
    %1043 = vmatmul.mubr.bf16.gmra.mxu0 %v984
    %v1044 = vpop.f32.mrf.mxu0
    %v1045 = vadd.f32 %v959, %v1044
    %v1046 = vpop.f32.mrf.mxu0
    %v1047 = vpop.f32.mrf.mxu0
    %v1048 = vadd.f32 %v959, %v1047
    %v1049 = vpop.f32.mrf.mxu0
    %1050 = vdwg.mxu0
    %v1051 = vmax.f32 %v1021, 0.0
    %v1052 = vmax.f32 %v1024, 0.0
    %v1053 = vmax.f32 %v1029, 0.0
    %v1054 = vmax.f32 %v1032, 0.0
    %v1055 = vmax.f32 %v1037, 0.0
    %v1056 = vmax.f32 %v1040, 0.0
    %v1057 = vmax.f32 %v1045, 0.0
    %v1058 = vmax.f32 %v1048, 0.0
    %v1059 = vpack.c.bf16 %v1052, %v1051
    %v1060 = vpack.c.bf16 %v1054, %v1053
    %v1061 = vpack.c.bf16 %v1056, %v1055
    %v1062 = vpack.c.bf16 %v1058, %v1057
    %v1063 = vld [vmem:[%s7] sm:$0xff]
    %v1064 = vld [vmem:[%s7 + $0x8] sm:$0xff]
    %v1065 = vld [vmem:[%s7 + $0x10] sm:$0xff]
    %v1066 = vld [vmem:[%s7 + $0x18] sm:$0xf]
    %v1067 = vld [vmem:[%s7 + $0x1c] sm:$0xff]
    %v1068 = vld [vmem:[%s7 + $0x24] sm:$0xff]
    %v1069 = vld [vmem:[%s7 + $0x2c] sm:$0xff]
    %v1070 = vld [vmem:[%s7 + $0x34] sm:$0xf]
    %v1071 = vld [vmem:[%s7 + $0x38] sm:$0xff]
    %v1072 = vld [vmem:[%s7 + $0x40] sm:$0xff]
    %v1073 = vld [vmem:[%s7 + $0x48] sm:$0xff]
    %v1074 = vld [vmem:[%s7 + $0x50] sm:$0xf]
    %v1075 = vld [vmem:[%s7 + $0x54] sm:$0xff]
    %v1076 = vld [vmem:[%s7 + $0x5c] sm:$0xff]
    %v1077 = vld [vmem:[%s7 + $0x64] sm:$0xff]
    %v1078 = vld [vmem:[%s7 + $0x6c] sm:$0xf]
    %v1079 = vld [vmem:[%s7 + $0x70] sm:$0xff]
    %v1080 = vld [vmem:[%s7 + $0x78] sm:$0xff]
    %v1081 = vld [vmem:[%s7 + $0x80] sm:$0xff]
    %v1082 = vld [vmem:[%s7 + $0x88] sm:$0xf]
    %v1083 = vld [vmem:[%s7 + $0x8c] sm:$0xff]
    %v1084 = vld [vmem:[%s7 + $0x94] sm:$0xff]
    %v1085 = vld [vmem:[%s7 + $0x9c] sm:$0xff]
    %v1086 = vld [vmem:[%s7 + $0xa4] sm:$0xf]
    %v1087 = vld [vmem:[%s7 + $0xa8] sm:$0xff]
    %v1088 = vld [vmem:[%s7 + $0xb0] sm:$0xff]
    %v1089 = vld [vmem:[%s7 + $0xb8] sm:$0xff]
    %v1090 = vld [vmem:[%s7 + $0xc0] sm:$0xf]
    %v1091 = vld [vmem:[%s7 + $0xc4] sm:$0xff]
    %v1092 = vld [vmem:[%s7 + $0xcc] sm:$0xff]
    %v1093 = vld [vmem:[%s7 + $0xd4] sm:$0xff]
    %v1094 = vld [vmem:[%s7 + $0xdc] sm:$0xf]
    %v1095 = vld [vmem:[%s7 + $0xe0] sm:$0xff]
    %v1096 = vld [vmem:[%s7 + $0xe8] sm:$0xff]
    %v1097 = vld [vmem:[%s7 + $0xf0] sm:$0xff]
    %v1098 = vld [vmem:[%s7 + $0xf8] sm:$0xf]
    %v1099 = vld [vmem:[%s7 + $0xfc] sm:$0xff]
    %v1100 = vld [vmem:[%s7 + $0x104] sm:$0xff]
    %v1101 = vld [vmem:[%s7 + $0x10c] sm:$0xff]
    %v1102 = vld [vmem:[%s7 + $0x114] sm:$0xf]
    %v1103 = vld [vmem:[%s7 + $0x118] sm:$0xff]
    %v1104 = vld [vmem:[%s7 + $0x120] sm:$0xff]
    %v1105 = vld [vmem:[%s7 + $0x128] sm:$0xff]
    %v1106 = vld [vmem:[%s7 + $0x130] sm:$0xf]
    %v1107 = vld [vmem:[%s7 + $0x134] sm:$0xff]
    %v1108 = vld [vmem:[%s7 + $0x13c] sm:$0xff]
    %v1109 = vld [vmem:[%s7 + $0x144] sm:$0xff]
    %v1110 = vld [vmem:[%s7 + $0x14c] sm:$0xf]
    %v1111 = vld [vmem:[%s7 + $0x150] sm:$0xff]
    %v1112 = vld [vmem:[%s7 + $0x158] sm:$0xff]
    %v1113 = vld [vmem:[%s7 + $0x160] sm:$0xff]
    %v1114 = vld [vmem:[%s7 + $0x168] sm:$0xf]
    %v1115 = vld [vmem:[%s7 + $0x16c] sm:$0xff]
    %v1116 = vld [vmem:[%s7 + $0x174] sm:$0xff]
    %v1117 = vld [vmem:[%s7 + $0x17c] sm:$0xff]
    %v1118 = vld [vmem:[%s7 + $0x184] sm:$0xf]
    %v1119 = vld [vmem:[%s7 + $0x188] sm:$0xff]
    %v1120 = vld [vmem:[%s7 + $0x190] sm:$0xff]
    %v1121 = vld [vmem:[%s7 + $0x198] sm:$0xff]
    %v1122 = vld [vmem:[%s7 + $0x1a0] sm:$0xf]
    %v1123 = vld [vmem:[%s7 + $0x1a4] sm:$0xff]
    %v1124 = vld [vmem:[%s7 + $0x1ac] sm:$0xff]
    %v1125 = vld [vmem:[%s7 + $0x1b4] sm:$0xff]
    %v1126 = vld [vmem:[%s7 + $0x1bc] sm:$0xf]
    %v1127 = vld [vmem:[%s8] sm:$0x7f]
    %v1129 = vlaneseq
    %v1130 = vshrl.u32 %v1129, 7
    %v1131 = vsub.s32 0, %v1130
    %v1132 = vrot.slane %v1127, %v1131
    %v1133 = vlaneseq
    %v1134 = vshrl.u32 %v1133, 7
    %v1135 = vsub.s32 1, %v1134
    %v1136 = vrot.slane %v1127, %v1135
    %v1137 = vlaneseq
    %v1138 = vshrl.u32 %v1137, 7
    %v1139 = vsub.s32 2, %v1138
    %v1140 = vrot.slane %v1127, %v1139
    %v1141 = vlaneseq
    %v1142 = vshrl.u32 %v1141, 7
    %v1143 = vsub.s32 3, %v1142
    %v1144 = vrot.slane %v1127, %v1143
    %v1145 = vlaneseq
    %v1146 = vshrl.u32 %v1145, 7
    %v1147 = vsub.s32 4, %v1146
    %v1148 = vrot.slane %v1127, %v1147
    %v1149 = vlaneseq
    %v1150 = vshrl.u32 %v1149, 7
    %v1151 = vsub.s32 5, %v1150
    %v1152 = vrot.slane %v1127, %v1151
    %v1153 = vlaneseq
    %v1154 = vshrl.u32 %v1153, 7
    %v1155 = vsub.s32 6, %v1154
    %v1156 = vrot.slane %v1127, %v1155
    %v1228 = vunpack.c.l.b16 %v1063
    %v1229 = vunpack.c.h.b16 %v1063
    %v1230 = vunpack.c.l.b16 %v1064
    %v1231 = vunpack.c.h.b16 %v1064
    %v1232 = vunpack.c.l.b16 %v1065
    %v1233 = vunpack.c.h.b16 %v1065
    %v1234 = vunpack.c.l.b16 %v1066
    %v1235 = vunpack.c.l.b16 %v1067
    %v1236 = vunpack.c.h.b16 %v1067
    %v1237 = vunpack.c.l.b16 %v1068
    %v1238 = vunpack.c.h.b16 %v1068
    %v1239 = vunpack.c.l.b16 %v1069
    %v1240 = vunpack.c.h.b16 %v1069
    %v1241 = vunpack.c.l.b16 %v1070
    %v1242 = vunpack.c.l.b16 %v1071
    %v1243 = vunpack.c.h.b16 %v1071
    %v1244 = vunpack.c.l.b16 %v1072
    %v1245 = vunpack.c.h.b16 %v1072
    %v1246 = vunpack.c.l.b16 %v1073
    %v1247 = vunpack.c.h.b16 %v1073
    %v1248 = vunpack.c.l.b16 %v1074
    %v1249 = vunpack.c.l.b16 %v1075
    %v1250 = vunpack.c.h.b16 %v1075
    %v1251 = vunpack.c.l.b16 %v1076
    %v1252 = vunpack.c.h.b16 %v1076
    %v1253 = vunpack.c.l.b16 %v1077
    %v1254 = vunpack.c.h.b16 %v1077
    %v1255 = vunpack.c.l.b16 %v1078
    %v1256 = vunpack.c.l.b16 %v1079
    %v1257 = vunpack.c.h.b16 %v1079
    %v1258 = vunpack.c.l.b16 %v1080
    %v1259 = vunpack.c.h.b16 %v1080
    %v1260 = vunpack.c.l.b16 %v1081
    %v1261 = vunpack.c.h.b16 %v1081
    %v1262 = vunpack.c.l.b16 %v1082
    %v1263 = vunpack.c.l.b16 %v1083
    %v1264 = vunpack.c.h.b16 %v1083
    %v1265 = vunpack.c.l.b16 %v1084
    %v1266 = vunpack.c.h.b16 %v1084
    %v1267 = vunpack.c.l.b16 %v1085
    %v1268 = vunpack.c.h.b16 %v1085
    %v1269 = vunpack.c.l.b16 %v1086
    %v1270 = vunpack.c.l.b16 %v1087
    %v1271 = vunpack.c.h.b16 %v1087
    %v1272 = vunpack.c.l.b16 %v1088
    %v1273 = vunpack.c.h.b16 %v1088
    %v1274 = vunpack.c.l.b16 %v1089
    %v1275 = vunpack.c.h.b16 %v1089
    %v1276 = vunpack.c.l.b16 %v1090
    %v1277 = vunpack.c.l.b16 %v1091
    %v1278 = vunpack.c.h.b16 %v1091
    %v1279 = vunpack.c.l.b16 %v1092
    %v1280 = vunpack.c.h.b16 %v1092
    %v1281 = vunpack.c.l.b16 %v1093
    %v1282 = vunpack.c.h.b16 %v1093
    %v1283 = vunpack.c.l.b16 %v1094
    %v1284 = vunpack.c.l.b16 %v1095
    %v1285 = vunpack.c.h.b16 %v1095
    %v1286 = vunpack.c.l.b16 %v1096
    %v1287 = vunpack.c.h.b16 %v1096
    %v1288 = vunpack.c.l.b16 %v1097
    %v1289 = vunpack.c.h.b16 %v1097
    %v1290 = vunpack.c.l.b16 %v1098
    %v1291 = vunpack.c.l.b16 %v1099
    %v1292 = vunpack.c.h.b16 %v1099
    %v1293 = vunpack.c.l.b16 %v1100
    %v1294 = vunpack.c.h.b16 %v1100
    %v1295 = vunpack.c.l.b16 %v1101
    %v1296 = vunpack.c.h.b16 %v1101
    %v1297 = vunpack.c.l.b16 %v1102
    %v1298 = vunpack.c.l.b16 %v1103
    %v1299 = vunpack.c.h.b16 %v1103
    %v1300 = vunpack.c.l.b16 %v1104
    %v1301 = vunpack.c.h.b16 %v1104
    %v1302 = vunpack.c.l.b16 %v1105
    %v1303 = vunpack.c.h.b16 %v1105
    %v1304 = vunpack.c.l.b16 %v1106
    %v1305 = vunpack.c.l.b16 %v1107
    %v1306 = vunpack.c.h.b16 %v1107
    %v1307 = vunpack.c.l.b16 %v1108
    %v1308 = vunpack.c.h.b16 %v1108
    %v1309 = vunpack.c.l.b16 %v1109
    %v1310 = vunpack.c.h.b16 %v1109
    %v1311 = vunpack.c.l.b16 %v1110
    %v1312 = vunpack.c.l.b16 %v1111
    %v1313 = vunpack.c.h.b16 %v1111
    %v1314 = vunpack.c.l.b16 %v1112
    %v1315 = vunpack.c.h.b16 %v1112
    %v1316 = vunpack.c.l.b16 %v1113
    %v1317 = vunpack.c.h.b16 %v1113
    %v1318 = vunpack.c.l.b16 %v1114
    %v1319 = vunpack.c.l.b16 %v1115
    %v1320 = vunpack.c.h.b16 %v1115
    %v1321 = vunpack.c.l.b16 %v1116
    %v1322 = vunpack.c.h.b16 %v1116
    %v1323 = vunpack.c.l.b16 %v1117
    %v1324 = vunpack.c.h.b16 %v1117
    %v1325 = vunpack.c.l.b16 %v1118
    %v1326 = vunpack.c.l.b16 %v1119
    %v1327 = vunpack.c.h.b16 %v1119
    %v1328 = vunpack.c.l.b16 %v1120
    %v1329 = vunpack.c.h.b16 %v1120
    %v1330 = vunpack.c.l.b16 %v1121
    %v1331 = vunpack.c.h.b16 %v1121
    %v1332 = vunpack.c.l.b16 %v1122
    %v1333 = vunpack.c.l.b16 %v1123
    %v1334 = vunpack.c.h.b16 %v1123
    %v1335 = vunpack.c.l.b16 %v1124
    %v1336 = vunpack.c.h.b16 %v1124
    %v1337 = vunpack.c.l.b16 %v1125
    %v1338 = vunpack.c.h.b16 %v1125
    %v1339 = vunpack.c.l.b16 %v1126
    %v1340 = vpack.c.b16 %v1235, %v1228
    %v1341 = vpack.c.b16 %v1236, %v1229
    %v1342 = vpack.c.b16 %v1237, %v1230
    %v1343 = vpack.c.b16 %v1238, %v1231
    %v1344 = vpack.c.b16 %v1239, %v1232
    %v1345 = vpack.c.b16 %v1240, %v1233
    %v1346 = vpack.c.b16 %v1241, %v1234
    %v1347 = vpack.c.b16 %v1249, %v1242
    %v1348 = vpack.c.b16 %v1250, %v1243
    %v1349 = vpack.c.b16 %v1251, %v1244
    %v1350 = vpack.c.b16 %v1252, %v1245
    %v1351 = vpack.c.b16 %v1253, %v1246
    %v1352 = vpack.c.b16 %v1254, %v1247
    %v1353 = vpack.c.b16 %v1255, %v1248
    %v1354 = vpack.c.b16 %v1263, %v1256
    %v1355 = vpack.c.b16 %v1264, %v1257
    %v1356 = vpack.c.b16 %v1265, %v1258
    %v1357 = vpack.c.b16 %v1266, %v1259
    %v1358 = vpack.c.b16 %v1267, %v1260
    %v1359 = vpack.c.b16 %v1268, %v1261
    %v1360 = vpack.c.b16 %v1269, %v1262
    %v1361 = vpack.c.b16 %v1277, %v1270
    %v1362 = vpack.c.b16 %v1278, %v1271
    %v1363 = vpack.c.b16 %v1279, %v1272
    %v1364 = vpack.c.b16 %v1280, %v1273
    %v1365 = vpack.c.b16 %v1281, %v1274
    %v1366 = vpack.c.b16 %v1282, %v1275
    %v1367 = vpack.c.b16 %v1283, %v1276
    %v1368 = vpack.c.b16 %v1291, %v1284
    %v1369 = vpack.c.b16 %v1292, %v1285
    %v1370 = vpack.c.b16 %v1293, %v1286
    %v1371 = vpack.c.b16 %v1294, %v1287
    %v1372 = vpack.c.b16 %v1295, %v1288
    %v1373 = vpack.c.b16 %v1296, %v1289
    %v1374 = vpack.c.b16 %v1297, %v1290
    %v1375 = vpack.c.b16 %v1305, %v1298
    %v1376 = vpack.c.b16 %v1306, %v1299
    %v1377 = vpack.c.b16 %v1307, %v1300
    %v1378 = vpack.c.b16 %v1308, %v1301
    %v1379 = vpack.c.b16 %v1309, %v1302
    %v1380 = vpack.c.b16 %v1310, %v1303
    %v1381 = vpack.c.b16 %v1311, %v1304
    %v1382 = vpack.c.b16 %v1319, %v1312
    %v1383 = vpack.c.b16 %v1320, %v1313
    %v1384 = vpack.c.b16 %v1321, %v1314
    %v1385 = vpack.c.b16 %v1322, %v1315
    %v1386 = vpack.c.b16 %v1323, %v1316
    %v1387 = vpack.c.b16 %v1324, %v1317
    %v1388 = vpack.c.b16 %v1325, %v1318
    %v1389 = vpack.c.b16 %v1333, %v1326
    %v1390 = vpack.c.b16 %v1334, %v1327
    %v1391 = vpack.c.b16 %v1335, %v1328
    %v1392 = vpack.c.b16 %v1336, %v1329
    %v1393 = vpack.c.b16 %v1337, %v1330
    %v1394 = vpack.c.b16 %v1338, %v1331
    %v1395 = vpack.c.b16 %v1339, %v1332
    %1452 = vmatprep.subr.bf16.mxu0 %v1390
    %1453 = vmatpush1.bf16.msra.mxu0 %v1389
    %1454 = vmatprep.subr.bf16.mxu0 %v1383
    %1455 = vmatpush1.bf16.msra.mxu0 %v1382
    %1456 = vmatprep.subr.bf16.mxu0 %v1376
    %1457 = vmatpush1.bf16.msra.mxu0 %v1375
    %1458 = vmatprep.subr.bf16.mxu0 %v1369
    %1459 = vmatpush1.bf16.msra.mxu0 %v1368
    %1460 = vmatprep.subr.bf16.mxu0 %v1362
    %1461 = vmatpush1.bf16.msra.mxu0 %v1361
    %1462 = vmatprep.subr.bf16.mxu0 %v1355
    %1463 = vmatpush1.bf16.msra.mxu0 %v1354
    %1464 = vmatprep.subr.bf16.mxu0 %v1348
    %1465 = vmatpush1.bf16.msra.mxu0 %v1347
    %1466 = vmatprep.subr.bf16.mxu0 %v1341
    %1467 = vmatpush1.bf16.msra.mxu0 %v1340
    %1468 = vmatprep.subr.bf16.mxu0 0
    %1469 = vmatpush2.bf16.msra.mxu0 0
    %1470 = vmatprep.subr.bf16.mxu0 0
    %1471 = vmatpush2.bf16.msra.mxu0 0
    %1472 = vmatprep.subr.bf16.mxu0 0
    %1473 = vmatpush2.bf16.msra.mxu0 0
    %1474 = vmatprep.subr.bf16.mxu0 0
    %1475 = vmatpush2.bf16.msra.mxu0 0
    %1476 = vmatprep.subr.bf16.mxu0 0
    %1477 = vmatpush2.bf16.msra.mxu0 0
    %1478 = vmatprep.subr.bf16.mxu0 0
    %1479 = vmatpush2.bf16.msra.mxu0 0
    %1480 = vmatprep.subr.bf16.mxu0 0
    %1481 = vmatpush2.bf16.msra.mxu0 0
    %1482 = vmatprep.subr.bf16.mxu0 0
    %1483 = vmatpush2.bf16.msra.mxu0 0
    %1484 = vmatprep.mubr.bf16.mxu0 0
    %1485 = vmatmul.mubr.bf16.gmra.mxu0 %v1059
    %v1486 = vpop.f32.mrf.mxu0
    %v1487 = vadd.f32 %v1132, %v1486
    %v1488 = vpop.f32.mrf.mxu0
    %v1489 = vadd.f32 %v1136, %v1488
    %v1490 = vpop.f32.mrf.mxu0
    %v1491 = vadd.f32 %v1132, %v1490
    %v1492 = vpop.f32.mrf.mxu0
    %v1493 = vadd.f32 %v1136, %v1492
    %1494 = vmatprep.mubr.bf16.mxu0 0
    %1495 = vmatmul.mubr.bf16.gmra.mxu0 %v1060
    %v1496 = vpop.f32.mrf.mxu0
    %v1497 = vadd.f32 %v1132, %v1496
    %v1498 = vpop.f32.mrf.mxu0
    %v1499 = vadd.f32 %v1136, %v1498
    %v1500 = vpop.f32.mrf.mxu0
    %v1501 = vadd.f32 %v1132, %v1500
    %v1502 = vpop.f32.mrf.mxu0
    %v1503 = vadd.f32 %v1136, %v1502
    %1504 = vmatprep.mubr.bf16.mxu0 0
    %1505 = vmatmul.mubr.bf16.gmra.mxu0 %v1061
    %v1506 = vpop.f32.mrf.mxu0
    %v1507 = vadd.f32 %v1132, %v1506
    %v1508 = vpop.f32.mrf.mxu0
    %v1509 = vadd.f32 %v1136, %v1508
    %v1510 = vpop.f32.mrf.mxu0
    %v1511 = vadd.f32 %v1132, %v1510
    %v1512 = vpop.f32.mrf.mxu0
    %v1513 = vadd.f32 %v1136, %v1512
    %1514 = vmatprep.mubr.bf16.mxu0 0
    %1515 = vmatmul.mubr.bf16.gmra.mxu0 %v1062
    %v1516 = vpop.f32.mrf.mxu0
    %v1517 = vadd.f32 %v1132, %v1516
    %v1518 = vpop.f32.mrf.mxu0
    %v1519 = vadd.f32 %v1136, %v1518
    %v1520 = vpop.f32.mrf.mxu0
    %v1521 = vadd.f32 %v1132, %v1520
    %v1522 = vpop.f32.mrf.mxu0
    %v1523 = vadd.f32 %v1136, %v1522
    %1524 = vdwg.mxu0
    %1525 = vmatprep.subr.bf16.mxu0 %v1392
    %1526 = vmatpush1.bf16.msra.mxu0 %v1391
    %1527 = vmatprep.subr.bf16.mxu0 %v1385
    %1528 = vmatpush1.bf16.msra.mxu0 %v1384
    %1529 = vmatprep.subr.bf16.mxu0 %v1378
    %1530 = vmatpush1.bf16.msra.mxu0 %v1377
    %1531 = vmatprep.subr.bf16.mxu0 %v1371
    %1532 = vmatpush1.bf16.msra.mxu0 %v1370
    %1533 = vmatprep.subr.bf16.mxu0 %v1364
    %1534 = vmatpush1.bf16.msra.mxu0 %v1363
    %1535 = vmatprep.subr.bf16.mxu0 %v1357
    %1536 = vmatpush1.bf16.msra.mxu0 %v1356
    %1537 = vmatprep.subr.bf16.mxu0 %v1350
    %1538 = vmatpush1.bf16.msra.mxu0 %v1349
    %1539 = vmatprep.subr.bf16.mxu0 %v1343
    %1540 = vmatpush1.bf16.msra.mxu0 %v1342
    %1541 = vmatprep.subr.bf16.mxu0 0
    %1542 = vmatpush2.bf16.msra.mxu0 0
    %1543 = vmatprep.subr.bf16.mxu0 0
    %1544 = vmatpush2.bf16.msra.mxu0 0
    %1545 = vmatprep.subr.bf16.mxu0 0
    %1546 = vmatpush2.bf16.msra.mxu0 0
    %1547 = vmatprep.subr.bf16.mxu0 0
    %1548 = vmatpush2.bf16.msra.mxu0 0
    %1549 = vmatprep.subr.bf16.mxu0 0
    %1550 = vmatpush2.bf16.msra.mxu0 0
    %1551 = vmatprep.subr.bf16.mxu0 0
    %1552 = vmatpush2.bf16.msra.mxu0 0
    %1553 = vmatprep.subr.bf16.mxu0 0
    %1554 = vmatpush2.bf16.msra.mxu0 0
    %1555 = vmatprep.subr.bf16.mxu0 0
    %1556 = vmatpush2.bf16.msra.mxu0 0
    %1557 = vmatprep.mubr.bf16.mxu0 0
    %1558 = vmatmul.mubr.bf16.gmra.mxu0 %v1059
    %v1559 = vpop.f32.mrf.mxu0
    %v1560 = vadd.f32 %v1140, %v1559
    %v1561 = vpop.f32.mrf.mxu0
    %v1562 = vadd.f32 %v1144, %v1561
    %v1563 = vpop.f32.mrf.mxu0
    %v1564 = vadd.f32 %v1140, %v1563
    %v1565 = vpop.f32.mrf.mxu0
    %v1566 = vadd.f32 %v1144, %v1565
    %1567 = vmatprep.mubr.bf16.mxu0 0
    %1568 = vmatmul.mubr.bf16.gmra.mxu0 %v1060
    %v1569 = vpop.f32.mrf.mxu0
    %v1570 = vadd.f32 %v1140, %v1569
    %v1571 = vpop.f32.mrf.mxu0
    %v1572 = vadd.f32 %v1144, %v1571
    %v1573 = vpop.f32.mrf.mxu0
    %v1574 = vadd.f32 %v1140, %v1573
    %v1575 = vpop.f32.mrf.mxu0
    %v1576 = vadd.f32 %v1144, %v1575
    %1577 = vmatprep.mubr.bf16.mxu0 0
    %1578 = vmatmul.mubr.bf16.gmra.mxu0 %v1061
    %v1579 = vpop.f32.mrf.mxu0
    %v1580 = vadd.f32 %v1140, %v1579
    %v1581 = vpop.f32.mrf.mxu0
    %v1582 = vadd.f32 %v1144, %v1581
    %v1583 = vpop.f32.mrf.mxu0
    %v1584 = vadd.f32 %v1140, %v1583
    %v1585 = vpop.f32.mrf.mxu0
    %v1586 = vadd.f32 %v1144, %v1585
    %1587 = vmatprep.mubr.bf16.mxu0 0
    %1588 = vmatmul.mubr.bf16.gmra.mxu0 %v1062
    %v1589 = vpop.f32.mrf.mxu0
    %v1590 = vadd.f32 %v1140, %v1589
    %v1591 = vpop.f32.mrf.mxu0
    %v1592 = vadd.f32 %v1144, %v1591
    %v1593 = vpop.f32.mrf.mxu0
    %v1594 = vadd.f32 %v1140, %v1593
    %v1595 = vpop.f32.mrf.mxu0
    %v1596 = vadd.f32 %v1144, %v1595
    %1597 = vdwg.mxu0
    %1598 = vmatprep.subr.bf16.mxu0 %v1394
    %1599 = vmatpush1.bf16.msra.mxu0 %v1393
    %1600 = vmatprep.subr.bf16.mxu0 %v1387
    %1601 = vmatpush1.bf16.msra.mxu0 %v1386
    %1602 = vmatprep.subr.bf16.mxu0 %v1380
    %1603 = vmatpush1.bf16.msra.mxu0 %v1379
    %1604 = vmatprep.subr.bf16.mxu0 %v1373
    %1605 = vmatpush1.bf16.msra.mxu0 %v1372
    %1606 = vmatprep.subr.bf16.mxu0 %v1366
    %1607 = vmatpush1.bf16.msra.mxu0 %v1365
    %1608 = vmatprep.subr.bf16.mxu0 %v1359
    %1609 = vmatpush1.bf16.msra.mxu0 %v1358
    %1610 = vmatprep.subr.bf16.mxu0 %v1352
    %1611 = vmatpush1.bf16.msra.mxu0 %v1351
    %1612 = vmatprep.subr.bf16.mxu0 %v1345
    %1613 = vmatpush1.bf16.msra.mxu0 %v1344
    %1614 = vmatprep.subr.bf16.mxu0 0
    %1615 = vmatpush2.bf16.msra.mxu0 0
    %1616 = vmatprep.subr.bf16.mxu0 0
    %1617 = vmatpush2.bf16.msra.mxu0 0
    %1618 = vmatprep.subr.bf16.mxu0 0
    %1619 = vmatpush2.bf16.msra.mxu0 0
    %1620 = vmatprep.subr.bf16.mxu0 0
    %1621 = vmatpush2.bf16.msra.mxu0 0
    %1622 = vmatprep.subr.bf16.mxu0 0
    %1623 = vmatpush2.bf16.msra.mxu0 0
    %1624 = vmatprep.subr.bf16.mxu0 0
    %1625 = vmatpush2.bf16.msra.mxu0 0
    %1626 = vmatprep.subr.bf16.mxu0 0
    %1627 = vmatpush2.bf16.msra.mxu0 0
    %1628 = vmatprep.subr.bf16.mxu0 0
    %1629 = vmatpush2.bf16.msra.mxu0 0
    %1630 = vmatprep.mubr.bf16.mxu0 0
    %1631 = vmatmul.mubr.bf16.gmra.mxu0 %v1059
    %v1632 = vpop.f32.mrf.mxu0
    %v1633 = vadd.f32 %v1148, %v1632
    %v1634 = vpop.f32.mrf.mxu0
    %v1635 = vadd.f32 %v1152, %v1634
    %v1636 = vpop.f32.mrf.mxu0
    %v1637 = vadd.f32 %v1148, %v1636
    %v1638 = vpop.f32.mrf.mxu0
    %v1639 = vadd.f32 %v1152, %v1638
    %1640 = vmatprep.mubr.bf16.mxu0 0
    %1641 = vmatmul.mubr.bf16.gmra.mxu0 %v1060
    %v1642 = vpop.f32.mrf.mxu0
    %v1643 = vadd.f32 %v1148, %v1642
    %v1644 = vpop.f32.mrf.mxu0
    %v1645 = vadd.f32 %v1152, %v1644
    %v1646 = vpop.f32.mrf.mxu0
    %v1647 = vadd.f32 %v1148, %v1646
    %v1648 = vpop.f32.mrf.mxu0
    %v1649 = vadd.f32 %v1152, %v1648
    %1650 = vmatprep.mubr.bf16.mxu0 0
    %1651 = vmatmul.mubr.bf16.gmra.mxu0 %v1061
    %v1652 = vpop.f32.mrf.mxu0
    %v1653 = vadd.f32 %v1148, %v1652
    %v1654 = vpop.f32.mrf.mxu0
    %v1655 = vadd.f32 %v1152, %v1654
    %v1656 = vpop.f32.mrf.mxu0
    %v1657 = vadd.f32 %v1148, %v1656
    %v1658 = vpop.f32.mrf.mxu0
    %v1659 = vadd.f32 %v1152, %v1658
    %1660 = vmatprep.mubr.bf16.mxu0 0
    %1661 = vmatmul.mubr.bf16.gmra.mxu0 %v1062
    %v1662 = vpop.f32.mrf.mxu0
    %v1663 = vadd.f32 %v1148, %v1662
    %v1664 = vpop.f32.mrf.mxu0
    %v1665 = vadd.f32 %v1152, %v1664
    %v1666 = vpop.f32.mrf.mxu0
    %v1667 = vadd.f32 %v1148, %v1666
    %v1668 = vpop.f32.mrf.mxu0
    %v1669 = vadd.f32 %v1152, %v1668
    %1670 = vdwg.mxu0
    %1671 = vmatprep.subr.bf16.mxu0 0
    %1672 = vmatpush1.bf16.msra.mxu0 %v1395
    %1673 = vmatprep.subr.bf16.mxu0 0
    %1674 = vmatpush1.bf16.msra.mxu0 %v1388
    %1675 = vmatprep.subr.bf16.mxu0 0
    %1676 = vmatpush1.bf16.msra.mxu0 %v1381
    %1677 = vmatprep.subr.bf16.mxu0 0
    %1678 = vmatpush1.bf16.msra.mxu0 %v1374
    %1679 = vmatprep.subr.bf16.mxu0 0
    %1680 = vmatpush1.bf16.msra.mxu0 %v1367
    %1681 = vmatprep.subr.bf16.mxu0 0
    %1682 = vmatpush1.bf16.msra.mxu0 %v1360
    %1683 = vmatprep.subr.bf16.mxu0 0
    %1684 = vmatpush1.bf16.msra.mxu0 %v1353
    %1685 = vmatprep.subr.bf16.mxu0 0
    %1686 = vmatpush1.bf16.msra.mxu0 %v1346
    %1687 = vmatprep.subr.bf16.mxu0 0
    %1688 = vmatpush2.bf16.msra.mxu0 0
    %1689 = vmatprep.subr.bf16.mxu0 0
    %1690 = vmatpush2.bf16.msra.mxu0 0
    %1691 = vmatprep.subr.bf16.mxu0 0
    %1692 = vmatpush2.bf16.msra.mxu0 0
    %1693 = vmatprep.subr.bf16.mxu0 0
    %1694 = vmatpush2.bf16.msra.mxu0 0
    %1695 = vmatprep.subr.bf16.mxu0 0
    %1696 = vmatpush2.bf16.msra.mxu0 0
    %1697 = vmatprep.subr.bf16.mxu0 0
    %1698 = vmatpush2.bf16.msra.mxu0 0
    %1699 = vmatprep.subr.bf16.mxu0 0
    %1700 = vmatpush2.bf16.msra.mxu0 0
    %1701 = vmatprep.subr.bf16.mxu0 0
    %1702 = vmatpush2.bf16.msra.mxu0 0
    %1703 = vmatprep.mubr.bf16.mxu0 0
    %1704 = vmatmul.mubr.bf16.gmra.mxu0 %v1059
    %v1705 = vpop.f32.mrf.mxu0
    %v1706 = vadd.f32 %v1156, %v1705
    %v1707 = vpop.f32.mrf.mxu0
    %v1708 = vpop.f32.mrf.mxu0
    %v1709 = vadd.f32 %v1156, %v1708
    %v1710 = vpop.f32.mrf.mxu0
    %1711 = vmatprep.mubr.bf16.mxu0 0
    %1712 = vmatmul.mubr.bf16.gmra.mxu0 %v1060
    %v1713 = vpop.f32.mrf.mxu0
    %v1714 = vadd.f32 %v1156, %v1713
    %v1715 = vpop.f32.mrf.mxu0
    %v1716 = vpop.f32.mrf.mxu0
    %v1717 = vadd.f32 %v1156, %v1716
    %v1718 = vpop.f32.mrf.mxu0
    %1719 = vmatprep.mubr.bf16.mxu0 0
    %1720 = vmatmul.mubr.bf16.gmra.mxu0 %v1061
    %v1721 = vpop.f32.mrf.mxu0
    %v1722 = vadd.f32 %v1156, %v1721
    %v1723 = vpop.f32.mrf.mxu0
    %v1724 = vpop.f32.mrf.mxu0
    %v1725 = vadd.f32 %v1156, %v1724
    %v1726 = vpop.f32.mrf.mxu0
    %1727 = vmatprep.mubr.bf16.mxu0 0
    %1728 = vmatmul.mubr.bf16.gmra.mxu0 %v1062
    %v1729 = vpop.f32.mrf.mxu0
    %v1730 = vadd.f32 %v1156, %v1729
    %v1731 = vpop.f32.mrf.mxu0
    %v1732 = vpop.f32.mrf.mxu0
    %v1733 = vadd.f32 %v1156, %v1732
    %v1734 = vpop.f32.mrf.mxu0
    %1735 = vdwg.mxu0
    %v1736 = vmul.f32 %v1487, 0.5
    %v1737 = vmul.f32 %v1489, 0.5
    %v1738 = vmul.f32 %v1560, 0.5
    %v1739 = vmul.f32 %v1562, 0.5
    %v1740 = vmul.f32 %v1633, 0.5
    %v1741 = vmul.f32 %v1635, 0.5
    %v1742 = vmul.f32 %v1706, 0.5
    %v1743 = vmul.f32 %v1491, 0.5
    %v1744 = vmul.f32 %v1493, 0.5
    %v1745 = vmul.f32 %v1564, 0.5
    %v1746 = vmul.f32 %v1566, 0.5
    %v1747 = vmul.f32 %v1637, 0.5
    %v1748 = vmul.f32 %v1639, 0.5
    %v1749 = vmul.f32 %v1709, 0.5
    %v1750 = vmul.f32 %v1497, 0.5
    %v1751 = vmul.f32 %v1499, 0.5
    %v1752 = vmul.f32 %v1570, 0.5
    %v1753 = vmul.f32 %v1572, 0.5
    %v1754 = vmul.f32 %v1643, 0.5
    %v1755 = vmul.f32 %v1645, 0.5
    %v1756 = vmul.f32 %v1714, 0.5
    %v1757 = vmul.f32 %v1501, 0.5
    %v1758 = vmul.f32 %v1503, 0.5
    %v1759 = vmul.f32 %v1574, 0.5
    %v1760 = vmul.f32 %v1576, 0.5
    %v1761 = vmul.f32 %v1647, 0.5
    %v1762 = vmul.f32 %v1649, 0.5
    %v1763 = vmul.f32 %v1717, 0.5
    %v1764 = vmul.f32 %v1507, 0.5
    %v1765 = vmul.f32 %v1509, 0.5
    %v1766 = vmul.f32 %v1580, 0.5
    %v1767 = vmul.f32 %v1582, 0.5
    %v1768 = vmul.f32 %v1653, 0.5
    %v1769 = vmul.f32 %v1655, 0.5
    %v1770 = vmul.f32 %v1722, 0.5
    %v1771 = vmul.f32 %v1511, 0.5
    %v1772 = vmul.f32 %v1513, 0.5
    %v1773 = vmul.f32 %v1584, 0.5
    %v1774 = vmul.f32 %v1586, 0.5
    %v1775 = vmul.f32 %v1657, 0.5
    %v1776 = vmul.f32 %v1659, 0.5
    %v1777 = vmul.f32 %v1725, 0.5
    %v1778 = vmul.f32 %v1517, 0.5
    %v1779 = vmul.f32 %v1519, 0.5
    %v1780 = vmul.f32 %v1590, 0.5
    %v1781 = vmul.f32 %v1592, 0.5
    %v1782 = vmul.f32 %v1663, 0.5
    %v1783 = vmul.f32 %v1665, 0.5
    %v1784 = vmul.f32 %v1730, 0.5
    %v1785 = vmul.f32 %v1521, 0.5
    %v1786 = vmul.f32 %v1523, 0.5
    %v1787 = vmul.f32 %v1594, 0.5
    %v1788 = vmul.f32 %v1596, 0.5
    %v1789 = vmul.f32 %v1667, 0.5
    %v1790 = vmul.f32 %v1669, 0.5
    %v1791 = vmul.f32 %v1733, 0.5
    %v1792 = vtanh.pop %v1736
    %v1793 = vtanh.pop %v1737
    %v1794 = vtanh.pop %v1738
    %v1795 = vtanh.pop %v1739
    %v1796 = vtanh.pop %v1740
    %v1797 = vtanh.pop %v1741
    %v1798 = vtanh.pop %v1742
    %v1799 = vtanh.pop %v1743
    %v1800 = vtanh.pop %v1744
    %v1801 = vtanh.pop %v1745
    %v1802 = vtanh.pop %v1746
    %v1803 = vtanh.pop %v1747
    %v1804 = vtanh.pop %v1748
    %v1805 = vtanh.pop %v1749
    %v1806 = vtanh.pop %v1750
    %v1807 = vtanh.pop %v1751
    %v1808 = vtanh.pop %v1752
    %v1809 = vtanh.pop %v1753
    %v1810 = vtanh.pop %v1754
    %v1811 = vtanh.pop %v1755
    %v1812 = vtanh.pop %v1756
    %v1813 = vtanh.pop %v1757
    %v1814 = vtanh.pop %v1758
    %v1815 = vtanh.pop %v1759
    %v1816 = vtanh.pop %v1760
    %v1817 = vtanh.pop %v1761
    %v1818 = vtanh.pop %v1762
    %v1819 = vtanh.pop %v1763
    %v1820 = vtanh.pop %v1764
    %v1821 = vtanh.pop %v1765
    %v1822 = vtanh.pop %v1766
    %v1823 = vtanh.pop %v1767
    %v1824 = vtanh.pop %v1768
    %v1825 = vtanh.pop %v1769
    %v1826 = vtanh.pop %v1770
    %v1827 = vtanh.pop %v1771
    %v1828 = vtanh.pop %v1772
    %v1829 = vtanh.pop %v1773
    %v1830 = vtanh.pop %v1774
    %v1831 = vtanh.pop %v1775
    %v1832 = vtanh.pop %v1776
    %v1833 = vtanh.pop %v1777
    %v1834 = vtanh.pop %v1778
    %v1835 = vtanh.pop %v1779
    %v1836 = vtanh.pop %v1780
    %v1837 = vtanh.pop %v1781
    %v1838 = vtanh.pop %v1782
    %v1839 = vtanh.pop %v1783
    %v1840 = vtanh.pop %v1784
    %v1841 = vtanh.pop %v1785
    %v1842 = vtanh.pop %v1786
    %v1843 = vtanh.pop %v1787
    %v1844 = vtanh.pop %v1788
    %v1845 = vtanh.pop %v1789
    %v1846 = vtanh.pop %v1790
    %v1847 = vtanh.pop %v1791
    %v1848 = vmul.f32 %v1792, 0.5
    %v1849 = vmul.f32 %v1793, 0.5
    %v1850 = vmul.f32 %v1794, 0.5
    %v1851 = vmul.f32 %v1795, 0.5
    %v1852 = vmul.f32 %v1796, 0.5
    %v1853 = vmul.f32 %v1797, 0.5
    %v1854 = vmul.f32 %v1798, 0.5
    %v1855 = vmul.f32 %v1799, 0.5
    %v1856 = vmul.f32 %v1800, 0.5
    %v1857 = vmul.f32 %v1801, 0.5
    %v1858 = vmul.f32 %v1802, 0.5
    %v1859 = vmul.f32 %v1803, 0.5
    %v1860 = vmul.f32 %v1804, 0.5
    %v1861 = vmul.f32 %v1805, 0.5
    %v1862 = vmul.f32 %v1806, 0.5
    %v1863 = vmul.f32 %v1807, 0.5
    %v1864 = vmul.f32 %v1808, 0.5
    %v1865 = vmul.f32 %v1809, 0.5
    %v1866 = vmul.f32 %v1810, 0.5
    %v1867 = vmul.f32 %v1811, 0.5
    %v1868 = vmul.f32 %v1812, 0.5
    %v1869 = vmul.f32 %v1813, 0.5
    %v1870 = vmul.f32 %v1814, 0.5
    %v1871 = vmul.f32 %v1815, 0.5
    %v1872 = vmul.f32 %v1816, 0.5
    %v1873 = vmul.f32 %v1817, 0.5
    %v1874 = vmul.f32 %v1818, 0.5
    %v1875 = vmul.f32 %v1819, 0.5
    %v1876 = vmul.f32 %v1820, 0.5
    %v1877 = vmul.f32 %v1821, 0.5
    %v1878 = vmul.f32 %v1822, 0.5
    %v1879 = vmul.f32 %v1823, 0.5
    %v1880 = vmul.f32 %v1824, 0.5
    %v1881 = vmul.f32 %v1825, 0.5
    %v1882 = vmul.f32 %v1826, 0.5
    %v1883 = vmul.f32 %v1827, 0.5
    %v1884 = vmul.f32 %v1828, 0.5
    %v1885 = vmul.f32 %v1829, 0.5
    %v1886 = vmul.f32 %v1830, 0.5
    %v1887 = vmul.f32 %v1831, 0.5
    %v1888 = vmul.f32 %v1832, 0.5
    %v1889 = vmul.f32 %v1833, 0.5
    %v1890 = vmul.f32 %v1834, 0.5
    %v1891 = vmul.f32 %v1835, 0.5
    %v1892 = vmul.f32 %v1836, 0.5
    %v1893 = vmul.f32 %v1837, 0.5
    %v1894 = vmul.f32 %v1838, 0.5
    %v1895 = vmul.f32 %v1839, 0.5
    %v1896 = vmul.f32 %v1840, 0.5
    %v1897 = vmul.f32 %v1841, 0.5
    %v1898 = vmul.f32 %v1842, 0.5
    %v1899 = vmul.f32 %v1843, 0.5
    %v1900 = vmul.f32 %v1844, 0.5
    %v1901 = vmul.f32 %v1845, 0.5
    %v1902 = vmul.f32 %v1846, 0.5
    %v1903 = vmul.f32 %v1847, 0.5
    %v1904 = vadd.f32 %v1848, 0.5
    %v1905 = vadd.f32 %v1849, 0.5
    %v1906 = vadd.f32 %v1850, 0.5
    %v1907 = vadd.f32 %v1851, 0.5
    %v1908 = vadd.f32 %v1852, 0.5
    %v1909 = vadd.f32 %v1853, 0.5
    %v1910 = vadd.f32 %v1854, 0.5
    %v1911 = vadd.f32 %v1855, 0.5
    %v1912 = vadd.f32 %v1856, 0.5
    %v1913 = vadd.f32 %v1857, 0.5
    %v1914 = vadd.f32 %v1858, 0.5
    %v1915 = vadd.f32 %v1859, 0.5
    %v1916 = vadd.f32 %v1860, 0.5
    %v1917 = vadd.f32 %v1861, 0.5
    %v1918 = vadd.f32 %v1862, 0.5
    %v1919 = vadd.f32 %v1863, 0.5
    %v1920 = vadd.f32 %v1864, 0.5
    %v1921 = vadd.f32 %v1865, 0.5
    %v1922 = vadd.f32 %v1866, 0.5
    %v1923 = vadd.f32 %v1867, 0.5
    %v1924 = vadd.f32 %v1868, 0.5
    %v1925 = vadd.f32 %v1869, 0.5
    %v1926 = vadd.f32 %v1870, 0.5
    %v1927 = vadd.f32 %v1871, 0.5
    %v1928 = vadd.f32 %v1872, 0.5
    %v1929 = vadd.f32 %v1873, 0.5
    %v1930 = vadd.f32 %v1874, 0.5
    %v1931 = vadd.f32 %v1875, 0.5
    %v1932 = vadd.f32 %v1876, 0.5
    %v1933 = vadd.f32 %v1877, 0.5
    %v1934 = vadd.f32 %v1878, 0.5
    %v1935 = vadd.f32 %v1879, 0.5
    %v1936 = vadd.f32 %v1880, 0.5
    %v1937 = vadd.f32 %v1881, 0.5
    %v1938 = vadd.f32 %v1882, 0.5
    %v1939 = vadd.f32 %v1883, 0.5
    %v1940 = vadd.f32 %v1884, 0.5
    %v1941 = vadd.f32 %v1885, 0.5
    %v1942 = vadd.f32 %v1886, 0.5
    %v1943 = vadd.f32 %v1887, 0.5
    %v1944 = vadd.f32 %v1888, 0.5
    %v1945 = vadd.f32 %v1889, 0.5
    %v1946 = vadd.f32 %v1890, 0.5
    %v1947 = vadd.f32 %v1891, 0.5
    %v1948 = vadd.f32 %v1892, 0.5
    %v1949 = vadd.f32 %v1893, 0.5
    %v1950 = vadd.f32 %v1894, 0.5
    %v1951 = vadd.f32 %v1895, 0.5
    %v1952 = vadd.f32 %v1896, 0.5
    %v1953 = vadd.f32 %v1897, 0.5
    %v1954 = vadd.f32 %v1898, 0.5
    %v1955 = vadd.f32 %v1899, 0.5
    %v1956 = vadd.f32 %v1900, 0.5
    %v1957 = vadd.f32 %v1901, 0.5
    %v1958 = vadd.f32 %v1902, 0.5
    %v1959 = vadd.f32 %v1903, 0.5
    %1960 = vst [vmem:[#allocation2] sm:$0xff] %v1904
    %1961 = vst [vmem:[#allocation2 + $0x8] sm:$0xff] %v1905
    %1962 = vst [vmem:[#allocation2 + $0x10] sm:$0xff] %v1906
    %1963 = vst [vmem:[#allocation2 + $0x18] sm:$0xff] %v1907
    %1964 = vst [vmem:[#allocation2 + $0x20] sm:$0xff] %v1908
    %1965 = vst [vmem:[#allocation2 + $0x28] sm:$0xff] %v1909
    %1966 = vst.msk [vmem:[#allocation2 + $0x30] sm:$0xff] %vm517, %v1910
    %1967 = vst [vmem:[#allocation2 + $0x38] sm:$0xff] %v1911
    %1968 = vst [vmem:[#allocation2 + $0x40] sm:$0xff] %v1912
    %1969 = vst [vmem:[#allocation2 + $0x48] sm:$0xff] %v1913
    %1970 = vst [vmem:[#allocation2 + $0x50] sm:$0xff] %v1914
    %1971 = vst [vmem:[#allocation2 + $0x58] sm:$0xff] %v1915
    %1972 = vst [vmem:[#allocation2 + $0x60] sm:$0xff] %v1916
    %1973 = vst.msk [vmem:[#allocation2 + $0x68] sm:$0xff] %vm517, %v1917
    %1974 = vst [vmem:[#allocation2 + $0x70] sm:$0xff] %v1918
    %1975 = vst [vmem:[#allocation2 + $0x78] sm:$0xff] %v1919
    %1976 = vst [vmem:[#allocation2 + $0x80] sm:$0xff] %v1920
    %1977 = vst [vmem:[#allocation2 + $0x88] sm:$0xff] %v1921
    %1978 = vst [vmem:[#allocation2 + $0x90] sm:$0xff] %v1922
    %1979 = vst [vmem:[#allocation2 + $0x98] sm:$0xff] %v1923
    %1980 = vst.msk [vmem:[#allocation2 + $0xa0] sm:$0xff] %vm517, %v1924
    %1981 = vst [vmem:[#allocation2 + $0xa8] sm:$0xff] %v1925
    %1982 = vst [vmem:[#allocation2 + $0xb0] sm:$0xff] %v1926
    %1983 = vst [vmem:[#allocation2 + $0xb8] sm:$0xff] %v1927
    %1984 = vst [vmem:[#allocation2 + $0xc0] sm:$0xff] %v1928
    %1985 = vst [vmem:[#allocation2 + $0xc8] sm:$0xff] %v1929
    %1986 = vst [vmem:[#allocation2 + $0xd0] sm:$0xff] %v1930
    %1987 = vst.msk [vmem:[#allocation2 + $0xd8] sm:$0xff] %vm517, %v1931
    %1988 = vst [vmem:[#allocation2 + $0xe0] sm:$0xff] %v1932
    %1989 = vst [vmem:[#allocation2 + $0xe8] sm:$0xff] %v1933
    %1990 = vst [vmem:[#allocation2 + $0xf0] sm:$0xff] %v1934
    %1991 = vst [vmem:[#allocation2 + $0xf8] sm:$0xff] %v1935
    %1992 = vst [vmem:[#allocation2 + $0x100] sm:$0xff] %v1936
    %1993 = vst [vmem:[#allocation2 + $0x108] sm:$0xff] %v1937
    %1994 = vst.msk [vmem:[#allocation2 + $0x110] sm:$0xff] %vm517, %v1938
    %1995 = vst [vmem:[#allocation2 + $0x118] sm:$0xff] %v1939
    %1996 = vst [vmem:[#allocation2 + $0x120] sm:$0xff] %v1940
    %1997 = vst [vmem:[#allocation2 + $0x128] sm:$0xff] %v1941
    %1998 = vst [vmem:[#allocation2 + $0x130] sm:$0xff] %v1942
    %1999 = vst [vmem:[#allocation2 + $0x138] sm:$0xff] %v1943
    %2000 = vst [vmem:[#allocation2 + $0x140] sm:$0xff] %v1944
    %2001 = vst.msk [vmem:[#allocation2 + $0x148] sm:$0xff] %vm517, %v1945
    %2002 = vst [vmem:[#allocation2 + $0x150] sm:$0xff] %v1946
    %2003 = vst [vmem:[#allocation2 + $0x158] sm:$0xff] %v1947
    %2004 = vst [vmem:[#allocation2 + $0x160] sm:$0xff] %v1948
    %2005 = vst [vmem:[#allocation2 + $0x168] sm:$0xff] %v1949
    %2006 = vst [vmem:[#allocation2 + $0x170] sm:$0xff] %v1950
    %2007 = vst [vmem:[#allocation2 + $0x178] sm:$0xff] %v1951
    %2008 = vst.msk [vmem:[#allocation2 + $0x180] sm:$0xff] %vm517, %v1952
    %2009 = vst [vmem:[#allocation2 + $0x188] sm:$0xff] %v1953
    %2010 = vst [vmem:[#allocation2 + $0x190] sm:$0xff] %v1954
    %2011 = vst [vmem:[#allocation2 + $0x198] sm:$0xff] %v1955
    %2012 = vst [vmem:[#allocation2 + $0x1a0] sm:$0xff] %v1956
    %2013 = vst [vmem:[#allocation2 + $0x1a8] sm:$0xff] %v1957
    %2014 = vst [vmem:[#allocation2 + $0x1b0] sm:$0xff] %v1958
    %2015 = vst.msk [vmem:[#allocation2 + $0x1b8] sm:$0xff] %vm517, %v1959
    // Predicated region
    $region38: #{tpu_custom_call.1} parent=1 // pred_check
      _
    $region39: #{tpu_custom_call.1} parent=1 // pred_check_branch
      %2017 = sbr.rel (0) target = $region41
    $region40: #{tpu_custom_call.1} parent=1 // pred_region
      %s2019 = ssub.s32 7168, 7168
      %2020 = vsyncadd [#allocation3], %s2019
      %s2021 = sshll.u32 [#allocation2], 4
      %s2022 = int_to_ptr.vmem [resolvable:$true] %s2021
      %2027 = dma.vmem_to_hbm [thread:$0]  %s2022, 7168, %s9, [#allocation3], 896, 896, 56
    $region41: #{tpu_custom_call.1} parent=1 // pred_fallthru
      _
    // Predicated region
    $region42: #{tpu_custom_call.1} parent=1 // pred_check
      _
    $region43: #{tpu_custom_call.1} parent=1 // pred_check_branch
      %2029 = sbr.rel (0) target = $region45
    $region44: #{tpu_custom_call.1} parent=1 // pred_region
      %2030 = dma.done [#allocation3], 7168
    $region45: #{tpu_custom_call.1} parent=1 // pred_fallthru
      _
    %2031 = vsyncpa [#allocation3], 1

// kernel: tpu_custom_call.1
$region0: #{tpu_custom_call.1}
  #allocation0 [shape = 'u32[]', space=smem, size = 0x4, offset = 0x4, fixed_abs, tag = 'smem constant byte address 0x4 - core index']
  #allocation1 [shape = 'u32[144,128]{1,0:T(1,128)}', space=vmem, size = 0x12000, scoped, tag = 'internal scratch']
  %s0 = inlined_call_operand.vmem [shape: f32[64,784], index: 0, kind: input, shape index: {}]
  %s1 = inlined_call_operand.vmem [shape: bf16[784,128], index: 1, kind: input, shape index: {}]
  %s2 = inlined_call_operand.vmem [shape: f32[1,128], index: 2, kind: input, shape index: {}]
  %s3 = inlined_call_operand.vmem [shape: bf16[128,32], index: 3, kind: input, shape index: {}]
  %s4 = inlined_call_operand.vmem [shape: f32[1,32], index: 4, kind: input, shape index: {}]
  %s5 = inlined_call_operand.vmem [shape: bf16[32,128], index: 5, kind: input, shape index: {}]
  %s6 = inlined_call_operand.vmem [shape: f32[1,128], index: 6, kind: input, shape index: {}]
  %s7 = inlined_call_operand.vmem [shape: bf16[128,784], index: 7, kind: input, shape index: {}]
  %s8 = inlined_call_operand.vmem [shape: f32[1,784], index: 8, kind: input, shape index: {}]
  %s9 = inlined_call_operand.hbm [shape: f32[64,784], index: 9, kind: output, shape index: {}]
  %s10 = sld [smem:[#allocation0]]
  $region46: #{tpu_custom_call.1} parent=0
    _
  %s12 = ssub.s32 1, %s10
  %s13 = scalar_select 0, %s12, %s10
  $region1: #{tpu_custom_call.1} parent=0
    #allocation2 [shape = 'u8[229376]{0}', space=vmem, size = 0x38000, scoped, tag = 'output window, operand 0, single buffered']
    #allocation3 [shape = 's32[1]{0}', space=sflag, size = 0x4, scoped, tag = 'scoped memory for tpu_custom_call.1']
    %14 = vsyncpa [#allocation3], 0
    // Predicated region
    $region2: #{tpu_custom_call.1} parent=1 // pred_check
      _
    $region3: #{tpu_custom_call.1} parent=1 // pred_check_branch
      %16 = sbr.rel (0) target = $region5
    $region4: #{tpu_custom_call.1} parent=1 // pred_region
      _
    $region5: #{tpu_custom_call.1} parent=1 // pred_fallthru
      _
    // Predicated region
    $region6: #{tpu_custom_call.1} parent=1 // pred_check
      _
    $region7: #{tpu_custom_call.1} parent=1 // pred_check_branch
      %18 = sbr.rel (0) target = $region9
    $region8: #{tpu_custom_call.1} parent=1 // pred_region
      _
    $region9: #{tpu_custom_call.1} parent=1 // pred_fallthru
      _
    // Predicated region
    $region10: #{tpu_custom_call.1} parent=1 // pred_check
      _
    $region11: #{tpu_custom_call.1} parent=1 // pred_check_branch
      %20 = sbr.rel (0) target = $region13
    $region12: #{tpu_custom_call.1} parent=1 // pred_region
      _
    $region13: #{tpu_custom_call.1} parent=1 // pred_fallthru
      _
    // Predicated region
    $region14: #{tpu_custom_call.1} parent=1 // pred_check
      _
    $region15: #{tpu_custom_call.1} parent=1 // pred_check_branch
      %22 = sbr.rel (0) target = $region17
    $region16: #{tpu_custom_call.1} parent=1 // pred_region
      _
    $region17: #{tpu_custom_call.1} parent=1 // pred_fallthru
      _
    // Predicated region
    $region18: #{tpu_custom_call.1} parent=1 // pred_check
      _
    $region19: #{tpu_custom_call.1} parent=1 // pred_check_branch
      %24 = sbr.rel (0) target = $region21
    $region20: #{tpu_custom_call.1} parent=1 // pred_region
      _
    $region21: #{tpu_custom_call.1} parent=1 // pred_fallthru
      _
    // Predicated region
    $region22: #{tpu_custom_call.1} parent=1 // pred_check
      _
    $region23: #{tpu_custom_call.1} parent=1 // pred_check_branch
      %26 = sbr.rel (0) target = $region25
    $region24: #{tpu_custom_call.1} parent=1 // pred_region
      _
    $region25: #{tpu_custom_call.1} parent=1 // pred_fallthru
      _
    // Predicated region
    $region26: #{tpu_custom_call.1} parent=1 // pred_check
      _
    $region27: #{tpu_custom_call.1} parent=1 // pred_check_branch
      %28 = sbr.rel (0) target = $region29
    $region28: #{tpu_custom_call.1} parent=1 // pred_region
      _
    $region29: #{tpu_custom_call.1} parent=1 // pred_fallthru
      _
    // Predicated region
    $region30: #{tpu_custom_call.1} parent=1 // pred_check
      _
    $region31: #{tpu_custom_call.1} parent=1 // pred_check_branch
      %30 = sbr.rel (0) target = $region33
    $region32: #{tpu_custom_call.1} parent=1 // pred_region
      _
    $region33: #{tpu_custom_call.1} parent=1 // pred_fallthru
      _
    // Predicated region
    $region34: #{tpu_custom_call.1} parent=1 // pred_check
      _
    $region35: #{tpu_custom_call.1} parent=1 // pred_check_branch
      %32 = sbr.rel (0) target = $region37
    $region36: #{tpu_custom_call.1} parent=1 // pred_region
      _
    $region37: #{tpu_custom_call.1} parent=1 // pred_fallthru
      _
    %v34 = vld [vmem:[%s0] sm:$0xff]
    %v35 = vld [vmem:[%s0 + $0x8] sm:$0xff]
    %v36 = vld [vmem:[%s0 + $0x10] sm:$0xff]
    %v37 = vld [vmem:[%s0 + $0x18] sm:$0xff]
    %v38 = vld [vmem:[%s0 + $0x20] sm:$0xff]
    %v39 = vld [vmem:[%s0 + $0x28] sm:$0xff]
    %v40 = vld [vmem:[%s0 + $0x30] sm:$0xff]
    %v41 = vld [vmem:[%s0 + $0x38] sm:$0xff]
    %v42 = vld [vmem:[%s0 + $0x40] sm:$0xff]
    %v43 = vld [vmem:[%s0 + $0x48] sm:$0xff]
    %v44 = vld [vmem:[%s0 + $0x50] sm:$0xff]
    %v45 = vld [vmem:[%s0 + $0x58] sm:$0xff]
    %v46 = vld [vmem:[%s0 + $0x60] sm:$0xff]
    %v47 = vld [vmem:[%s0 + $0x68] sm:$0xff]
    %v48 = vld [vmem:[%s0 + $0x70] sm:$0xff]
    %v49 = vld [vmem:[%s0 + $0x78] sm:$0xff]
    %v50 = vld [vmem:[%s0 + $0x80] sm:$0xff]
    %v51 = vld [vmem:[%s0 + $0x88] sm:$0xff]
    %v52 = vld [vmem:[%s0 + $0x90] sm:$0xff]
    %v53 = vld [vmem:[%s0 + $0x98] sm:$0xff]
    %v54 = vld [vmem:[%s0 + $0xa0] sm:$0xff]
    %v55 = vld [vmem:[%s0 + $0xa8] sm:$0xff]
    %v56 = vld [vmem:[%s0 + $0xb0] sm:$0xff]
    %v57 = vld [vmem:[%s0 + $0xb8] sm:$0xff]
    %v58 = vld [vmem:[%s0 + $0xc0] sm:$0xff]
    %v59 = vld [vmem:[%s0 + $0xc8] sm:$0xff]
    %v60 = vld [vmem:[%s0 + $0xd0] sm:$0xff]
    %v61 = vld [vmem:[%s0 + $0xd8] sm:$0xff]
    %v62 = vld [vmem:[%s0 + $0xe0] sm:$0xff]
    %v63 = vld [vmem:[%s0 + $0xe8] sm:$0xff]
    %v64 = vld [vmem:[%s0 + $0xf0] sm:$0xff]
    %v65 = vld [vmem:[%s0 + $0xf8] sm:$0xff]
    %v66 = vld [vmem:[%s0 + $0x100] sm:$0xff]
    %v67 = vld [vmem:[%s0 + $0x108] sm:$0xff]
    %v68 = vld [vmem:[%s0 + $0x110] sm:$0xff]
    %v69 = vld [vmem:[%s0 + $0x118] sm:$0xff]
    %v70 = vld [vmem:[%s0 + $0x120] sm:$0xff]
    %v71 = vld [vmem:[%s0 + $0x128] sm:$0xff]
    %v72 = vld [vmem:[%s0 + $0x130] sm:$0xff]
    %v73 = vld [vmem:[%s0 + $0x138] sm:$0xff]
    %v74 = vld [vmem:[%s0 + $0x140] sm:$0xff]
    %v75 = vld [vmem:[%s0 + $0x148] sm:$0xff]
    %v76 = vld [vmem:[%s0 + $0x150] sm:$0xff]
    %v77 = vld [vmem:[%s0 + $0x158] sm:$0xff]
    %v78 = vld [vmem:[%s0 + $0x160] sm:$0xff]
    %v79 = vld [vmem:[%s0 + $0x168] sm:$0xff]
    %v80 = vld [vmem:[%s0 + $0x170] sm:$0xff]
    %v81 = vld [vmem:[%s0 + $0x178] sm:$0xff]
    %v82 = vld [vmem:[%s0 + $0x180] sm:$0xff]
    %v83 = vld [vmem:[%s0 + $0x188] sm:$0xff]
    %v84 = vld [vmem:[%s0 + $0x190] sm:$0xff]
    %v85 = vld [vmem:[%s0 + $0x198] sm:$0xff]
    %v86 = vld [vmem:[%s0 + $0x1a0] sm:$0xff]
    %v87 = vld [vmem:[%s0 + $0x1a8] sm:$0xff]
    %v88 = vld [vmem:[%s0 + $0x1b0] sm:$0xff]
    %v89 = vld [vmem:[%s0 + $0x1b8] sm:$0xff]
    %v90 = vpack.c.bf16 %v41, %v34
    %v91 = vpack.c.bf16 %v42, %v35
    %v92 = vpack.c.bf16 %v43, %v36
    %v93 = vpack.c.bf16 %v44, %v37
    %v94 = vpack.c.bf16 %v45, %v38
    %v95 = vpack.c.bf16 %v46, %v39
    %v96 = vpack.c.bf16 %v47, %v40
    %v97 = vpack.c.bf16 %v55, %v48
    %v98 = vpack.c.bf16 %v56, %v49
    %v99 = vpack.c.bf16 %v57, %v50
    %v100 = vpack.c.bf16 %v58, %v51
    %v101 = vpack.c.bf16 %v59, %v52
    %v102 = vpack.c.bf16 %v60, %v53
    %v103 = vpack.c.bf16 %v61, %v54
    %v104 = vpack.c.bf16 %v69, %v62
    %v105 = vpack.c.bf16 %v70, %v63
    %v106 = vpack.c.bf16 %v71, %v64
    %v107 = vpack.c.bf16 %v72, %v65
    %v108 = vpack.c.bf16 %v73, %v66
    %v109 = vpack.c.bf16 %v74, %v67
    %v110 = vpack.c.bf16 %v75, %v68
    %v111 = vpack.c.bf16 %v83, %v76
    %v112 = vpack.c.bf16 %v84, %v77
    %v113 = vpack.c.bf16 %v85, %v78
    %v114 = vpack.c.bf16 %v86, %v79
    %v115 = vpack.c.bf16 %v87, %v80
    %v116 = vpack.c.bf16 %v88, %v81
    %v117 = vpack.c.bf16 %v89, %v82
    %v118 = vld [vmem:[%s1] sm:$0xf]
    %v119 = vld [vmem:[%s1 + $0x4] sm:$0xf]
    %v120 = vld [vmem:[%s1 + $0x8] sm:$0xf]
    %v121 = vld [vmem:[%s1 + $0xc] sm:$0xf]
    %v122 = vld [vmem:[%s1 + $0x10] sm:$0xf]
    %v123 = vld [vmem:[%s1 + $0x14] sm:$0xf]
    %v124 = vld [vmem:[%s1 + $0x18] sm:$0xf]
    %v125 = vld [vmem:[%s1 + $0x1c] sm:$0xf]
    %v126 = vld [vmem:[%s1 + $0x20] sm:$0xf]
    %v127 = vld [vmem:[%s1 + $0x24] sm:$0xf]
    %v128 = vld [vmem:[%s1 + $0x28] sm:$0xf]
    %v129 = vld [vmem:[%s1 + $0x2c] sm:$0xf]
    %v130 = vld [vmem:[%s1 + $0x30] sm:$0xf]
    %v131 = vld [vmem:[%s1 + $0x34] sm:$0xf]
    %v132 = vld [vmem:[%s1 + $0x38] sm:$0xf]
    %v133 = vld [vmem:[%s1 + $0x3c] sm:$0xf]
    %v134 = vld [vmem:[%s1 + $0x40] sm:$0xf]
    %v135 = vld [vmem:[%s1 + $0x44] sm:$0xf]
    %v136 = vld [vmem:[%s1 + $0x48] sm:$0xf]
    %v137 = vld [vmem:[%s1 + $0x4c] sm:$0xf]
    %v138 = vld [vmem:[%s1 + $0x50] sm:$0xf]
    %v139 = vld [vmem:[%s1 + $0x54] sm:$0xf]
    %v140 = vld [vmem:[%s1 + $0x58] sm:$0xf]
    %v141 = vld [vmem:[%s1 + $0x5c] sm:$0xf]
    %v142 = vld [vmem:[%s1 + $0x60] sm:$0xf]
    %v143 = vld [vmem:[%s1 + $0x64] sm:$0xf]
    %v144 = vld [vmem:[%s1 + $0x68] sm:$0xf]
    %v145 = vld [vmem:[%s1 + $0x6c] sm:$0xf]
    %v146 = vld [vmem:[%s1 + $0x70] sm:$0xf]
    %v147 = vld [vmem:[%s1 + $0x74] sm:$0xf]
    %v148 = vld [vmem:[%s1 + $0x78] sm:$0xf]
    %v149 = vld [vmem:[%s1 + $0x7c] sm:$0xf]
    %v150 = vld [vmem:[%s1 + $0x80] sm:$0xf]
    %v151 = vld [vmem:[%s1 + $0x84] sm:$0xf]
    %v152 = vld [vmem:[%s1 + $0x88] sm:$0xf]
    %v153 = vld [vmem:[%s1 + $0x8c] sm:$0xf]
    %v154 = vld [vmem:[%s1 + $0x90] sm:$0xf]
    %v155 = vld [vmem:[%s1 + $0x94] sm:$0xf]
    %v156 = vld [vmem:[%s1 + $0x98] sm:$0xf]
    %v157 = vld [vmem:[%s1 + $0x9c] sm:$0xf]
    %v158 = vld [vmem:[%s1 + $0xa0] sm:$0xf]
    %v159 = vld [vmem:[%s1 + $0xa4] sm:$0xf]
    %v160 = vld [vmem:[%s1 + $0xa8] sm:$0xf]
    %v161 = vld [vmem:[%s1 + $0xac] sm:$0xf]
    %v162 = vld [vmem:[%s1 + $0xb0] sm:$0xf]
    %v163 = vld [vmem:[%s1 + $0xb4] sm:$0xf]
    %v164 = vld [vmem:[%s1 + $0xb8] sm:$0xf]
    %v165 = vld [vmem:[%s1 + $0xbc] sm:$0xf]
    %v166 = vld [vmem:[%s1 + $0xc0] sm:$0xf]
    %v167 = vld [vmem:[%s1 + $0xc4] sm:$0xf]
    %v168 = vld [vmem:[%s1 + $0xc8] sm:$0xf]
    %v169 = vld [vmem:[%s1 + $0xcc] sm:$0xf]
    %v170 = vld [vmem:[%s1 + $0xd0] sm:$0xf]
    %v171 = vld [vmem:[%s1 + $0xd4] sm:$0xf]
    %v172 = vld [vmem:[%s1 + $0xd8] sm:$0xf]
    %v173 = vld [vmem:[%s1 + $0xdc] sm:$0xf]
    %v174 = vld [vmem:[%s1 + $0xe0] sm:$0xf]
    %v175 = vld [vmem:[%s1 + $0xe4] sm:$0xf]
    %v176 = vld [vmem:[%s1 + $0xe8] sm:$0xf]
    %v177 = vld [vmem:[%s1 + $0xec] sm:$0xf]
    %v178 = vld [vmem:[%s1 + $0xf0] sm:$0xf]
    %v179 = vld [vmem:[%s1 + $0xf4] sm:$0xf]
    %v180 = vld [vmem:[%s1 + $0xf8] sm:$0xf]
    %v181 = vld [vmem:[%s1 + $0xfc] sm:$0xf]
    %v182 = vld [vmem:[%s1 + $0x100] sm:$0xf]
    %v183 = vld [vmem:[%s1 + $0x104] sm:$0xf]
    %v184 = vld [vmem:[%s1 + $0x108] sm:$0xf]
    %v185 = vld [vmem:[%s1 + $0x10c] sm:$0xf]
    %v186 = vld [vmem:[%s1 + $0x110] sm:$0xf]
    %v187 = vld [vmem:[%s1 + $0x114] sm:$0xf]
    %v188 = vld [vmem:[%s1 + $0x118] sm:$0xf]
    %v189 = vld [vmem:[%s1 + $0x11c] sm:$0xf]
    %v190 = vld [vmem:[%s1 + $0x120] sm:$0xf]
    %v191 = vld [vmem:[%s1 + $0x124] sm:$0xf]
    %v192 = vld [vmem:[%s1 + $0x128] sm:$0xf]
    %v193 = vld [vmem:[%s1 + $0x12c] sm:$0xf]
    %v194 = vld [vmem:[%s1 + $0x130] sm:$0xf]
    %v195 = vld [vmem:[%s1 + $0x134] sm:$0xf]
    %v196 = vld [vmem:[%s1 + $0x138] sm:$0xf]
    %v197 = vld [vmem:[%s1 + $0x13c] sm:$0xf]
    %v198 = vld [vmem:[%s1 + $0x140] sm:$0xf]
    %v199 = vld [vmem:[%s1 + $0x144] sm:$0xf]
    %v200 = vld [vmem:[%s1 + $0x148] sm:$0xf]
    %v201 = vld [vmem:[%s1 + $0x14c] sm:$0xf]
    %v202 = vld [vmem:[%s1 + $0x150] sm:$0xf]
    %v203 = vld [vmem:[%s1 + $0x154] sm:$0xf]
    %v204 = vld [vmem:[%s1 + $0x158] sm:$0xf]
    %v205 = vld [vmem:[%s1 + $0x15c] sm:$0xf]
    %v206 = vld [vmem:[%s1 + $0x160] sm:$0xf]
    %v207 = vld [vmem:[%s1 + $0x164] sm:$0xf]
    %v208 = vld [vmem:[%s1 + $0x168] sm:$0xf]
    %v209 = vld [vmem:[%s1 + $0x16c] sm:$0xf]
    %v210 = vld [vmem:[%s1 + $0x170] sm:$0xf]
    %v211 = vld [vmem:[%s1 + $0x174] sm:$0xf]
    %v212 = vld [vmem:[%s1 + $0x178] sm:$0xf]
    %v213 = vld [vmem:[%s1 + $0x17c] sm:$0xf]
    %v214 = vld [vmem:[%s1 + $0x180] sm:$0xf]
    %v215 = vld [vmem:[%s1 + $0x184] sm:$0xf]
    %v216 = vld [vmem:[%s2] sm:$0x1]
    %v218 = vlaneseq
    %v219 = vshrl.u32 %v218, 7
    %v220 = vsub.s32 0, %v219
    %v221 = vrot.slane %v216, %v220
    %v321 = vunpack.c.l.b16 %v118
    %v322 = vunpack.c.l.b16 %v119
    %v323 = vunpack.c.l.b16 %v120
    %v324 = vunpack.c.l.b16 %v121
    %v325 = vunpack.c.l.b16 %v122
    %v326 = vunpack.c.l.b16 %v123
    %v327 = vunpack.c.l.b16 %v124
    %v328 = vunpack.c.l.b16 %v125
    %v329 = vunpack.c.l.b16 %v126
    %v330 = vunpack.c.l.b16 %v127
    %v331 = vunpack.c.l.b16 %v128
    %v332 = vunpack.c.l.b16 %v129
    %v333 = vunpack.c.l.b16 %v130
    %v334 = vunpack.c.l.b16 %v131
    %v335 = vunpack.c.l.b16 %v132
    %v336 = vunpack.c.l.b16 %v133
    %v337 = vunpack.c.l.b16 %v134
    %v338 = vunpack.c.l.b16 %v135
    %v339 = vunpack.c.l.b16 %v136
    %v340 = vunpack.c.l.b16 %v137
    %v341 = vunpack.c.l.b16 %v138
    %v342 = vunpack.c.l.b16 %v139
    %v343 = vunpack.c.l.b16 %v140
    %v344 = vunpack.c.l.b16 %v141
    %v345 = vunpack.c.l.b16 %v142
    %v346 = vunpack.c.l.b16 %v143
    %v347 = vunpack.c.l.b16 %v144
    %v348 = vunpack.c.l.b16 %v145
    %v349 = vunpack.c.l.b16 %v146
    %v350 = vunpack.c.l.b16 %v147
    %v351 = vunpack.c.l.b16 %v148
    %v352 = vunpack.c.l.b16 %v149
    %v353 = vunpack.c.l.b16 %v150
    %v354 = vunpack.c.l.b16 %v151
    %v355 = vunpack.c.l.b16 %v152
    %v356 = vunpack.c.l.b16 %v153
    %v357 = vunpack.c.l.b16 %v154
    %v358 = vunpack.c.l.b16 %v155
    %v359 = vunpack.c.l.b16 %v156
    %v360 = vunpack.c.l.b16 %v157
    %v361 = vunpack.c.l.b16 %v158
    %v362 = vunpack.c.l.b16 %v159
    %v363 = vunpack.c.l.b16 %v160
    %v364 = vunpack.c.l.b16 %v161
    %v365 = vunpack.c.l.b16 %v162
    %v366 = vunpack.c.l.b16 %v163
    %v367 = vunpack.c.l.b16 %v164
    %v368 = vunpack.c.l.b16 %v165
    %v369 = vunpack.c.l.b16 %v166
    %v370 = vunpack.c.l.b16 %v167
    %v371 = vunpack.c.l.b16 %v168
    %v372 = vunpack.c.l.b16 %v169
    %v373 = vunpack.c.l.b16 %v170
    %v374 = vunpack.c.l.b16 %v171
    %v375 = vunpack.c.l.b16 %v172
    %v376 = vunpack.c.l.b16 %v173
    %v377 = vunpack.c.l.b16 %v174
    %v378 = vunpack.c.l.b16 %v175
    %v379 = vunpack.c.l.b16 %v176
    %v380 = vunpack.c.l.b16 %v177
    %v381 = vunpack.c.l.b16 %v178
    %v382 = vunpack.c.l.b16 %v179
    %v383 = vunpack.c.l.b16 %v180
    %v384 = vunpack.c.l.b16 %v181
    %v385 = vunpack.c.l.b16 %v182
    %v386 = vunpack.c.l.b16 %v183
    %v387 = vunpack.c.l.b16 %v184
    %v388 = vunpack.c.l.b16 %v185
    %v389 = vunpack.c.l.b16 %v186
    %v390 = vunpack.c.l.b16 %v187
    %v391 = vunpack.c.l.b16 %v188
    %v392 = vunpack.c.l.b16 %v189
    %v393 = vunpack.c.l.b16 %v190
    %v394 = vunpack.c.l.b16 %v191
    %v395 = vunpack.c.l.b16 %v192
    %v396 = vunpack.c.l.b16 %v193
    %v397 = vunpack.c.l.b16 %v194
    %v398 = vunpack.c.l.b16 %v195
    %v399 = vunpack.c.l.b16 %v196
    %v400 = vunpack.c.l.b16 %v197
    %v401 = vunpack.c.l.b16 %v198
    %v402 = vunpack.c.l.b16 %v199
    %v403 = vunpack.c.l.b16 %v200
    %v404 = vunpack.c.l.b16 %v201
    %v405 = vunpack.c.l.b16 %v202
    %v406 = vunpack.c.l.b16 %v203
    %v407 = vunpack.c.l.b16 %v204
    %v408 = vunpack.c.l.b16 %v205
    %v409 = vunpack.c.l.b16 %v206
    %v410 = vunpack.c.l.b16 %v207
    %v411 = vunpack.c.l.b16 %v208
    %v412 = vunpack.c.l.b16 %v209
    %v413 = vunpack.c.l.b16 %v210
    %v414 = vunpack.c.l.b16 %v211
    %v415 = vunpack.c.l.b16 %v212
    %v416 = vunpack.c.l.b16 %v213
    %v417 = vunpack.c.l.b16 %v214
    %v418 = vunpack.c.l.b16 %v215
    %v419 = vpack.c.b16 %v322, %v321
    %v420 = vpack.c.b16 %v324, %v323
    %v421 = vpack.c.b16 %v326, %v325
    %v422 = vpack.c.b16 %v328, %v327
    %v423 = vpack.c.b16 %v330, %v329
    %v424 = vpack.c.b16 %v332, %v331
    %v425 = vpack.c.b16 %v334, %v333
    %v426 = vpack.c.b16 %v336, %v335
    %v427 = vpack.c.b16 %v338, %v337
    %v428 = vpack.c.b16 %v340, %v339
    %v429 = vpack.c.b16 %v342, %v341
    %v430 = vpack.c.b16 %v344, %v343
    %v431 = vpack.c.b16 %v346, %v345
    %v432 = vpack.c.b16 %v348, %v347
    %v433 = vpack.c.b16 %v350, %v349
    %v434 = vpack.c.b16 %v352, %v351
    %v435 = vpack.c.b16 %v354, %v353
    %v436 = vpack.c.b16 %v356, %v355
    %v437 = vpack.c.b16 %v358, %v357
    %v438 = vpack.c.b16 %v360, %v359
    %v439 = vpack.c.b16 %v362, %v361
    %v440 = vpack.c.b16 %v364, %v363
    %v441 = vpack.c.b16 %v366, %v365
    %v442 = vpack.c.b16 %v368, %v367
    %v443 = vpack.c.b16 %v370, %v369
    %v444 = vpack.c.b16 %v372, %v371
    %v445 = vpack.c.b16 %v374, %v373
    %v446 = vpack.c.b16 %v376, %v375
    %v447 = vpack.c.b16 %v378, %v377
    %v448 = vpack.c.b16 %v380, %v379
    %v449 = vpack.c.b16 %v382, %v381
    %v450 = vpack.c.b16 %v384, %v383
    %v451 = vpack.c.b16 %v386, %v385
    %v452 = vpack.c.b16 %v388, %v387
    %v453 = vpack.c.b16 %v390, %v389
    %v454 = vpack.c.b16 %v392, %v391
    %v455 = vpack.c.b16 %v394, %v393
    %v456 = vpack.c.b16 %v396, %v395
    %v457 = vpack.c.b16 %v398, %v397
    %v458 = vpack.c.b16 %v400, %v399
    %v459 = vpack.c.b16 %v402, %v401
    %v460 = vpack.c.b16 %v404, %v403
    %v461 = vpack.c.b16 %v406, %v405
    %v462 = vpack.c.b16 %v408, %v407
    %v463 = vpack.c.b16 %v410, %v409
    %v464 = vpack.c.b16 %v412, %v411
    %v465 = vpack.c.b16 %v414, %v413
    %v466 = vpack.c.b16 %v416, %v415
    %v467 = vpack.c.b16 %v418, %v417
    %vm517 = vcmask 130048
    %v519 = vsel %vm517, %v96, 0
    %v522 = vsel %vm517, %v103, 0
    %v525 = vsel %vm517, %v110, 0
    %v528 = vsel %vm517, %v117, 0
    %530 = vmatprep.subr.bf16.mxu0 0
    %531 = vmatpush1.bf16.msra.mxu0 %v426
    %532 = vmatprep.subr.bf16.mxu0 0
    %533 = vmatpush1.bf16.msra.mxu0 %v425
    %534 = vmatprep.subr.bf16.mxu0 0
    %535 = vmatpush1.bf16.msra.mxu0 %v424
    %536 = vmatprep.subr.bf16.mxu0 0
    %537 = vmatpush1.bf16.msra.mxu0 %v423
    %538 = vmatprep.subr.bf16.mxu0 0
    %539 = vmatpush1.bf16.msra.mxu0 %v422
    %540 = vmatprep.subr.bf16.mxu0 0
    %541 = vmatpush1.bf16.msra.mxu0 %v421
    %542 = vmatprep.subr.bf16.mxu0 0
    %543 = vmatpush1.bf16.msra.mxu0 %v420
    %544 = vmatprep.subr.bf16.mxu0 0
    %545 = vmatpush1.bf16.msra.mxu0 %v419
    %546 = vmatprep.subr.bf16.mxu0 0
    %547 = vmatpush2.bf16.msra.mxu0 %v434
    %548 = vmatprep.subr.bf16.mxu0 0
    %549 = vmatpush2.bf16.msra.mxu0 %v433
    %550 = vmatprep.subr.bf16.mxu0 0
    %551 = vmatpush2.bf16.msra.mxu0 %v432
    %552 = vmatprep.subr.bf16.mxu0 0
    %553 = vmatpush2.bf16.msra.mxu0 %v431
    %554 = vmatprep.subr.bf16.mxu0 0
    %555 = vmatpush2.bf16.msra.mxu0 %v430
    %556 = vmatprep.subr.bf16.mxu0 0
    %557 = vmatpush2.bf16.msra.mxu0 %v429
    %558 = vmatprep.subr.bf16.mxu0 0
    %559 = vmatpush2.bf16.msra.mxu0 %v428
    %560 = vmatprep.subr.bf16.mxu0 0
    %561 = vmatpush2.bf16.msra.mxu0 %v427
    %562 = vmatprep.mubr.bf16.mxu0 %v91
    %563 = vmatmul.mubr.bf16.gmra.mxu0 %v90
    %v564 = vpop.f32.mrf.mxu0
    %v565 = vadd.f32 %v221, %v564
    %v566 = vpop.f32.mrf.mxu0
    %v567 = vpop.f32.mrf.mxu0
    %v568 = vadd.f32 %v221, %v567
    %v569 = vpop.f32.mrf.mxu0
    %570 = vmatprep.mubr.bf16.mxu0 %v98
    %571 = vmatmul.mubr.bf16.gmra.mxu0 %v97
    %v572 = vpop.f32.mrf.mxu0
    %v573 = vadd.f32 %v221, %v572
    %v574 = vpop.f32.mrf.mxu0
    %v575 = vpop.f32.mrf.mxu0
    %v576 = vadd.f32 %v221, %v575
    %v577 = vpop.f32.mrf.mxu0
    %578 = vmatprep.mubr.bf16.mxu0 %v105
    %579 = vmatmul.mubr.bf16.gmra.mxu0 %v104
    %v580 = vpop.f32.mrf.mxu0
    %v581 = vadd.f32 %v221, %v580
    %v582 = vpop.f32.mrf.mxu0
    %v583 = vpop.f32.mrf.mxu0
    %v584 = vadd.f32 %v221, %v583
    %v585 = vpop.f32.mrf.mxu0
    %586 = vmatprep.mubr.bf16.mxu0 %v112
    %587 = vmatmul.mubr.bf16.gmra.mxu0 %v111
    %v588 = vpop.f32.mrf.mxu0
    %v589 = vadd.f32 %v221, %v588
    %v590 = vpop.f32.mrf.mxu0
    %v591 = vpop.f32.mrf.mxu0
    %v592 = vadd.f32 %v221, %v591
    %v593 = vpop.f32.mrf.mxu0
    %594 = vdwg.mxu0
    %595 = vmatprep.subr.bf16.mxu0 0
    %596 = vmatpush1.bf16.msra.mxu0 %v442
    %597 = vmatprep.subr.bf16.mxu0 0
    %598 = vmatpush1.bf16.msra.mxu0 %v441
    %599 = vmatprep.subr.bf16.mxu0 0
    %600 = vmatpush1.bf16.msra.mxu0 %v440
    %601 = vmatprep.subr.bf16.mxu0 0
    %602 = vmatpush1.bf16.msra.mxu0 %v439
    %603 = vmatprep.subr.bf16.mxu0 0
    %604 = vmatpush1.bf16.msra.mxu0 %v438
    %605 = vmatprep.subr.bf16.mxu0 0
    %606 = vmatpush1.bf16.msra.mxu0 %v437
    %607 = vmatprep.subr.bf16.mxu0 0
    %608 = vmatpush1.bf16.msra.mxu0 %v436
    %609 = vmatprep.subr.bf16.mxu0 0
    %610 = vmatpush1.bf16.msra.mxu0 %v435
    %611 = vmatprep.subr.bf16.mxu0 0
    %612 = vmatpush2.bf16.msra.mxu0 %v450
    %613 = vmatprep.subr.bf16.mxu0 0
    %614 = vmatpush2.bf16.msra.mxu0 %v449
    %615 = vmatprep.subr.bf16.mxu0 0
    %616 = vmatpush2.bf16.msra.mxu0 %v448
    %617 = vmatprep.subr.bf16.mxu0 0
    %618 = vmatpush2.bf16.msra.mxu0 %v447
    %619 = vmatprep.subr.bf16.mxu0 0
    %620 = vmatpush2.bf16.msra.mxu0 %v446
    %621 = vmatprep.subr.bf16.mxu0 0
    %622 = vmatpush2.bf16.msra.mxu0 %v445
    %623 = vmatprep.subr.bf16.mxu0 0
    %624 = vmatpush2.bf16.msra.mxu0 %v444
    %625 = vmatprep.subr.bf16.mxu0 0
    %626 = vmatpush2.bf16.msra.mxu0 %v443
    %627 = vmatprep.mubr.bf16.mxu0 %v93
    %628 = vmatmul.mubr.bf16.gmra.mxu0 %v92
    %v629 = vpop.f32.mrf.mxu0
    %v630 = vadd.f32 %v565, %v629
    %v631 = vpop.f32.mrf.mxu0
    %v632 = vpop.f32.mrf.mxu0
    %v633 = vadd.f32 %v568, %v632
    %v634 = vpop.f32.mrf.mxu0
    %635 = vmatprep.mubr.bf16.mxu0 %v100
    %636 = vmatmul.mubr.bf16.gmra.mxu0 %v99
    %v637 = vpop.f32.mrf.mxu0
    %v638 = vadd.f32 %v573, %v637
    %v639 = vpop.f32.mrf.mxu0
    %v640 = vpop.f32.mrf.mxu0
    %v641 = vadd.f32 %v576, %v640
    %v642 = vpop.f32.mrf.mxu0
    %643 = vmatprep.mubr.bf16.mxu0 %v107
    %644 = vmatmul.mubr.bf16.gmra.mxu0 %v106
    %v645 = vpop.f32.mrf.mxu0
    %v646 = vadd.f32 %v581, %v645
    %v647 = vpop.f32.mrf.mxu0
    %v648 = vpop.f32.mrf.mxu0
    %v649 = vadd.f32 %v584, %v648
    %v650 = vpop.f32.mrf.mxu0
    %651 = vmatprep.mubr.bf16.mxu0 %v114
    %652 = vmatmul.mubr.bf16.gmra.mxu0 %v113
    %v653 = vpop.f32.mrf.mxu0
    %v654 = vadd.f32 %v589, %v653
    %v655 = vpop.f32.mrf.mxu0
    %v656 = vpop.f32.mrf.mxu0
    %v657 = vadd.f32 %v592, %v656
    %v658 = vpop.f32.mrf.mxu0
    %659 = vdwg.mxu0
    %660 = vmatprep.subr.bf16.mxu0 0
    %661 = vmatpush1.bf16.msra.mxu0 %v458
    %662 = vmatprep.subr.bf16.mxu0 0
    %663 = vmatpush1.bf16.msra.mxu0 %v457
    %664 = vmatprep.subr.bf16.mxu0 0
    %665 = vmatpush1.bf16.msra.mxu0 %v456
    %666 = vmatprep.subr.bf16.mxu0 0
    %667 = vmatpush1.bf16.msra.mxu0 %v455
    %668 = vmatprep.subr.bf16.mxu0 0
    %669 = vmatpush1.bf16.msra.mxu0 %v454
    %670 = vmatprep.subr.bf16.mxu0 0
    %671 = vmatpush1.bf16.msra.mxu0 %v453
    %672 = vmatprep.subr.bf16.mxu0 0
    %673 = vmatpush1.bf16.msra.mxu0 %v452
    %674 = vmatprep.subr.bf16.mxu0 0
    %675 = vmatpush1.bf16.msra.mxu0 %v451
    %676 = vmatprep.subr.bf16.mxu0 0
    %677 = vmatpush2.bf16.msra.mxu0 %v466
    %678 = vmatprep.subr.bf16.mxu0 0
    %679 = vmatpush2.bf16.msra.mxu0 %v465
    %680 = vmatprep.subr.bf16.mxu0 0
    %681 = vmatpush2.bf16.msra.mxu0 %v464
    %682 = vmatprep.subr.bf16.mxu0 0
    %683 = vmatpush2.bf16.msra.mxu0 %v463
    %684 = vmatprep.subr.bf16.mxu0 0
    %685 = vmatpush2.bf16.msra.mxu0 %v462
    %686 = vmatprep.subr.bf16.mxu0 0
    %687 = vmatpush2.bf16.msra.mxu0 %v461
    %688 = vmatprep.subr.bf16.mxu0 0
    %689 = vmatpush2.bf16.msra.mxu0 %v460
    %690 = vmatprep.subr.bf16.mxu0 0
    %691 = vmatpush2.bf16.msra.mxu0 %v459
    %692 = vmatprep.mubr.bf16.mxu0 %v95
    %693 = vmatmul.mubr.bf16.gmra.mxu0 %v94
    %v694 = vpop.f32.mrf.mxu0
    %v695 = vadd.f32 %v630, %v694
    %v696 = vpop.f32.mrf.mxu0
    %v697 = vpop.f32.mrf.mxu0
    %v698 = vadd.f32 %v633, %v697
    %v699 = vpop.f32.mrf.mxu0
    %700 = vmatprep.mubr.bf16.mxu0 %v102
    %701 = vmatmul.mubr.bf16.gmra.mxu0 %v101
    %v702 = vpop.f32.mrf.mxu0
    %v703 = vadd.f32 %v638, %v702
    %v704 = vpop.f32.mrf.mxu0
    %v705 = vpop.f32.mrf.mxu0
    %v706 = vadd.f32 %v641, %v705
    %v707 = vpop.f32.mrf.mxu0
    %708 = vmatprep.mubr.bf16.mxu0 %v109
    %709 = vmatmul.mubr.bf16.gmra.mxu0 %v108
    %v710 = vpop.f32.mrf.mxu0
    %v711 = vadd.f32 %v646, %v710
    %v712 = vpop.f32.mrf.mxu0
    %v713 = vpop.f32.mrf.mxu0
    %v714 = vadd.f32 %v649, %v713
    %v715 = vpop.f32.mrf.mxu0
    %716 = vmatprep.mubr.bf16.mxu0 %v116
    %717 = vmatmul.mubr.bf16.gmra.mxu0 %v115
    %v718 = vpop.f32.mrf.mxu0
    %v719 = vadd.f32 %v654, %v718
    %v720 = vpop.f32.mrf.mxu0
    %v721 = vpop.f32.mrf.mxu0
    %v722 = vadd.f32 %v657, %v721
    %v723 = vpop.f32.mrf.mxu0
    %724 = vdwg.mxu0
    %725 = vmatprep.subr.bf16.mxu0 0
    %726 = vmatpush1.bf16.msra.mxu0 0
    %727 = vmatprep.subr.bf16.mxu0 0
    %728 = vmatpush1.bf16.msra.mxu0 0
    %729 = vmatprep.subr.bf16.mxu0 0
    %730 = vmatpush1.bf16.msra.mxu0 0
    %731 = vmatprep.subr.bf16.mxu0 0
    %732 = vmatpush1.bf16.msra.mxu0 0
    %733 = vmatprep.subr.bf16.mxu0 0
    %734 = vmatpush1.bf16.msra.mxu0 0
    %735 = vmatprep.subr.bf16.mxu0 0
    %736 = vmatpush1.bf16.msra.mxu0 0
    %737 = vmatprep.subr.bf16.mxu0 0
    %738 = vmatpush1.bf16.msra.mxu0 0
    %739 = vmatprep.subr.bf16.mxu0 0
    %740 = vmatpush1.bf16.msra.mxu0 %v467
    %741 = vmatprep.subr.bf16.mxu0 0
    %742 = vmatpush2.bf16.msra.mxu0 0
    %743 = vmatprep.subr.bf16.mxu0 0
    %744 = vmatpush2.bf16.msra.mxu0 0
    %745 = vmatprep.subr.bf16.mxu0 0
    %746 = vmatpush2.bf16.msra.mxu0 0
    %747 = vmatprep.subr.bf16.mxu0 0
    %748 = vmatpush2.bf16.msra.mxu0 0
    %749 = vmatprep.subr.bf16.mxu0 0
    %750 = vmatpush2.bf16.msra.mxu0 0
    %751 = vmatprep.subr.bf16.mxu0 0
    %752 = vmatpush2.bf16.msra.mxu0 0
    %753 = vmatprep.subr.bf16.mxu0 0
    %754 = vmatpush2.bf16.msra.mxu0 0
    %755 = vmatprep.subr.bf16.mxu0 0
    %756 = vmatpush2.bf16.msra.mxu0 0
    %757 = vmatprep.mubr.bf16.mxu0 0
    %758 = vmatmul.mubr.bf16.gmra.mxu0 %v519
    %v759 = vpop.f32.mrf.mxu0
    %v760 = vadd.f32 %v695, %v759
    %v761 = vpop.f32.mrf.mxu0
    %v762 = vpop.f32.mrf.mxu0
    %v763 = vadd.f32 %v698, %v762
    %v764 = vpop.f32.mrf.mxu0
    %765 = vmatprep.mubr.bf16.mxu0 0
    %766 = vmatmul.mubr.bf16.gmra.mxu0 %v522
    %v767 = vpop.f32.mrf.mxu0
    %v768 = vadd.f32 %v703, %v767
    %v769 = vpop.f32.mrf.mxu0
    %v770 = vpop.f32.mrf.mxu0
    %v771 = vadd.f32 %v706, %v770
    %v772 = vpop.f32.mrf.mxu0
    %773 = vmatprep.mubr.bf16.mxu0 0
    %774 = vmatmul.mubr.bf16.gmra.mxu0 %v525
    %v775 = vpop.f32.mrf.mxu0
    %v776 = vadd.f32 %v711, %v775
    %v777 = vpop.f32.mrf.mxu0
    %v778 = vpop.f32.mrf.mxu0
    %v779 = vadd.f32 %v714, %v778
    %v780 = vpop.f32.mrf.mxu0
    %781 = vmatprep.mubr.bf16.mxu0 0
    %782 = vmatmul.mubr.bf16.gmra.mxu0 %v528
    %v783 = vpop.f32.mrf.mxu0
    %v784 = vadd.f32 %v719, %v783
    %v785 = vpop.f32.mrf.mxu0
    %v786 = vpop.f32.mrf.mxu0
    %v787 = vadd.f32 %v722, %v786
    %v788 = vpop.f32.mrf.mxu0
    %789 = vdwg.mxu0
    %v790 = vmax.f32 %v760, 0.0
    %v791 = vmax.f32 %v763, 0.0
    %v792 = vmax.f32 %v768, 0.0
    %v793 = vmax.f32 %v771, 0.0
    %v794 = vmax.f32 %v776, 0.0
    %v795 = vmax.f32 %v779, 0.0
    %v796 = vmax.f32 %v784, 0.0
    %v797 = vmax.f32 %v787, 0.0
    %v798 = vpack.c.bf16 %v791, %v790
    %v799 = vpack.c.bf16 %v793, %v792
    %v800 = vpack.c.bf16 %v795, %v794
    %v801 = vpack.c.bf16 %v797, %v796
    %v802 = vld [vmem:[%s3] sm:$0xf]
    %v803 = vld [vmem:[%s3 + $0x4] sm:$0xf]
    %v804 = vld [vmem:[%s3 + $0x8] sm:$0xf]
    %v805 = vld [vmem:[%s3 + $0xc] sm:$0xf]
    %v806 = vld [vmem:[%s3 + $0x10] sm:$0xf]
    %v807 = vld [vmem:[%s3 + $0x14] sm:$0xf]
    %v808 = vld [vmem:[%s3 + $0x18] sm:$0xf]
    %v809 = vld [vmem:[%s3 + $0x1c] sm:$0xf]
    %v810 = vld [vmem:[%s3 + $0x20] sm:$0xf]
    %v811 = vld [vmem:[%s3 + $0x24] sm:$0xf]
    %v812 = vld [vmem:[%s3 + $0x28] sm:$0xf]
    %v813 = vld [vmem:[%s3 + $0x2c] sm:$0xf]
    %v814 = vld [vmem:[%s3 + $0x30] sm:$0xf]
    %v815 = vld [vmem:[%s3 + $0x34] sm:$0xf]
    %v816 = vld [vmem:[%s3 + $0x38] sm:$0xf]
    %v817 = vld [vmem:[%s3 + $0x3c] sm:$0xf]
    %v818 = vld [vmem:[%s4] sm:$0x1]
    %v820 = vlaneseq
    %v821 = vshrl.u32 %v820, 7
    %v822 = vsub.s32 0, %v821
    %v823 = vrot.slane %v818, %v822
    %v841 = vunpack.c.l.b16 %v802
    %v842 = vunpack.c.l.b16 %v803
    %v843 = vunpack.c.l.b16 %v804
    %v844 = vunpack.c.l.b16 %v805
    %v845 = vunpack.c.l.b16 %v806
    %v846 = vunpack.c.l.b16 %v807
    %v847 = vunpack.c.l.b16 %v808
    %v848 = vunpack.c.l.b16 %v809
    %v849 = vunpack.c.l.b16 %v810
    %v850 = vunpack.c.l.b16 %v811
    %v851 = vunpack.c.l.b16 %v812
    %v852 = vunpack.c.l.b16 %v813
    %v853 = vunpack.c.l.b16 %v814
    %v854 = vunpack.c.l.b16 %v815
    %v855 = vunpack.c.l.b16 %v816
    %v856 = vunpack.c.l.b16 %v817
    %v857 = vpack.c.b16 %v842, %v841
    %v858 = vpack.c.b16 %v844, %v843
    %v859 = vpack.c.b16 %v846, %v845
    %v860 = vpack.c.b16 %v848, %v847
    %v861 = vpack.c.b16 %v850, %v849
    %v862 = vpack.c.b16 %v852, %v851
    %v863 = vpack.c.b16 %v854, %v853
    %v864 = vpack.c.b16 %v856, %v855
    %873 = vmatprep.subr.bf16.mxu0 0
    %874 = vmatpush1.bf16.msra.mxu0 %v864
    %875 = vmatprep.subr.bf16.mxu0 0
    %876 = vmatpush1.bf16.msra.mxu0 %v863
    %877 = vmatprep.subr.bf16.mxu0 0
    %878 = vmatpush1.bf16.msra.mxu0 %v862
    %879 = vmatprep.subr.bf16.mxu0 0
    %880 = vmatpush1.bf16.msra.mxu0 %v861
    %881 = vmatprep.subr.bf16.mxu0 0
    %882 = vmatpush1.bf16.msra.mxu0 %v860
    %883 = vmatprep.subr.bf16.mxu0 0
    %884 = vmatpush1.bf16.msra.mxu0 %v859
    %885 = vmatprep.subr.bf16.mxu0 0
    %886 = vmatpush1.bf16.msra.mxu0 %v858
    %887 = vmatprep.subr.bf16.mxu0 0
    %888 = vmatpush1.bf16.msra.mxu0 %v857
    %889 = vmatprep.subr.bf16.mxu0 0
    %890 = vmatpush2.bf16.msra.mxu0 0
    %891 = vmatprep.subr.bf16.mxu0 0
    %892 = vmatpush2.bf16.msra.mxu0 0
    %893 = vmatprep.subr.bf16.mxu0 0
    %894 = vmatpush2.bf16.msra.mxu0 0
    %895 = vmatprep.subr.bf16.mxu0 0
    %896 = vmatpush2.bf16.msra.mxu0 0
    %897 = vmatprep.subr.bf16.mxu0 0
    %898 = vmatpush2.bf16.msra.mxu0 0
    %899 = vmatprep.subr.bf16.mxu0 0
    %900 = vmatpush2.bf16.msra.mxu0 0
    %901 = vmatprep.subr.bf16.mxu0 0
    %902 = vmatpush2.bf16.msra.mxu0 0
    %903 = vmatprep.subr.bf16.mxu0 0
    %904 = vmatpush2.bf16.msra.mxu0 0
    %905 = vmatprep.mubr.bf16.mxu0 0
    %906 = vmatmul.mubr.bf16.gmra.mxu0 %v798
    %v907 = vpop.f32.mrf.mxu0
    %v908 = vadd.f32 %v823, %v907
    %v909 = vpop.f32.mrf.mxu0
    %v910 = vpop.f32.mrf.mxu0
    %v911 = vadd.f32 %v823, %v910
    %v912 = vpop.f32.mrf.mxu0
    %913 = vmatprep.mubr.bf16.mxu0 0
    %914 = vmatmul.mubr.bf16.gmra.mxu0 %v799
    %v915 = vpop.f32.mrf.mxu0
    %v916 = vadd.f32 %v823, %v915
    %v917 = vpop.f32.mrf.mxu0
    %v918 = vpop.f32.mrf.mxu0
    %v919 = vadd.f32 %v823, %v918
    %v920 = vpop.f32.mrf.mxu0
    %921 = vmatprep.mubr.bf16.mxu0 0
    %922 = vmatmul.mubr.bf16.gmra.mxu0 %v800
    %v923 = vpop.f32.mrf.mxu0
    %v924 = vadd.f32 %v823, %v923
    %v925 = vpop.f32.mrf.mxu0
    %v926 = vpop.f32.mrf.mxu0
    %v927 = vadd.f32 %v823, %v926
    %v928 = vpop.f32.mrf.mxu0
    %929 = vmatprep.mubr.bf16.mxu0 0
    %930 = vmatmul.mubr.bf16.gmra.mxu0 %v801
    %v931 = vpop.f32.mrf.mxu0
    %v932 = vadd.f32 %v823, %v931
    %v933 = vpop.f32.mrf.mxu0
    %v934 = vpop.f32.mrf.mxu0
    %v935 = vadd.f32 %v823, %v934
    %v936 = vpop.f32.mrf.mxu0
    %937 = vdwg.mxu0
    %v938 = vmax.f32 %v908, 0.0
    %v939 = vmax.f32 %v911, 0.0
    %v940 = vmax.f32 %v916, 0.0
    %v941 = vmax.f32 %v919, 0.0
    %v942 = vmax.f32 %v924, 0.0
    %v943 = vmax.f32 %v927, 0.0
    %v944 = vmax.f32 %v932, 0.0
    %v945 = vmax.f32 %v935, 0.0
    %v946 = vpack.c.bf16 %v939, %v938
    %v947 = vpack.c.bf16 %v941, %v940
    %v948 = vpack.c.bf16 %v943, %v942
    %v949 = vpack.c.bf16 %v945, %v944
    %v950 = vld [vmem:[%s5] sm:$0xf]
    %v951 = vld [vmem:[%s5 + $0x4] sm:$0xf]
    %v952 = vld [vmem:[%s5 + $0x8] sm:$0xf]
    %v953 = vld [vmem:[%s5 + $0xc] sm:$0xf]
    %v954 = vld [vmem:[%s6] sm:$0x1]
    %v956 = vlaneseq
    %v957 = vshrl.u32 %v956, 7
    %v958 = vsub.s32 0, %v957
    %v959 = vrot.slane %v954, %v958
    %v965 = vunpack.c.l.b16 %v950
    %v966 = vunpack.c.l.b16 %v951
    %v967 = vunpack.c.l.b16 %v952
    %v968 = vunpack.c.l.b16 %v953
    %v969 = vpack.c.b16 %v966, %v965
    %v970 = vpack.c.b16 %v968, %v967
    %vm973 = vcmask 261120
    %v975 = vsel %vm973, %v946, 0
    %v978 = vsel %vm973, %v947, 0
    %v981 = vsel %vm973, %v948, 0
    %v984 = vsel %vm973, %v949, 0
    %986 = vmatprep.subr.bf16.mxu0 0
    %987 = vmatpush1.bf16.msra.mxu0 0
    %988 = vmatprep.subr.bf16.mxu0 0
    %989 = vmatpush1.bf16.msra.mxu0 0
    %990 = vmatprep.subr.bf16.mxu0 0
    %991 = vmatpush1.bf16.msra.mxu0 0
    %992 = vmatprep.subr.bf16.mxu0 0
    %993 = vmatpush1.bf16.msra.mxu0 0
    %994 = vmatprep.subr.bf16.mxu0 0
    %995 = vmatpush1.bf16.msra.mxu0 0
    %996 = vmatprep.subr.bf16.mxu0 0
    %997 = vmatpush1.bf16.msra.mxu0 0
    %998 = vmatprep.subr.bf16.mxu0 0
    %999 = vmatpush1.bf16.msra.mxu0 %v970
    %1000 = vmatprep.subr.bf16.mxu0 0
    %1001 = vmatpush1.bf16.msra.mxu0 %v969
    %1002 = vmatprep.subr.bf16.mxu0 0
    %1003 = vmatpush2.bf16.msra.mxu0 0
    %1004 = vmatprep.subr.bf16.mxu0 0
    %1005 = vmatpush2.bf16.msra.mxu0 0
    %1006 = vmatprep.subr.bf16.mxu0 0
    %1007 = vmatpush2.bf16.msra.mxu0 0
    %1008 = vmatprep.subr.bf16.mxu0 0
    %1009 = vmatpush2.bf16.msra.mxu0 0
    %1010 = vmatprep.subr.bf16.mxu0 0
    %1011 = vmatpush2.bf16.msra.mxu0 0
    %1012 = vmatprep.subr.bf16.mxu0 0
    %1013 = vmatpush2.bf16.msra.mxu0 0
    %1014 = vmatprep.subr.bf16.mxu0 0
    %1015 = vmatpush2.bf16.msra.mxu0 0
    %1016 = vmatprep.subr.bf16.mxu0 0
    %1017 = vmatpush2.bf16.msra.mxu0 0
    %1018 = vmatprep.mubr.bf16.mxu0 0
    %1019 = vmatmul.mubr.bf16.gmra.mxu0 %v975
    %v1020 = vpop.f32.mrf.mxu0
    %v1021 = vadd.f32 %v959, %v1020
    %v1022 = vpop.f32.mrf.mxu0
    %v1023 = vpop.f32.mrf.mxu0
    %v1024 = vadd.f32 %v959, %v1023
    %v1025 = vpop.f32.mrf.mxu0
    %1026 = vmatprep.mubr.bf16.mxu0 0
    %1027 = vmatmul.mubr.bf16.gmra.mxu0 %v978
    %v1028 = vpop.f32.mrf.mxu0
    %v1029 = vadd.f32 %v959, %v1028
    %v1030 = vpop.f32.mrf.mxu0
    %v1031 = vpop.f32.mrf.mxu0
    %v1032 = vadd.f32 %v959, %v1031
    %v1033 = vpop.f32.mrf.mxu0
    %1034 = vmatprep.mubr.bf16.mxu0 0
    %1035 = vmatmul.mubr.bf16.gmra.mxu0 %v981
    %v1036 = vpop.f32.mrf.mxu0
    %v1037 = vadd.f32 %v959, %v1036
    %v1038 = vpop.f32.mrf.mxu0
    %v1039 = vpop.f32.mrf.mxu0
    %v1040 = vadd.f32 %v959, %v1039
    %v1041 = vpop.f32.mrf.mxu0
    %1042 = vmatprep.mubr.bf16.mxu0 0
    %1043 = vmatmul.mubr.bf16.gmra.mxu0 %v984
    %v1044 = vpop.f32.mrf.mxu0
    %v1045 = vadd.f32 %v959, %v1044
    %v1046 = vpop.f32.mrf.mxu0
    %v1047 = vpop.f32.mrf.mxu0
    %v1048 = vadd.f32 %v959, %v1047
    %v1049 = vpop.f32.mrf.mxu0
    %1050 = vdwg.mxu0
    %v1051 = vmax.f32 %v1021, 0.0
    %v1052 = vmax.f32 %v1024, 0.0
    %v1053 = vmax.f32 %v1029, 0.0
    %v1054 = vmax.f32 %v1032, 0.0
    %v1055 = vmax.f32 %v1037, 0.0
    %v1056 = vmax.f32 %v1040, 0.0
    %v1057 = vmax.f32 %v1045, 0.0
    %v1058 = vmax.f32 %v1048, 0.0
    %v1059 = vpack.c.bf16 %v1052, %v1051
    %v1060 = vpack.c.bf16 %v1054, %v1053
    %v1061 = vpack.c.bf16 %v1056, %v1055
    %v1062 = vpack.c.bf16 %v1058, %v1057
    %v1063 = vld [vmem:[%s7] sm:$0xff]
    %v1064 = vld [vmem:[%s7 + $0x8] sm:$0xff]
    %v1065 = vld [vmem:[%s7 + $0x10] sm:$0xff]
    %v1066 = vld [vmem:[%s7 + $0x18] sm:$0xf]
    %v1067 = vld [vmem:[%s7 + $0x1c] sm:$0xff]
    %v1068 = vld [vmem:[%s7 + $0x24] sm:$0xff]
    %v1069 = vld [vmem:[%s7 + $0x2c] sm:$0xff]
    %v1070 = vld [vmem:[%s7 + $0x34] sm:$0xf]
    %v1071 = vld [vmem:[%s7 + $0x38] sm:$0xff]
    %v1072 = vld [vmem:[%s7 + $0x40] sm:$0xff]
    %v1073 = vld [vmem:[%s7 + $0x48] sm:$0xff]
    %v1074 = vld [vmem:[%s7 + $0x50] sm:$0xf]
    %v1075 = vld [vmem:[%s7 + $0x54] sm:$0xff]
    %v1076 = vld [vmem:[%s7 + $0x5c] sm:$0xff]
    %v1077 = vld [vmem:[%s7 + $0x64] sm:$0xff]
    %v1078 = vld [vmem:[%s7 + $0x6c] sm:$0xf]
    %v1079 = vld [vmem:[%s7 + $0x70] sm:$0xff]
    %v1080 = vld [vmem:[%s7 + $0x78] sm:$0xff]
    %v1081 = vld [vmem:[%s7 + $0x80] sm:$0xff]
    %v1082 = vld [vmem:[%s7 + $0x88] sm:$0xf]
    %v1083 = vld [vmem:[%s7 + $0x8c] sm:$0xff]
    %v1084 = vld [vmem:[%s7 + $0x94] sm:$0xff]
    %v1085 = vld [vmem:[%s7 + $0x9c] sm:$0xff]
    %v1086 = vld [vmem:[%s7 + $0xa4] sm:$0xf]
    %v1087 = vld [vmem:[%s7 + $0xa8] sm:$0xff]
    %v1088 = vld [vmem:[%s7 + $0xb0] sm:$0xff]
    %v1089 = vld [vmem:[%s7 + $0xb8] sm:$0xff]
    %v1090 = vld [vmem:[%s7 + $0xc0] sm:$0xf]
    %v1091 = vld [vmem:[%s7 + $0xc4] sm:$0xff]
    %v1092 = vld [vmem:[%s7 + $0xcc] sm:$0xff]
    %v1093 = vld [vmem:[%s7 + $0xd4] sm:$0xff]
    %v1094 = vld [vmem:[%s7 + $0xdc] sm:$0xf]
    %v1095 = vld [vmem:[%s7 + $0xe0] sm:$0xff]
    %v1096 = vld [vmem:[%s7 + $0xe8] sm:$0xff]
    %v1097 = vld [vmem:[%s7 + $0xf0] sm:$0xff]
    %v1098 = vld [vmem:[%s7 + $0xf8] sm:$0xf]
    %v1099 = vld [vmem:[%s7 + $0xfc] sm:$0xff]
    %v1100 = vld [vmem:[%s7 + $0x104] sm:$0xff]
    %v1101 = vld [vmem:[%s7 + $0x10c] sm:$0xff]
    %v1102 = vld [vmem:[%s7 + $0x114] sm:$0xf]
    %v1103 = vld [vmem:[%s7 + $0x118] sm:$0xff]
    %v1104 = vld [vmem:[%s7 + $0x120] sm:$0xff]
    %v1105 = vld [vmem:[%s7 + $0x128] sm:$0xff]
    %v1106 = vld [vmem:[%s7 + $0x130] sm:$0xf]
    %v1107 = vld [vmem:[%s7 + $0x134] sm:$0xff]
    %v1108 = vld [vmem:[%s7 + $0x13c] sm:$0xff]
    %v1109 = vld [vmem:[%s7 + $0x144] sm:$0xff]
    %v1110 = vld [vmem:[%s7 + $0x14c] sm:$0xf]
    %v1111 = vld [vmem:[%s7 + $0x150] sm:$0xff]
    %v1112 = vld [vmem:[%s7 + $0x158] sm:$0xff]
    %v1113 = vld [vmem:[%s7 + $0x160] sm:$0xff]
    %v1114 = vld [vmem:[%s7 + $0x168] sm:$0xf]
    %v1115 = vld [vmem:[%s7 + $0x16c] sm:$0xff]
    %v1116 = vld [vmem:[%s7 + $0x174] sm:$0xff]
    %v1117 = vld [vmem:[%s7 + $0x17c] sm:$0xff]
    %v1118 = vld [vmem:[%s7 + $0x184] sm:$0xf]
    %v1119 = vld [vmem:[%s7 + $0x188] sm:$0xff]
    %v1120 = vld [vmem:[%s7 + $0x190] sm:$0xff]
    %v1121 = vld [vmem:[%s7 + $0x198] sm:$0xff]
    %v1122 = vld [vmem:[%s7 + $0x1a0] sm:$0xf]
    %v1123 = vld [vmem:[%s7 + $0x1a4] sm:$0xff]
    %v1124 = vld [vmem:[%s7 + $0x1ac] sm:$0xff]
    %v1125 = vld [vmem:[%s7 + $0x1b4] sm:$0xff]
    %v1126 = vld [vmem:[%s7 + $0x1bc] sm:$0xf]
    %v1127 = vld [vmem:[%s8] sm:$0x7f]
    %v1129 = vlaneseq
    %v1130 = vshrl.u32 %v1129, 7
    %v1131 = vsub.s32 0, %v1130
    %v1132 = vrot.slane %v1127, %v1131
    %v1133 = vlaneseq
    %v1134 = vshrl.u32 %v1133, 7
    %v1135 = vsub.s32 1, %v1134
    %v1136 = vrot.slane %v1127, %v1135
    %v1137 = vlaneseq
    %v1138 = vshrl.u32 %v1137, 7
    %v1139 = vsub.s32 2, %v1138
    %v1140 = vrot.slane %v1127, %v1139
    %v1141 = vlaneseq
    %v1142 = vshrl.u32 %v1141, 7
    %v1143 = vsub.s32 3, %v1142
    %v1144 = vrot.slane %v1127, %v1143
    %v1145 = vlaneseq
    %v1146 = vshrl.u32 %v1145, 7
    %v1147 = vsub.s32 4, %v1146
    %v1148 = vrot.slane %v1127, %v1147
    %v1149 = vlaneseq
    %v1150 = vshrl.u32 %v1149, 7
    %v1151 = vsub.s32 5, %v1150
    %v1152 = vrot.slane %v1127, %v1151
    %v1153 = vlaneseq
    %v1154 = vshrl.u32 %v1153, 7
    %v1155 = vsub.s32 6, %v1154
    %v1156 = vrot.slane %v1127, %v1155
    %v1228 = vunpack.c.l.b16 %v1063
    %v1229 = vunpack.c.h.b16 %v1063
    %v1230 = vunpack.c.l.b16 %v1064
    %v1231 = vunpack.c.h.b16 %v1064
    %v1232 = vunpack.c.l.b16 %v1065
    %v1233 = vunpack.c.h.b16 %v1065
    %v1234 = vunpack.c.l.b16 %v1066
    %v1235 = vunpack.c.l.b16 %v1067
    %v1236 = vunpack.c.h.b16 %v1067
    %v1237 = vunpack.c.l.b16 %v1068
    %v1238 = vunpack.c.h.b16 %v1068
    %v1239 = vunpack.c.l.b16 %v1069
    %v1240 = vunpack.c.h.b16 %v1069
    %v1241 = vunpack.c.l.b16 %v1070
    %v1242 = vunpack.c.l.b16 %v1071
    %v1243 = vunpack.c.h.b16 %v1071
    %v1244 = vunpack.c.l.b16 %v1072
    %v1245 = vunpack.c.h.b16 %v1072
    %v1246 = vunpack.c.l.b16 %v1073
    %v1247 = vunpack.c.h.b16 %v1073
    %v1248 = vunpack.c.l.b16 %v1074
    %v1249 = vunpack.c.l.b16 %v1075
    %v1250 = vunpack.c.h.b16 %v1075
    %v1251 = vunpack.c.l.b16 %v1076
    %v1252 = vunpack.c.h.b16 %v1076
    %v1253 = vunpack.c.l.b16 %v1077
    %v1254 = vunpack.c.h.b16 %v1077
    %v1255 = vunpack.c.l.b16 %v1078
    %v1256 = vunpack.c.l.b16 %v1079
    %v1257 = vunpack.c.h.b16 %v1079
    %v1258 = vunpack.c.l.b16 %v1080
    %v1259 = vunpack.c.h.b16 %v1080
    %v1260 = vunpack.c.l.b16 %v1081
    %v1261 = vunpack.c.h.b16 %v1081
    %v1262 = vunpack.c.l.b16 %v1082
    %v1263 = vunpack.c.l.b16 %v1083
    %v1264 = vunpack.c.h.b16 %v1083
    %v1265 = vunpack.c.l.b16 %v1084
    %v1266 = vunpack.c.h.b16 %v1084
    %v1267 = vunpack.c.l.b16 %v1085
    %v1268 = vunpack.c.h.b16 %v1085
    %v1269 = vunpack.c.l.b16 %v1086
    %v1270 = vunpack.c.l.b16 %v1087
    %v1271 = vunpack.c.h.b16 %v1087
    %v1272 = vunpack.c.l.b16 %v1088
    %v1273 = vunpack.c.h.b16 %v1088
    %v1274 = vunpack.c.l.b16 %v1089
    %v1275 = vunpack.c.h.b16 %v1089
    %v1276 = vunpack.c.l.b16 %v1090
    %v1277 = vunpack.c.l.b16 %v1091
    %v1278 = vunpack.c.h.b16 %v1091
    %v1279 = vunpack.c.l.b16 %v1092
    %v1280 = vunpack.c.h.b16 %v1092
    %v1281 = vunpack.c.l.b16 %v1093
    %v1282 = vunpack.c.h.b16 %v1093
    %v1283 = vunpack.c.l.b16 %v1094
    %v1284 = vunpack.c.l.b16 %v1095
    %v1285 = vunpack.c.h.b16 %v1095
    %v1286 = vunpack.c.l.b16 %v1096
    %v1287 = vunpack.c.h.b16 %v1096
    %v1288 = vunpack.c.l.b16 %v1097
    %v1289 = vunpack.c.h.b16 %v1097
    %v1290 = vunpack.c.l.b16 %v1098
    %v1291 = vunpack.c.l.b16 %v1099
    %v1292 = vunpack.c.h.b16 %v1099
    %v1293 = vunpack.c.l.b16 %v1100
    %v1294 = vunpack.c.h.b16 %v1100
    %v1295 = vunpack.c.l.b16 %v1101
    %v1296 = vunpack.c.h.b16 %v1101
    %v1297 = vunpack.c.l.b16 %v1102
    %v1298 = vunpack.c.l.b16 %v1103
    %v1299 = vunpack.c.h.b16 %v1103
    %v1300 = vunpack.c.l.b16 %v1104
    %v1301 = vunpack.c.h.b16 %v1104
    %v1302 = vunpack.c.l.b16 %v1105
    %v1303 = vunpack.c.h.b16 %v1105
    %v1304 = vunpack.c.l.b16 %v1106
    %v1305 = vunpack.c.l.b16 %v1107
    %v1306 = vunpack.c.h.b16 %v1107
    %v1307 = vunpack.c.l.b16 %v1108
    %v1308 = vunpack.c.h.b16 %v1108
    %v1309 = vunpack.c.l.b16 %v1109
    %v1310 = vunpack.c.h.b16 %v1109
    %v1311 = vunpack.c.l.b16 %v1110
    %v1312 = vunpack.c.l.b16 %v1111
    %v1313 = vunpack.c.h.b16 %v1111
    %v1314 = vunpack.c.l.b16 %v1112
    %v1315 = vunpack.c.h.b16 %v1112
    %v1316 = vunpack.c.l.b16 %v1113
    %v1317 = vunpack.c.h.b16 %v1113
    %v1318 = vunpack.c.l.b16 %v1114
    %v1319 = vunpack.c.l.b16 %v1115
    %v1320 = vunpack.c.h.b16 %v1115
    %v1321 = vunpack.c.l.b16 %v1116
    %v1322 = vunpack.c.h.b16 %v1116
    %v1323 = vunpack.c.l.b16 %v1117
    %v1324 = vunpack.c.h.b16 %v1117
    %v1325 = vunpack.c.l.b16 %v1118
    %v1326 = vunpack.c.l.b16 %v1119
    %v1327 = vunpack.c.h.b16 %v1119
    %v1328 = vunpack.c.l.b16 %v1120
    %v1329 = vunpack.c.h.b16 %v1120
    %v1330 = vunpack.c.l.b16 %v1121
    %v1331 = vunpack.c.h.b16 %v1121
    %v1332 = vunpack.c.l.b16 %v1122
    %v1333 = vunpack.c.l.b16 %v1123
    %v1334 = vunpack.c.h.b16 %v1123
    %v1335 = vunpack.c.l.b16 %v1124
    %v1336 = vunpack.c.h.b16 %v1124
    %v1337 = vunpack.c.l.b16 %v1125
    %v1338 = vunpack.c.h.b16 %v1125
    %v1339 = vunpack.c.l.b16 %v1126
    %v1340 = vpack.c.b16 %v1235, %v1228
    %v1341 = vpack.c.b16 %v1236, %v1229
    %v1342 = vpack.c.b16 %v1237, %v1230
    %v1343 = vpack.c.b16 %v1238, %v1231
    %v1344 = vpack.c.b16 %v1239, %v1232
    %v1345 = vpack.c.b16 %v1240, %v1233
    %v1346 = vpack.c.b16 %v1241, %v1234
    %v1347 = vpack.c.b16 %v1249, %v1242
    %v1348 = vpack.c.b16 %v1250, %v1243
    %v1349 = vpack.c.b16 %v1251, %v1244
    %v1350 = vpack.c.b16 %v1252, %v1245
    %v1351 = vpack.c.b16 %v1253, %v1246
    %v1352 = vpack.c.b16 %v1254, %v1247
    %v1353 = vpack.c.b16 %v1255, %v1248
    %v1354 = vpack.c.b16 %v1263, %v1256
    %v1355 = vpack.c.b16 %v1264, %v1257
    %v1356 = vpack.c.b16 %v1265, %v1258
    %v1357 = vpack.c.b16 %v1266, %v1259
    %v1358 = vpack.c.b16 %v1267, %v1260
    %v1359 = vpack.c.b16 %v1268, %v1261
    %v1360 = vpack.c.b16 %v1269, %v1262
    %v1361 = vpack.c.b16 %v1277, %v1270
    %v1362 = vpack.c.b16 %v1278, %v1271
    %v1363 = vpack.c.b16 %v1279, %v1272
    %v1364 = vpack.c.b16 %v1280, %v1273
    %v1365 = vpack.c.b16 %v1281, %v1274
    %v1366 = vpack.c.b16 %v1282, %v1275
    %v1367 = vpack.c.b16 %v1283, %v1276
    %v1368 = vpack.c.b16 %v1291, %v1284
    %v1369 = vpack.c.b16 %v1292, %v1285
    %v1370 = vpack.c.b16 %v1293, %v1286
    %v1371 = vpack.c.b16 %v1294, %v1287
    %v1372 = vpack.c.b16 %v1295, %v1288
    %v1373 = vpack.c.b16 %v1296, %v1289
    %v1374 = vpack.c.b16 %v1297, %v1290
    %v1375 = vpack.c.b16 %v1305, %v1298
    %v1376 = vpack.c.b16 %v1306, %v1299
    %v1377 = vpack.c.b16 %v1307, %v1300
    %v1378 = vpack.c.b16 %v1308, %v1301
    %v1379 = vpack.c.b16 %v1309, %v1302
    %v1380 = vpack.c.b16 %v1310, %v1303
    %v1381 = vpack.c.b16 %v1311, %v1304
    %v1382 = vpack.c.b16 %v1319, %v1312
    %v1383 = vpack.c.b16 %v1320, %v1313
    %v1384 = vpack.c.b16 %v1321, %v1314
    %v1385 = vpack.c.b16 %v1322, %v1315
    %v1386 = vpack.c.b16 %v1323, %v1316
    %v1387 = vpack.c.b16 %v1324, %v1317
    %v1388 = vpack.c.b16 %v1325, %v1318
    %v1389 = vpack.c.b16 %v1333, %v1326
    %v1390 = vpack.c.b16 %v1334, %v1327
    %v1391 = vpack.c.b16 %v1335, %v1328
    %v1392 = vpack.c.b16 %v1336, %v1329
    %v1393 = vpack.c.b16 %v1337, %v1330
    %v1394 = vpack.c.b16 %v1338, %v1331
    %v1395 = vpack.c.b16 %v1339, %v1332
    %1452 = vmatprep.subr.bf16.mxu0 %v1390
    %1453 = vmatpush1.bf16.msra.mxu0 %v1389
    %1454 = vmatprep.subr.bf16.mxu0 %v1383
    %1455 = vmatpush1.bf16.msra.mxu0 %v1382
    %1456 = vmatprep.subr.bf16.mxu0 %v1376
    %1457 = vmatpush1.bf16.msra.mxu0 %v1375
    %1458 = vmatprep.subr.bf16.mxu0 %v1369
    %1459 = vmatpush1.bf16.msra.mxu0 %v1368
    %1460 = vmatprep.subr.bf16.mxu0 %v1362
    %1461 = vmatpush1.bf16.msra.mxu0 %v1361
    %1462 = vmatprep.subr.bf16.mxu0 %v1355
    %1463 = vmatpush1.bf16.msra.mxu0 %v1354
    %1464 = vmatprep.subr.bf16.mxu0 %v1348
    %1465 = vmatpush1.bf16.msra.mxu0 %v1347
    %1466 = vmatprep.subr.bf16.mxu0 %v1341
    %1467 = vmatpush1.bf16.msra.mxu0 %v1340
    %1468 = vmatprep.subr.bf16.mxu0 0
    %1469 = vmatpush2.bf16.msra.mxu0 0
    %1470 = vmatprep.subr.bf16.mxu0 0
    %1471 = vmatpush2.bf16.msra.mxu0 0
    %1472 = vmatprep.subr.bf16.mxu0 0
    %1473 = vmatpush2.bf16.msra.mxu0 0
    %1474 = vmatprep.subr.bf16.mxu0 0
    %1475 = vmatpush2.bf16.msra.mxu0 0
    %1476 = vmatprep.subr.bf16.mxu0 0
    %1477 = vmatpush2.bf16.msra.mxu0 0
    %1478 = vmatprep.subr.bf16.mxu0 0
    %1479 = vmatpush2.bf16.msra.mxu0 0
    %1480 = vmatprep.subr.bf16.mxu0 0
    %1481 = vmatpush2.bf16.msra.mxu0 0
    %1482 = vmatprep.subr.bf16.mxu0 0
    %1483 = vmatpush2.bf16.msra.mxu0 0
    %1484 = vmatprep.mubr.bf16.mxu0 0
    %1485 = vmatmul.mubr.bf16.gmra.mxu0 %v1059
    %v1486 = vpop.f32.mrf.mxu0
    %v1487 = vadd.f32 %v1132, %v1486
    %v1488 = vpop.f32.mrf.mxu0
    %v1489 = vadd.f32 %v1136, %v1488
    %v1490 = vpop.f32.mrf.mxu0
    %v1491 = vadd.f32 %v1132, %v1490
    %v1492 = vpop.f32.mrf.mxu0
    %v1493 = vadd.f32 %v1136, %v1492
    %1494 = vmatprep.mubr.bf16.mxu0 0
    %1495 = vmatmul.mubr.bf16.gmra.mxu0 %v1060
    %v1496 = vpop.f32.mrf.mxu0
    %v1497 = vadd.f32 %v1132, %v1496
    %v1498 = vpop.f32.mrf.mxu0
    %v1499 = vadd.f32 %v1136, %v1498
    %v1500 = vpop.f32.mrf.mxu0
    %v1501 = vadd.f32 %v1132, %v1500
    %v1502 = vpop.f32.mrf.mxu0
    %v1503 = vadd.f32 %v1136, %v1502
    %1504 = vmatprep.mubr.bf16.mxu0 0
    %1505 = vmatmul.mubr.bf16.gmra.mxu0 %v1061
    %v1506 = vpop.f32.mrf.mxu0
    %v1507 = vadd.f32 %v1132, %v1506
    %v1508 = vpop.f32.mrf.mxu0
    %v1509 = vadd.f32 %v1136, %v1508
    %v1510 = vpop.f32.mrf.mxu0
    %v1511 = vadd.f32 %v1132, %v1510
    %v1512 = vpop.f32.mrf.mxu0
    %v1513 = vadd.f32 %v1136, %v1512
    %1514 = vmatprep.mubr.bf16.mxu0 0
    %1515 = vmatmul.mubr.bf16.gmra.mxu0 %v1062
    %v1516 = vpop.f32.mrf.mxu0
    %v1517 = vadd.f32 %v1132, %v1516
    %v1518 = vpop.f32.mrf.mxu0
    %v1519 = vadd.f32 %v1136, %v1518
    %v1520 = vpop.f32.mrf.mxu0
    %v1521 = vadd.f32 %v1132, %v1520
    %v1522 = vpop.f32.mrf.mxu0
    %v1523 = vadd.f32 %v1136, %v1522
    %1524 = vdwg.mxu0
    %1525 = vmatprep.subr.bf16.mxu0 %v1392
    %1526 = vmatpush1.bf16.msra.mxu0 %v1391
    %1527 = vmatprep.subr.bf16.mxu0 %v1385
    %1528 = vmatpush1.bf16.msra.mxu0 %v1384
    %1529 = vmatprep.subr.bf16.mxu0 %v1378
    %1530 = vmatpush1.bf16.msra.mxu0 %v1377
    %1531 = vmatprep.subr.bf16.mxu0 %v1371
    %1532 = vmatpush1.bf16.msra.mxu0 %v1370
    %1533 = vmatprep.subr.bf16.mxu0 %v1364
    %1534 = vmatpush1.bf16.msra.mxu0 %v1363
    %1535 = vmatprep.subr.bf16.mxu0 %v1357
    %1536 = vmatpush1.bf16.msra.mxu0 %v1356
    %1537 = vmatprep.subr.bf16.mxu0 %v1350
    %1538 = vmatpush1.bf16.msra.mxu0 %v1349
    %1539 = vmatprep.subr.bf16.mxu0 %v1343
    %1540 = vmatpush1.bf16.msra.mxu0 %v1342
    %1541 = vmatprep.subr.bf16.mxu0 0
    %1542 = vmatpush2.bf16.msra.mxu0 0
    %1543 = vmatprep.subr.bf16.mxu0 0
    %1544 = vmatpush2.bf16.msra.mxu0 0
    %1545 = vmatprep.subr.bf16.mxu0 0
    %1546 = vmatpush2.bf16.msra.mxu0 0
    %1547 = vmatprep.subr.bf16.mxu0 0
    %1548 = vmatpush2.bf16.msra.mxu0 0
    %1549 = vmatprep.subr.bf16.mxu0 0
    %1550 = vmatpush2.bf16.msra.mxu0 0
    %1551 = vmatprep.subr.bf16.mxu0 0
    %1552 = vmatpush2.bf16.msra.mxu0 0
    %1553 = vmatprep.subr.bf16.mxu0 0
    %1554 = vmatpush2.bf16.msra.mxu0 0
    %1555 = vmatprep.subr.bf16.mxu0 0
    %1556 = vmatpush2.bf16.msra.mxu0 0
    %1557 = vmatprep.mubr.bf16.mxu0 0
    %1558 = vmatmul.mubr.bf16.gmra.mxu0 %v1059
    %v1559 = vpop.f32.mrf.mxu0
    %v1560 = vadd.f32 %v1140, %v1559
    %v1561 = vpop.f32.mrf.mxu0
    %v1562 = vadd.f32 %v1144, %v1561
    %v1563 = vpop.f32.mrf.mxu0
    %v1564 = vadd.f32 %v1140, %v1563
    %v1565 = vpop.f32.mrf.mxu0
    %v1566 = vadd.f32 %v1144, %v1565
    %1567 = vmatprep.mubr.bf16.mxu0 0
    %1568 = vmatmul.mubr.bf16.gmra.mxu0 %v1060
    %v1569 = vpop.f32.mrf.mxu0
    %v1570 = vadd.f32 %v1140, %v1569
    %v1571 = vpop.f32.mrf.mxu0
    %v1572 = vadd.f32 %v1144, %v1571
    %v1573 = vpop.f32.mrf.mxu0
    %v1574 = vadd.f32 %v1140, %v1573
    %v1575 = vpop.f32.mrf.mxu0
    %v1576 = vadd.f32 %v1144, %v1575
    %1577 = vmatprep.mubr.bf16.mxu0 0
    %1578 = vmatmul.mubr.bf16.gmra.mxu0 %v1061
    %v1579 = vpop.f32.mrf.mxu0
    %v1580 = vadd.f32 %v1140, %v1579
    %v1581 = vpop.f32.mrf.mxu0
    %v1582 = vadd.f32 %v1144, %v1581
    %v1583 = vpop.f32.mrf.mxu0
    %v1584 = vadd.f32 %v1140, %v1583
    %v1585 = vpop.f32.mrf.mxu0
    %v1586 = vadd.f32 %v1144, %v1585
    %1587 = vmatprep.mubr.bf16.mxu0 0
    %1588 = vmatmul.mubr.bf16.gmra.mxu0 %v1062
    %v1589 = vpop.f32.mrf.mxu0
    %v1590 = vadd.f32 %v1140, %v1589
    %v1591 = vpop.f32.mrf.mxu0
    %v1592 = vadd.f32 %v1144, %v1591
    %v1593 = vpop.f32.mrf.mxu0
    %v1594 = vadd.f32 %v1140, %v1593
    %v1595 = vpop.f32.mrf.mxu0
    %v1596 = vadd.f32 %v1144, %v1595
    %1597 = vdwg.mxu0
    %1598 = vmatprep.subr.bf16.mxu0 %v1394
    %1599 = vmatpush1.bf16.msra.mxu0 %v1393
    %1600 = vmatprep.subr.bf16.mxu0 %v1387
    %1601 = vmatpush1.bf16.msra.mxu0 %v1386
    %1602 = vmatprep.subr.bf16.mxu0 %v1380
    %1603 = vmatpush1.bf16.msra.mxu0 %v1379
    %1604 = vmatprep.subr.bf16.mxu0 %v1373
    %1605 = vmatpush1.bf16.msra.mxu0 %v1372
    %1606 = vmatprep.subr.bf16.mxu0 %v1366
    %1607 = vmatpush1.bf16.msra.mxu0 %v1365
    %1608 = vmatprep.subr.bf16.mxu0 %v1359
    %1609 = vmatpush1.bf16.msra.mxu0 %v1358
    %1610 = vmatprep.subr.bf16.mxu0 %v1352
    %1611 = vmatpush1.bf16.msra.mxu0 %v1351
    %1612 = vmatprep.subr.bf16.mxu0 %v1345
    %1613 = vmatpush1.bf16.msra.mxu0 %v1344
    %1614 = vmatprep.subr.bf16.mxu0 0
    %1615 = vmatpush2.bf16.msra.mxu0 0
    %1616 = vmatprep.subr.bf16.mxu0 0
    %1617 = vmatpush2.bf16.msra.mxu0 0
    %1618 = vmatprep.subr.bf16.mxu0 0
    %1619 = vmatpush2.bf16.msra.mxu0 0
    %1620 = vmatprep.subr.bf16.mxu0 0
    %1621 = vmatpush2.bf16.msra.mxu0 0
    %1622 = vmatprep.subr.bf16.mxu0 0
    %1623 = vmatpush2.bf16.msra.mxu0 0
    %1624 = vmatprep.subr.bf16.mxu0 0
    %1625 = vmatpush2.bf16.msra.mxu0 0
    %1626 = vmatprep.subr.bf16.mxu0 0
    %1627 = vmatpush2.bf16.msra.mxu0 0
    %1628 = vmatprep.subr.bf16.mxu0 0
    %1629 = vmatpush2.bf16.msra.mxu0 0
    %1630 = vmatprep.mubr.bf16.mxu0 0
    %1631 = vmatmul.mubr.bf16.gmra.mxu0 %v1059
    %v1632 = vpop.f32.mrf.mxu0
    %v1633 = vadd.f32 %v1148, %v1632
    %v1634 = vpop.f32.mrf.mxu0
    %v1635 = vadd.f32 %v1152, %v1634
    %v1636 = vpop.f32.mrf.mxu0
    %v1637 = vadd.f32 %v1148, %v1636
    %v1638 = vpop.f32.mrf.mxu0
    %v1639 = vadd.f32 %v1152, %v1638
    %1640 = vmatprep.mubr.bf16.mxu0 0
    %1641 = vmatmul.mubr.bf16.gmra.mxu0 %v1060
    %v1642 = vpop.f32.mrf.mxu0
    %v1643 = vadd.f32 %v1148, %v1642
    %v1644 = vpop.f32.mrf.mxu0
    %v1645 = vadd.f32 %v1152, %v1644
    %v1646 = vpop.f32.mrf.mxu0
    %v1647 = vadd.f32 %v1148, %v1646
    %v1648 = vpop.f32.mrf.mxu0
    %v1649 = vadd.f32 %v1152, %v1648
    %1650 = vmatprep.mubr.bf16.mxu0 0
    %1651 = vmatmul.mubr.bf16.gmra.mxu0 %v1061
    %v1652 = vpop.f32.mrf.mxu0
    %v1653 = vadd.f32 %v1148, %v1652
    %v1654 = vpop.f32.mrf.mxu0
    %v1655 = vadd.f32 %v1152, %v1654
    %v1656 = vpop.f32.mrf.mxu0
    %v1657 = vadd.f32 %v1148, %v1656
    %v1658 = vpop.f32.mrf.mxu0
    %v1659 = vadd.f32 %v1152, %v1658
    %1660 = vmatprep.mubr.bf16.mxu0 0
    %1661 = vmatmul.mubr.bf16.gmra.mxu0 %v1062
    %v1662 = vpop.f32.mrf.mxu0
    %v1663 = vadd.f32 %v1148, %v1662
    %v1664 = vpop.f32.mrf.mxu0
    %v1665 = vadd.f32 %v1152, %v1664
    %v1666 = vpop.f32.mrf.mxu0
    %v1667 = vadd.f32 %v1148, %v1666
    %v1668 = vpop.f32.mrf.mxu0
    %v1669 = vadd.f32 %v1152, %v1668
    %1670 = vdwg.mxu0
    %1671 = vmatprep.subr.bf16.mxu0 0
    %1672 = vmatpush1.bf16.msra.mxu0 %v1395
    %1673 = vmatprep.subr.bf16.mxu0 0
    %1674 = vmatpush1.bf16.msra.mxu0 %v1388
    %1675 = vmatprep.subr.bf16.mxu0 0
    %1676 = vmatpush1.bf16.msra.mxu0 %v1381
    %1677 = vmatprep.subr.bf16.mxu0 0
    %1678 = vmatpush1.bf16.msra.mxu0 %v1374
    %1679 = vmatprep.subr.bf16.mxu0 0
    %1680 = vmatpush1.bf16.msra.mxu0 %v1367
    %1681 = vmatprep.subr.bf16.mxu0 0
    %1682 = vmatpush1.bf16.msra.mxu0 %v1360
    %1683 = vmatprep.subr.bf16.mxu0 0
    %1684 = vmatpush1.bf16.msra.mxu0 %v1353
    %1685 = vmatprep.subr.bf16.mxu0 0
    %1686 = vmatpush1.bf16.msra.mxu0 %v1346
    %1687 = vmatprep.subr.bf16.mxu0 0
    %1688 = vmatpush2.bf16.msra.mxu0 0
    %1689 = vmatprep.subr.bf16.mxu0 0
    %1690 = vmatpush2.bf16.msra.mxu0 0
    %1691 = vmatprep.subr.bf16.mxu0 0
    %1692 = vmatpush2.bf16.msra.mxu0 0
    %1693 = vmatprep.subr.bf16.mxu0 0
    %1694 = vmatpush2.bf16.msra.mxu0 0
    %1695 = vmatprep.subr.bf16.mxu0 0
    %1696 = vmatpush2.bf16.msra.mxu0 0
    %1697 = vmatprep.subr.bf16.mxu0 0
    %1698 = vmatpush2.bf16.msra.mxu0 0
    %1699 = vmatprep.subr.bf16.mxu0 0
    %1700 = vmatpush2.bf16.msra.mxu0 0
    %1701 = vmatprep.subr.bf16.mxu0 0
    %1702 = vmatpush2.bf16.msra.mxu0 0
    %1703 = vmatprep.mubr.bf16.mxu0 0
    %1704 = vmatmul.mubr.bf16.gmra.mxu0 %v1059
    %v1705 = vpop.f32.mrf.mxu0
    %v1706 = vadd.f32 %v1156, %v1705
    %v1707 = vpop.f32.mrf.mxu0
    %v1708 = vpop.f32.mrf.mxu0
    %v1709 = vadd.f32 %v1156, %v1708
    %v1710 = vpop.f32.mrf.mxu0
    %1711 = vmatprep.mubr.bf16.mxu0 0
    %1712 = vmatmul.mubr.bf16.gmra.mxu0 %v1060
    %v1713 = vpop.f32.mrf.mxu0
    %v1714 = vadd.f32 %v1156, %v1713
    %v1715 = vpop.f32.mrf.mxu0
    %v1716 = vpop.f32.mrf.mxu0
    %v1717 = vadd.f32 %v1156, %v1716
    %v1718 = vpop.f32.mrf.mxu0
    %1719 = vmatprep.mubr.bf16.mxu0 0
    %1720 = vmatmul.mubr.bf16.gmra.mxu0 %v1061
    %v1721 = vpop.f32.mrf.mxu0
    %v1722 = vadd.f32 %v1156, %v1721
    %v1723 = vpop.f32.mrf.mxu0
    %v1724 = vpop.f32.mrf.mxu0
    %v1725 = vadd.f32 %v1156, %v1724
    %v1726 = vpop.f32.mrf.mxu0
    %1727 = vmatprep.mubr.bf16.mxu0 0
    %1728 = vmatmul.mubr.bf16.gmra.mxu0 %v1062
    %v1729 = vpop.f32.mrf.mxu0
    %v1730 = vadd.f32 %v1156, %v1729
    %v1731 = vpop.f32.mrf.mxu0
    %v1732 = vpop.f32.mrf.mxu0
    %v1733 = vadd.f32 %v1156, %v1732
    %v1734 = vpop.f32.mrf.mxu0
    %1735 = vdwg.mxu0
    %v1736 = vmul.f32 %v1487, 0.5
    %v1737 = vmul.f32 %v1489, 0.5
    %v1738 = vmul.f32 %v1560, 0.5
    %v1739 = vmul.f32 %v1562, 0.5
    %v1740 = vmul.f32 %v1633, 0.5
    %v1741 = vmul.f32 %v1635, 0.5
    %v1742 = vmul.f32 %v1706, 0.5
    %v1743 = vmul.f32 %v1491, 0.5
    %v1744 = vmul.f32 %v1493, 0.5
    %v1745 = vmul.f32 %v1564, 0.5
    %v1746 = vmul.f32 %v1566, 0.5
    %v1747 = vmul.f32 %v1637, 0.5
    %v1748 = vmul.f32 %v1639, 0.5
    %v1749 = vmul.f32 %v1709, 0.5
    %v1750 = vmul.f32 %v1497, 0.5
    %v1751 = vmul.f32 %v1499, 0.5
    %v1752 = vmul.f32 %v1570, 0.5
    %v1753 = vmul.f32 %v1572, 0.5
    %v1754 = vmul.f32 %v1643, 0.5
    %v1755 = vmul.f32 %v1645, 0.5
    %v1756 = vmul.f32 %v1714, 0.5
    %v1757 = vmul.f32 %v1501, 0.5
    %v1758 = vmul.f32 %v1503, 0.5
    %v1759 = vmul.f32 %v1574, 0.5
    %v1760 = vmul.f32 %v1576, 0.5
    %v1761 = vmul.f32 %v1647, 0.5
    %v1762 = vmul.f32 %v1649, 0.5
    %v1763 = vmul.f32 %v1717, 0.5
    %v1764 = vmul.f32 %v1507, 0.5
    %v1765 = vmul.f32 %v1509, 0.5
    %v1766 = vmul.f32 %v1580, 0.5
    %v1767 = vmul.f32 %v1582, 0.5
    %v1768 = vmul.f32 %v1653, 0.5
    %v1769 = vmul.f32 %v1655, 0.5
    %v1770 = vmul.f32 %v1722, 0.5
    %v1771 = vmul.f32 %v1511, 0.5
    %v1772 = vmul.f32 %v1513, 0.5
    %v1773 = vmul.f32 %v1584, 0.5
    %v1774 = vmul.f32 %v1586, 0.5
    %v1775 = vmul.f32 %v1657, 0.5
    %v1776 = vmul.f32 %v1659, 0.5
    %v1777 = vmul.f32 %v1725, 0.5
    %v1778 = vmul.f32 %v1517, 0.5
    %v1779 = vmul.f32 %v1519, 0.5
    %v1780 = vmul.f32 %v1590, 0.5
    %v1781 = vmul.f32 %v1592, 0.5
    %v1782 = vmul.f32 %v1663, 0.5
    %v1783 = vmul.f32 %v1665, 0.5
    %v1784 = vmul.f32 %v1730, 0.5
    %v1785 = vmul.f32 %v1521, 0.5
    %v1786 = vmul.f32 %v1523, 0.5
    %v1787 = vmul.f32 %v1594, 0.5
    %v1788 = vmul.f32 %v1596, 0.5
    %v1789 = vmul.f32 %v1667, 0.5
    %v1790 = vmul.f32 %v1669, 0.5
    %v1791 = vmul.f32 %v1733, 0.5
    %v1792 = vtanh.pop %v1736
    %v1793 = vtanh.pop %v1737
    %v1794 = vtanh.pop %v1738
    %v1795 = vtanh.pop %v1739
    %v1796 = vtanh.pop %v1740
    %v1797 = vtanh.pop %v1741
    %v1798 = vtanh.pop %v1742
    %v1799 = vtanh.pop %v1743
    %v1800 = vtanh.pop %v1744
    %v1801 = vtanh.pop %v1745
    %v1802 = vtanh.pop %v1746
    %v1803 = vtanh.pop %v1747
    %v1804 = vtanh.pop %v1748
    %v1805 = vtanh.pop %v1749
    %v1806 = vtanh.pop %v1750
    %v1807 = vtanh.pop %v1751
    %v1808 = vtanh.pop %v1752
    %v1809 = vtanh.pop %v1753
    %v1810 = vtanh.pop %v1754
    %v1811 = vtanh.pop %v1755
    %v1812 = vtanh.pop %v1756
    %v1813 = vtanh.pop %v1757
    %v1814 = vtanh.pop %v1758
    %v1815 = vtanh.pop %v1759
    %v1816 = vtanh.pop %v1760
    %v1817 = vtanh.pop %v1761
    %v1818 = vtanh.pop %v1762
    %v1819 = vtanh.pop %v1763
    %v1820 = vtanh.pop %v1764
    %v1821 = vtanh.pop %v1765
    %v1822 = vtanh.pop %v1766
    %v1823 = vtanh.pop %v1767
    %v1824 = vtanh.pop %v1768
    %v1825 = vtanh.pop %v1769
    %v1826 = vtanh.pop %v1770
    %v1827 = vtanh.pop %v1771
    %v1828 = vtanh.pop %v1772
    %v1829 = vtanh.pop %v1773
    %v1830 = vtanh.pop %v1774
    %v1831 = vtanh.pop %v1775
    %v1832 = vtanh.pop %v1776
    %v1833 = vtanh.pop %v1777
    %v1834 = vtanh.pop %v1778
    %v1835 = vtanh.pop %v1779
    %v1836 = vtanh.pop %v1780
    %v1837 = vtanh.pop %v1781
    %v1838 = vtanh.pop %v1782
    %v1839 = vtanh.pop %v1783
    %v1840 = vtanh.pop %v1784
    %v1841 = vtanh.pop %v1785
    %v1842 = vtanh.pop %v1786
    %v1843 = vtanh.pop %v1787
    %v1844 = vtanh.pop %v1788
    %v1845 = vtanh.pop %v1789
    %v1846 = vtanh.pop %v1790
    %v1847 = vtanh.pop %v1791
    %v1848 = vmul.f32 %v1792, 0.5
    %v1849 = vmul.f32 %v1793, 0.5
    %v1850 = vmul.f32 %v1794, 0.5
    %v1851 = vmul.f32 %v1795, 0.5
    %v1852 = vmul.f32 %v1796, 0.5
    %v1853 = vmul.f32 %v1797, 0.5
    %v1854 = vmul.f32 %v1798, 0.5
    %v1855 = vmul.f32 %v1799, 0.5
    %v1856 = vmul.f32 %v1800, 0.5
    %v1857 = vmul.f32 %v1801, 0.5
    %v1858 = vmul.f32 %v1802, 0.5
    %v1859 = vmul.f32 %v1803, 0.5
    %v1860 = vmul.f32 %v1804, 0.5
    %v1861 = vmul.f32 %v1805, 0.5
    %v1862 = vmul.f32 %v1806, 0.5
    %v1863 = vmul.f32 %v1807, 0.5
    %v1864 = vmul.f32 %v1808, 0.5
    %v1865 = vmul.f32 %v1809, 0.5
    %v1866 = vmul.f32 %v1810, 0.5
    %v1867 = vmul.f32 %v1811, 0.5
    %v1868 = vmul.f32 %v1812, 0.5
    %v1869 = vmul.f32 %v1813, 0.5
    %v1870 = vmul.f32 %v1814, 0.5
    %v1871 = vmul.f32 %v1815, 0.5
    %v1872 = vmul.f32 %v1816, 0.5
    %v1873 = vmul.f32 %v1817, 0.5
    %v1874 = vmul.f32 %v1818, 0.5
    %v1875 = vmul.f32 %v1819, 0.5
    %v1876 = vmul.f32 %v1820, 0.5
    %v1877 = vmul.f32 %v1821, 0.5
    %v1878 = vmul.f32 %v1822, 0.5
    %v1879 = vmul.f32 %v1823, 0.5
    %v1880 = vmul.f32 %v1824, 0.5
    %v1881 = vmul.f32 %v1825, 0.5
    %v1882 = vmul.f32 %v1826, 0.5
    %v1883 = vmul.f32 %v1827, 0.5
    %v1884 = vmul.f32 %v1828, 0.5
    %v1885 = vmul.f32 %v1829, 0.5
    %v1886 = vmul.f32 %v1830, 0.5
    %v1887 = vmul.f32 %v1831, 0.5
    %v1888 = vmul.f32 %v1832, 0.5
    %v1889 = vmul.f32 %v1833, 0.5
    %v1890 = vmul.f32 %v1834, 0.5
    %v1891 = vmul.f32 %v1835, 0.5
    %v1892 = vmul.f32 %v1836, 0.5
    %v1893 = vmul.f32 %v1837, 0.5
    %v1894 = vmul.f32 %v1838, 0.5
    %v1895 = vmul.f32 %v1839, 0.5
    %v1896 = vmul.f32 %v1840, 0.5
    %v1897 = vmul.f32 %v1841, 0.5
    %v1898 = vmul.f32 %v1842, 0.5
    %v1899 = vmul.f32 %v1843, 0.5
    %v1900 = vmul.f32 %v1844, 0.5
    %v1901 = vmul.f32 %v1845, 0.5
    %v1902 = vmul.f32 %v1846, 0.5
    %v1903 = vmul.f32 %v1847, 0.5
    %v1904 = vadd.f32 %v1848, 0.5
    %v1905 = vadd.f32 %v1849, 0.5
    %v1906 = vadd.f32 %v1850, 0.5
    %v1907 = vadd.f32 %v1851, 0.5
    %v1908 = vadd.f32 %v1852, 0.5
    %v1909 = vadd.f32 %v1853, 0.5
    %v1910 = vadd.f32 %v1854, 0.5
    %v1911 = vadd.f32 %v1855, 0.5
    %v1912 = vadd.f32 %v1856, 0.5
    %v1913 = vadd.f32 %v1857, 0.5
    %v1914 = vadd.f32 %v1858, 0.5
    %v1915 = vadd.f32 %v1859, 0.5
    %v1916 = vadd.f32 %v1860, 0.5
    %v1917 = vadd.f32 %v1861, 0.5
    %v1918 = vadd.f32 %v1862, 0.5
    %v1919 = vadd.f32 %v1863, 0.5
    %v1920 = vadd.f32 %v1864, 0.5
    %v1921 = vadd.f32 %v1865, 0.5
    %v1922 = vadd.f32 %v1866, 0.5
    %v1923 = vadd.f32 %v1867, 0.5
    %v1924 = vadd.f32 %v1868, 0.5
    %v1925 = vadd.f32 %v1869, 0.5
    %v1926 = vadd.f32 %v1870, 0.5
    %v1927 = vadd.f32 %v1871, 0.5
    %v1928 = vadd.f32 %v1872, 0.5
    %v1929 = vadd.f32 %v1873, 0.5
    %v1930 = vadd.f32 %v1874, 0.5
    %v1931 = vadd.f32 %v1875, 0.5
    %v1932 = vadd.f32 %v1876, 0.5
    %v1933 = vadd.f32 %v1877, 0.5
    %v1934 = vadd.f32 %v1878, 0.5
    %v1935 = vadd.f32 %v1879, 0.5
    %v1936 = vadd.f32 %v1880, 0.5
    %v1937 = vadd.f32 %v1881, 0.5
    %v1938 = vadd.f32 %v1882, 0.5
    %v1939 = vadd.f32 %v1883, 0.5
    %v1940 = vadd.f32 %v1884, 0.5
    %v1941 = vadd.f32 %v1885, 0.5
    %v1942 = vadd.f32 %v1886, 0.5
    %v1943 = vadd.f32 %v1887, 0.5
    %v1944 = vadd.f32 %v1888, 0.5
    %v1945 = vadd.f32 %v1889, 0.5
    %v1946 = vadd.f32 %v1890, 0.5
    %v1947 = vadd.f32 %v1891, 0.5
    %v1948 = vadd.f32 %v1892, 0.5
    %v1949 = vadd.f32 %v1893, 0.5
    %v1950 = vadd.f32 %v1894, 0.5
    %v1951 = vadd.f32 %v1895, 0.5
    %v1952 = vadd.f32 %v1896, 0.5
    %v1953 = vadd.f32 %v1897, 0.5
    %v1954 = vadd.f32 %v1898, 0.5
    %v1955 = vadd.f32 %v1899, 0.5
    %v1956 = vadd.f32 %v1900, 0.5
    %v1957 = vadd.f32 %v1901, 0.5
    %v1958 = vadd.f32 %v1902, 0.5
    %v1959 = vadd.f32 %v1903, 0.5
    %1960 = vst [vmem:[#allocation2] sm:$0xff] %v1904
    %1961 = vst [vmem:[#allocation2 + $0x8] sm:$0xff] %v1905
    %1962 = vst [vmem:[#allocation2 + $0x10] sm:$0xff] %v1906
    %1963 = vst [vmem:[#allocation2 + $0x18] sm:$0xff] %v1907
    %1964 = vst [vmem:[#allocation2 + $0x20] sm:$0xff] %v1908
    %1965 = vst [vmem:[#allocation2 + $0x28] sm:$0xff] %v1909
    %1966 = vst.msk [vmem:[#allocation2 + $0x30] sm:$0xff] %vm517, %v1910
    %1967 = vst [vmem:[#allocation2 + $0x38] sm:$0xff] %v1911
    %1968 = vst [vmem:[#allocation2 + $0x40] sm:$0xff] %v1912
    %1969 = vst [vmem:[#allocation2 + $0x48] sm:$0xff] %v1913
    %1970 = vst [vmem:[#allocation2 + $0x50] sm:$0xff] %v1914
    %1971 = vst [vmem:[#allocation2 + $0x58] sm:$0xff] %v1915
    %1972 = vst [vmem:[#allocation2 + $0x60] sm:$0xff] %v1916
    %1973 = vst.msk [vmem:[#allocation2 + $0x68] sm:$0xff] %vm517, %v1917
    %1974 = vst [vmem:[#allocation2 + $0x70] sm:$0xff] %v1918
    %1975 = vst [vmem:[#allocation2 + $0x78] sm:$0xff] %v1919
    %1976 = vst [vmem:[#allocation2 + $0x80] sm:$0xff] %v1920
    %1977 = vst [vmem:[#allocation2 + $0x88] sm:$0xff] %v1921
    %1978 = vst [vmem:[#allocation2 + $0x90] sm:$0xff] %v1922
    %1979 = vst [vmem:[#allocation2 + $0x98] sm:$0xff] %v1923
    %1980 = vst.msk [vmem:[#allocation2 + $0xa0] sm:$0xff] %vm517, %v1924
    %1981 = vst [vmem:[#allocation2 + $0xa8] sm:$0xff] %v1925
    %1982 = vst [vmem:[#allocation2 + $0xb0] sm:$0xff] %v1926
    %1983 = vst [vmem:[#allocation2 + $0xb8] sm:$0xff] %v1927
    %1984 = vst [vmem:[#allocation2 + $0xc0] sm:$0xff] %v1928
    %1985 = vst [vmem:[#allocation2 + $0xc8] sm:$0xff] %v1929
    %1986 = vst [vmem:[#allocation2 + $0xd0] sm:$0xff] %v1930
    %1987 = vst.msk [vmem:[#allocation2 + $0xd8] sm:$0xff] %vm517, %v1931
    %1988 = vst [vmem:[#allocation2 + $0xe0] sm:$0xff] %v1932
    %1989 = vst [vmem:[#allocation2 + $0xe8] sm:$0xff] %v1933
    %1990 = vst [vmem:[#allocation2 + $0xf0] sm:$0xff] %v1934
    %1991 = vst [vmem:[#allocation2 + $0xf8] sm:$0xff] %v1935
    %1992 = vst [vmem:[#allocation2 + $0x100] sm:$0xff] %v1936
    %1993 = vst [vmem:[#allocation2 + $0x108] sm:$0xff] %v1937
    %1994 = vst.msk [vmem:[#allocation2 + $0x110] sm:$0xff] %vm517, %v1938
    %1995 = vst [vmem:[#allocation2 + $0x118] sm:$0xff] %v1939
    %1996 = vst [vmem:[#allocation2 + $0x120] sm:$0xff] %v1940
    %1997 = vst [vmem:[#allocation2 + $0x128] sm:$0xff] %v1941
    %1998 = vst [vmem:[#allocation2 + $0x130] sm:$0xff] %v1942
    %1999 = vst [vmem:[#allocation2 + $0x138] sm:$0xff] %v1943
    %2000 = vst [vmem:[#allocation2 + $0x140] sm:$0xff] %v1944
    %2001 = vst.msk [vmem:[#allocation2 + $0x148] sm:$0xff] %vm517, %v1945
    %2002 = vst [vmem:[#allocation2 + $0x150] sm:$0xff] %v1946
    %2003 = vst [vmem:[#allocation2 + $0x158] sm:$0xff] %v1947
    %2004 = vst [vmem:[#allocation2 + $0x160] sm:$0xff] %v1948
    %2005 = vst [vmem:[#allocation2 + $0x168] sm:$0xff] %v1949
    %2006 = vst [vmem:[#allocation2 + $0x170] sm:$0xff] %v1950
    %2007 = vst [vmem:[#allocation2 + $0x178] sm:$0xff] %v1951
    %2008 = vst.msk [vmem:[#allocation2 + $0x180] sm:$0xff] %vm517, %v1952
    %2009 = vst [vmem:[#allocation2 + $0x188] sm:$0xff] %v1953
    %2010 = vst [vmem:[#allocation2 + $0x190] sm:$0xff] %v1954
    %2011 = vst [vmem:[#allocation2 + $0x198] sm:$0xff] %v1955
    %2012 = vst [vmem:[#allocation2 + $0x1a0] sm:$0xff] %v1956
    %2013 = vst [vmem:[#allocation2 + $0x1a8] sm:$0xff] %v1957
    %2014 = vst [vmem:[#allocation2 + $0x1b0] sm:$0xff] %v1958
    %2015 = vst.msk [vmem:[#allocation2 + $0x1b8] sm:$0xff] %vm517, %v1959
    // Predicated region
    $region38: #{tpu_custom_call.1} parent=1 // pred_check
      _
    $region39: #{tpu_custom_call.1} parent=1 // pred_check_branch
      %2017 = sbr.rel (0) target = $region41
    $region40: #{tpu_custom_call.1} parent=1 // pred_region
      %s2019 = ssub.s32 7168, 7168
      %2020 = vsyncadd [#allocation3], %s2019
      %s2021 = sshll.u32 [#allocation2], 4
      %s2022 = int_to_ptr.vmem [resolvable:$true] %s2021
      %2027 = dma.vmem_to_hbm [thread:$0]  %s2022, 7168, %s9, [#allocation3], 896, 896, 56
    $region41: #{tpu_custom_call.1} parent=1 // pred_fallthru
      _
    // Predicated region
    $region42: #{tpu_custom_call.1} parent=1 // pred_check
      _
    $region43: #{tpu_custom_call.1} parent=1 // pred_check_branch
      %2029 = sbr.rel (0) target = $region45
    $region44: #{tpu_custom_call.1} parent=1 // pred_region
      %2030 = dma.done [#allocation3], 7168
    $region45: #{tpu_custom_call.1} parent=1 // pred_fallthru
      _
    %2031 = vsyncpa [#allocation3], 1

</llo_original>
